<compile_context>
chip_gen: v6e
topology: v6e:2x2x1
jax: 0.10.0
libtpu: 0.0.40
codegen_flags: <defaults>
</compile_context>

<pallas_src>
import functools

import jax
import jax.numpy as jnp
from jax.experimental import pallas as pl
from jax.experimental.pallas import tpu as pltpu


def _wsconv2d_kernel(x_ref, w_ref, b_ref, o_ref, *, kh_size, kw_size, ho, wo,
                     stride):
    # x_ref : (Hp, Wp, Cin)        zero-padded NHWC plane for one batch element
    # w_ref : (KH*KW, Cin, CO_T)   WS-pre-scaled weight taps for this Cout tile
    # b_ref : (1, CO_T)            bias slice
    # o_ref : (Ho*Wo, CO_T)        flattened spatial output
    cin = x_ref.shape[-1]
    co = o_ref.shape[-1]

    # f32 accumulator initialized with the (sublane-broadcast) bias.
    acc = jnp.broadcast_to(b_ref[...].astype(jnp.float32), (ho * wo, co))

    for kh in range(kh_size):                      # static, fully unrolled
        for kw in range(kw_size):
            if stride == 1:
                xs = x_ref[kh:kh + ho, kw:kw + wo, :]
            else:
                xs = x_ref[pl.ds(kh, ho, stride), pl.ds(kw, wo, stride), :]
            # (Ho, Wo, Cin) -> (Ho*Wo, Cin): lane dim (Cin) unchanged.
            xs2 = xs.reshape(ho * wo, cin)
            acc = acc + jnp.dot(xs2, w_ref[kh * kw_size + kw],
                                preferred_element_type=jnp.float32)

    o_ref[...] = acc.astype(o_ref.dtype)


def ws_conv2d(x, weight, bias, *, stride=1, padding=1, gain=2):
    """x: (N, Cin, H, W), weight: (Cout, Cin, KH, KW), bias: (Cout,) -> (N, Cout, Ho, Wo)."""
    N, Cin, H, W = x.shape
    Cout, Cin_w, KH, KW = weight.shape
    assert Cin == Cin_w, "channel mismatch"

    scale = float((gain / (Cin * KH * KW)) ** 0.5)

    Hp, Wp = H + 2 * padding, W + 2 * padding
    Ho = (Hp - KH) // stride + 1
    Wo = (Wp - KW) // stride + 1

    # NHWC + zero padding of the spatial dims (same as nn.Conv2d zero padding).
    x_nhwc = jnp.transpose(x, (0, 2, 3, 1))
    xp = jnp.pad(x_nhwc, ((0, 0), (padding, padding), (padding, padding), (0, 0)))

    # (KH*KW, Cin, Cout) so each kernel tap is a (Cin, Cout) MXU operand.
    # Fold the WS input scale into the tiny weight tensor once, at trace time:
    # conv(x*s, W) == conv(x, s*W).  Scale in f32 to keep bf16 weights accurate.
    w_r = jnp.transpose(weight, (2, 3, 1, 0)).reshape(KH * KW, Cin, Cout)
    w_r = (w_r.astype(jnp.float32) * scale).astype(weight.dtype)
    b_r = bias.reshape(1, Cout)

    # Lane-dense 128-wide Cout tiles when divisible (real GAN layer widths);
    # otherwise take the full (small) Cout in one block.
    co_tile = 128 if (Cout % 128 == 0) else Cout
    n_co = Cout // co_tile

    kernel = functools.partial(
        _wsconv2d_kernel,
        kh_size=KH, kw_size=KW, ho=Ho, wo=Wo, stride=stride,
    )

    itemsize = jnp.dtype(x.dtype).itemsize
    cost = pl.CostEstimate(
        flops=2 * N * Ho * Wo * Cout * Cin * KH * KW,
        transcendentals=0,
        bytes_accessed=int((xp.size + w_r.size + b_r.size + N * Ho * Wo * Cout)
                           * itemsize),
    )

    out_flat = pl.pallas_call(
        kernel,
        out_shape=jax.ShapeDtypeStruct((N, Ho * Wo, Cout), x.dtype),
        grid_spec=pltpu.PrefetchScalarGridSpec(
            num_scalar_prefetch=0,
            # N outer so the input-plane block index is constant across the
            # inner Cout-tile loop (Pallas skips the redundant DMA).
            grid=(N, n_co),
            in_specs=[
                # full padded plane for one batch element (batch dim squeezed)
                pl.BlockSpec((None, Hp, Wp, Cin), lambda n, j: (n, 0, 0, 0)),
                # pre-scaled weights / bias for this Cout tile
                pl.BlockSpec((KH * KW, Cin, co_tile), lambda n, j: (0, 0, j)),
                pl.BlockSpec((1, co_tile), lambda n, j: (0, j)),
            ],
            out_specs=pl.BlockSpec((None, Ho * Wo, co_tile), lambda n, j: (n, 0, j)),
        ),
        compiler_params=pltpu.CompilerParams(
            dimension_semantics=("parallel", "parallel"),
            vmem_limit_bytes=64 * 1024 * 1024,
        ),
        cost_estimate=cost,
    )(xp, w_r, b_r)

    out_nhwc = out_flat.reshape(N, Ho, Wo, Cout)
    return jnp.transpose(out_nhwc, (0, 3, 1, 2))


if __name__ == "__main__":
    key = jax.random.PRNGKey(0)
    k_x, k_w, k_b = jax.random.split(key, 3)

    # Small shapes consistent with the module: N=2, Cin=4, Cout=8, 16x16, k=3, s=1, p=1.
    N, Cin, Cout, H, W, K = 2, 4, 8, 16, 16, 3
    stride, padding, gain = 1, 1, 2

    x = jax.random.normal(k_x, (N, Cin, H, W), dtype=jnp.float32)
    weight = jax.random.normal(k_w, (Cout, Cin, K, K), dtype=jnp.float32)  # nn.init.normal_
    # module inits bias to zeros; use a nonzero bias here to exercise the add path
    bias = 0.1 * jax.random.normal(k_b, (Cout,), dtype=jnp.float32)

    y = ws_conv2d(x, weight, bias, stride=stride, padding=padding, gain=gain)
    jax.block_until_ready(y)

    # Pure-JAX reference: conv(x * scale) + bias  (same math as the PyTorch forward).
    scale = (gain / (Cin * K * K)) ** 0.5
    y_ref = jax.lax.conv_general_dilated(
        x * scale, weight,
        window_strides=(stride, stride),
        padding=((padding, padding), (padding, padding)),
        dimension_numbers=("NCHW", "OIHW", "NCHW"),
    ) + bias.reshape(1, Cout, 1, 1)

    assert y.shape == y_ref.shape and y.dtype == x.dtype
    assert jnp.allclose(y, y_ref, atol=1e-4, rtol=1e-4)

    print("KERNEL_OK")
</pallas_src>

<mosaic_0001>
module attributes {stable_mosaic.version = 11 : i64} {
  func.func @_wsconv2d_kernel(%arg0: i32, %arg1: i32, %arg2: memref<1x18x18x4xf32, #tpu.memory_space<vmem>>, %arg3: memref<9x4x8xf32, #tpu.memory_space<vmem>>, %arg4: memref<1x8xf32, #tpu.memory_space<vmem>>, %arg5: memref<1x256x8xf32, #tpu.memory_space<vmem>>) attributes {dimension_semantics = [#tpu.dimension_semantics<parallel>, #tpu.dimension_semantics<parallel>], iteration_bounds = array<i64: 2, 1>, scalar_prefetch = 0 : i64, scratch_operands = 0 : i64, tpu.core_type = #tpu.core_type<tc>, window_params = [{transform_indices = @transform_0, window_bounds = array<i64: 1, 18, 18, 4>}, {transform_indices = @transform_1, window_bounds = array<i64: 9, 4, 8>}, {transform_indices = @transform_2, window_bounds = array<i64: 1, 8>}, {transform_indices = @transform_3, window_bounds = array<i64: 1, 256, 8>}]} {
    %c0 = arith.constant 0 : index
    %c0_0 = arith.constant 0 : index
    %0 = vector.load %arg4[%c0, %c0_0] : memref<1x8xf32, #tpu.memory_space<vmem>>, vector<1x8xf32>
    %1 = vector.shape_cast %0 : vector<1x8xf32> to vector<1x8xf32>
    %2 = vector.broadcast %1 : vector<1x8xf32> to vector<256x8xf32>
    %c0_1 = arith.constant 0 : index
    %c0_2 = arith.constant 0 : index
    %c0_3 = arith.constant 0 : index
    %c0_4 = arith.constant 0 : index
    %3 = vector.load %arg2[%c0_1, %c0_2, %c0_3, %c0_4] : memref<1x18x18x4xf32, #tpu.memory_space<vmem>>, vector<1x16x16x4xf32>
    %4 = vector.shape_cast %3 : vector<1x16x16x4xf32> to vector<16x16x4xf32>
    %5 = vector.shape_cast %4 : vector<16x16x4xf32> to vector<256x4xf32>
    %c0_5 = arith.constant 0 : index
    %c0_6 = arith.constant 0 : index
    %c0_7 = arith.constant 0 : index
    %6 = vector.load %arg3[%c0_5, %c0_6, %c0_7] : memref<9x4x8xf32, #tpu.memory_space<vmem>>, vector<1x4x8xf32>
    %7 = vector.shape_cast %6 : vector<1x4x8xf32> to vector<4x8xf32>
    %cst = arith.constant dense<0.000000e+00> : vector<256x8xf32>
    %8 = tpu.matmul %5, %7, %cst {dimension_numbers = #tpu.dot_dimension_numbers<[1], [0], [0], [1], [0, 0, 1, 1], [], []>} : vector<256x4xf32>, vector<4x8xf32>, vector<256x8xf32> -> vector<256x8xf32>
    %9 = arith.addf %2, %8 : vector<256x8xf32>
    %c0_8 = arith.constant 0 : index
    %c0_9 = arith.constant 0 : index
    %c1 = arith.constant 1 : index
    %c0_10 = arith.constant 0 : index
    %10 = vector.load %arg2[%c0_8, %c0_9, %c1, %c0_10] : memref<1x18x18x4xf32, #tpu.memory_space<vmem>>, vector<1x16x16x4xf32>
    %11 = vector.shape_cast %10 : vector<1x16x16x4xf32> to vector<16x16x4xf32>
    %12 = vector.shape_cast %11 : vector<16x16x4xf32> to vector<256x4xf32>
    %c1_11 = arith.constant 1 : index
    %c0_12 = arith.constant 0 : index
    %c0_13 = arith.constant 0 : index
    %13 = vector.load %arg3[%c1_11, %c0_12, %c0_13] : memref<9x4x8xf32, #tpu.memory_space<vmem>>, vector<1x4x8xf32>
    %14 = vector.shape_cast %13 : vector<1x4x8xf32> to vector<4x8xf32>
    %cst_14 = arith.constant dense<0.000000e+00> : vector<256x8xf32>
    %15 = tpu.matmul %12, %14, %cst_14 {dimension_numbers = #tpu.dot_dimension_numbers<[1], [0], [0], [1], [0, 0, 1, 1], [], []>} : vector<256x4xf32>, vector<4x8xf32>, vector<256x8xf32> -> vector<256x8xf32>
    %16 = arith.addf %9, %15 : vector<256x8xf32>
    %c0_15 = arith.constant 0 : index
    %c0_16 = arith.constant 0 : index
    %c2 = arith.constant 2 : index
    %c0_17 = arith.constant 0 : index
    %17 = vector.load %arg2[%c0_15, %c0_16, %c2, %c0_17] : memref<1x18x18x4xf32, #tpu.memory_space<vmem>>, vector<1x16x16x4xf32>
    %18 = vector.shape_cast %17 : vector<1x16x16x4xf32> to vector<16x16x4xf32>
    %19 = vector.shape_cast %18 : vector<16x16x4xf32> to vector<256x4xf32>
    %c2_18 = arith.constant 2 : index
    %c0_19 = arith.constant 0 : index
    %c0_20 = arith.constant 0 : index
    %20 = vector.load %arg3[%c2_18, %c0_19, %c0_20] : memref<9x4x8xf32, #tpu.memory_space<vmem>>, vector<1x4x8xf32>
    %21 = vector.shape_cast %20 : vector<1x4x8xf32> to vector<4x8xf32>
    %cst_21 = arith.constant dense<0.000000e+00> : vector<256x8xf32>
    %22 = tpu.matmul %19, %21, %cst_21 {dimension_numbers = #tpu.dot_dimension_numbers<[1], [0], [0], [1], [0, 0, 1, 1], [], []>} : vector<256x4xf32>, vector<4x8xf32>, vector<256x8xf32> -> vector<256x8xf32>
    %23 = arith.addf %16, %22 : vector<256x8xf32>
    %c0_22 = arith.constant 0 : index
    %c1_23 = arith.constant 1 : index
    %c0_24 = arith.constant 0 : index
    %c0_25 = arith.constant 0 : index
    %24 = vector.load %arg2[%c0_22, %c1_23, %c0_24, %c0_25] : memref<1x18x18x4xf32, #tpu.memory_space<vmem>>, vector<1x16x16x4xf32>
    %25 = vector.shape_cast %24 : vector<1x16x16x4xf32> to vector<16x16x4xf32>
    %26 = vector.shape_cast %25 : vector<16x16x4xf32> to vector<256x4xf32>
    %c3 = arith.constant 3 : index
    %c0_26 = arith.constant 0 : index
    %c0_27 = arith.constant 0 : index
    %27 = vector.load %arg3[%c3, %c0_26, %c0_27] : memref<9x4x8xf32, #tpu.memory_space<vmem>>, vector<1x4x8xf32>
    %28 = vector.shape_cast %27 : vector<1x4x8xf32> to vector<4x8xf32>
    %cst_28 = arith.constant dense<0.000000e+00> : vector<256x8xf32>
    %29 = tpu.matmul %26, %28, %cst_28 {dimension_numbers = #tpu.dot_dimension_numbers<[1], [0], [0], [1], [0, 0, 1, 1], [], []>} : vector<256x4xf32>, vector<4x8xf32>, vector<256x8xf32> -> vector<256x8xf32>
    %30 = arith.addf %23, %29 : vector<256x8xf32>
    %c0_29 = arith.constant 0 : index
    %c1_30 = arith.constant 1 : index
    %c1_31 = arith.constant 1 : index
    %c0_32 = arith.constant 0 : index
    %31 = vector.load %arg2[%c0_29, %c1_30, %c1_31, %c0_32] : memref<1x18x18x4xf32, #tpu.memory_space<vmem>>, vector<1x16x16x4xf32>
    %32 = vector.shape_cast %31 : vector<1x16x16x4xf32> to vector<16x16x4xf32>
    %33 = vector.shape_cast %32 : vector<16x16x4xf32> to vector<256x4xf32>
    %c4 = arith.constant 4 : index
    %c0_33 = arith.constant 0 : index
    %c0_34 = arith.constant 0 : index
    %34 = vector.load %arg3[%c4, %c0_33, %c0_34] : memref<9x4x8xf32, #tpu.memory_space<vmem>>, vector<1x4x8xf32>
    %35 = vector.shape_cast %34 : vector<1x4x8xf32> to vector<4x8xf32>
    %cst_35 = arith.constant dense<0.000000e+00> : vector<256x8xf32>
    %36 = tpu.matmul %33, %35, %cst_35 {dimension_numbers = #tpu.dot_dimension_numbers<[1], [0], [0], [1], [0, 0, 1, 1], [], []>} : vector<256x4xf32>, vector<4x8xf32>, vector<256x8xf32> -> vector<256x8xf32>
    %37 = arith.addf %30, %36 : vector<256x8xf32>
    %c0_36 = arith.constant 0 : index
    %c1_37 = arith.constant 1 : index
    %c2_38 = arith.constant 2 : index
    %c0_39 = arith.constant 0 : index
    %38 = vector.load %arg2[%c0_36, %c1_37, %c2_38, %c0_39] : memref<1x18x18x4xf32, #tpu.memory_space<vmem>>, vector<1x16x16x4xf32>
    %39 = vector.shape_cast %38 : vector<1x16x16x4xf32> to vector<16x16x4xf32>
    %40 = vector.shape_cast %39 : vector<16x16x4xf32> to vector<256x4xf32>
    %c5 = arith.constant 5 : index
    %c0_40 = arith.constant 0 : index
    %c0_41 = arith.constant 0 : index
    %41 = vector.load %arg3[%c5, %c0_40, %c0_41] : memref<9x4x8xf32, #tpu.memory_space<vmem>>, vector<1x4x8xf32>
    %42 = vector.shape_cast %41 : vector<1x4x8xf32> to vector<4x8xf32>
    %cst_42 = arith.constant dense<0.000000e+00> : vector<256x8xf32>
    %43 = tpu.matmul %40, %42, %cst_42 {dimension_numbers = #tpu.dot_dimension_numbers<[1], [0], [0], [1], [0, 0, 1, 1], [], []>} : vector<256x4xf32>, vector<4x8xf32>, vector<256x8xf32> -> vector<256x8xf32>
    %44 = arith.addf %37, %43 : vector<256x8xf32>
    %c0_43 = arith.constant 0 : index
    %c2_44 = arith.constant 2 : index
    %c0_45 = arith.constant 0 : index
    %c0_46 = arith.constant 0 : index
    %45 = vector.load %arg2[%c0_43, %c2_44, %c0_45, %c0_46] : memref<1x18x18x4xf32, #tpu.memory_space<vmem>>, vector<1x16x16x4xf32>
    %46 = vector.shape_cast %45 : vector<1x16x16x4xf32> to vector<16x16x4xf32>
    %47 = vector.shape_cast %46 : vector<16x16x4xf32> to vector<256x4xf32>
    %c6 = arith.constant 6 : index
    %c0_47 = arith.constant 0 : index
    %c0_48 = arith.constant 0 : index
    %48 = vector.load %arg3[%c6, %c0_47, %c0_48] : memref<9x4x8xf32, #tpu.memory_space<vmem>>, vector<1x4x8xf32>
    %49 = vector.shape_cast %48 : vector<1x4x8xf32> to vector<4x8xf32>
    %cst_49 = arith.constant dense<0.000000e+00> : vector<256x8xf32>
    %50 = tpu.matmul %47, %49, %cst_49 {dimension_numbers = #tpu.dot_dimension_numbers<[1], [0], [0], [1], [0, 0, 1, 1], [], []>} : vector<256x4xf32>, vector<4x8xf32>, vector<256x8xf32> -> vector<256x8xf32>
    %51 = arith.addf %44, %50 : vector<256x8xf32>
    %c0_50 = arith.constant 0 : index
    %c2_51 = arith.constant 2 : index
    %c1_52 = arith.constant 1 : index
    %c0_53 = arith.constant 0 : index
    %52 = vector.load %arg2[%c0_50, %c2_51, %c1_52, %c0_53] : memref<1x18x18x4xf32, #tpu.memory_space<vmem>>, vector<1x16x16x4xf32>
    %53 = vector.shape_cast %52 : vector<1x16x16x4xf32> to vector<16x16x4xf32>
    %54 = vector.shape_cast %53 : vector<16x16x4xf32> to vector<256x4xf32>
    %c7 = arith.constant 7 : index
    %c0_54 = arith.constant 0 : index
    %c0_55 = arith.constant 0 : index
    %55 = vector.load %arg3[%c7, %c0_54, %c0_55] : memref<9x4x8xf32, #tpu.memory_space<vmem>>, vector<1x4x8xf32>
    %56 = vector.shape_cast %55 : vector<1x4x8xf32> to vector<4x8xf32>
    %cst_56 = arith.constant dense<0.000000e+00> : vector<256x8xf32>
    %57 = tpu.matmul %54, %56, %cst_56 {dimension_numbers = #tpu.dot_dimension_numbers<[1], [0], [0], [1], [0, 0, 1, 1], [], []>} : vector<256x4xf32>, vector<4x8xf32>, vector<256x8xf32> -> vector<256x8xf32>
    %58 = arith.addf %51, %57 : vector<256x8xf32>
    %c0_57 = arith.constant 0 : index
    %c2_58 = arith.constant 2 : index
    %c2_59 = arith.constant 2 : index
    %c0_60 = arith.constant 0 : index
    %59 = vector.load %arg2[%c0_57, %c2_58, %c2_59, %c0_60] : memref<1x18x18x4xf32, #tpu.memory_space<vmem>>, vector<1x16x16x4xf32>
    %60 = vector.shape_cast %59 : vector<1x16x16x4xf32> to vector<16x16x4xf32>
    %61 = vector.shape_cast %60 : vector<16x16x4xf32> to vector<256x4xf32>
    %c8 = arith.constant 8 : index
    %c0_61 = arith.constant 0 : index
    %c0_62 = arith.constant 0 : index
    %62 = vector.load %arg3[%c8, %c0_61, %c0_62] : memref<9x4x8xf32, #tpu.memory_space<vmem>>, vector<1x4x8xf32>
    %63 = vector.shape_cast %62 : vector<1x4x8xf32> to vector<4x8xf32>
    %cst_63 = arith.constant dense<0.000000e+00> : vector<256x8xf32>
    %64 = tpu.matmul %61, %63, %cst_63 {dimension_numbers = #tpu.dot_dimension_numbers<[1], [0], [0], [1], [0, 0, 1, 1], [], []>} : vector<256x4xf32>, vector<4x8xf32>, vector<256x8xf32> -> vector<256x8xf32>
    %65 = arith.addf %58, %64 : vector<256x8xf32>
    %c0_64 = arith.constant 0 : index
    %c0_65 = arith.constant 0 : index
    %c0_66 = arith.constant 0 : index
    %66 = vector.load %arg5[%c0_64, %c0_65, %c0_66] : memref<1x256x8xf32, #tpu.memory_space<vmem>>, vector<1x256x8xf32>
    %67 = vector.shape_cast %66 : vector<1x256x8xf32> to vector<256x8xf32>
    %68 = vector.shape_cast %65 : vector<256x8xf32> to vector<1x256x8xf32>
    tpu.vector_store %arg5[%c0_64, %c0_65, %c0_66], %68 {strides = array<i32>} : memref<1x256x8xf32, #tpu.memory_space<vmem>>, vector<1x256x8xf32>,
    return
  }
  func.func @transform_0(%arg0: i32, %arg1: i32) -> (i32, i32, i32, i32) {
    %c0_i32 = arith.constant 0 : i32
    %c0_i32_0 = arith.constant 0 : i32
    %c0_i32_1 = arith.constant 0 : i32
    %c0_i32_2 = arith.constant 0 : i32
    return %arg0, %c0_i32, %c0_i32_0, %c0_i32_1 : i32, i32, i32, i32
  }
  func.func @transform_1(%arg0: i32, %arg1: i32) -> (i32, i32, i32) {
    %c0_i32 = arith.constant 0 : i32
    %c0_i32_0 = arith.constant 0 : i32
    %c0_i32_1 = arith.constant 0 : i32
    return %c0_i32, %c0_i32_0, %arg1 : i32, i32, i32
  }
  func.func @transform_2(%arg0: i32, %arg1: i32) -> (i32, i32) {
    %c0_i32 = arith.constant 0 : i32
    %c0_i32_0 = arith.constant 0 : i32
    return %c0_i32, %arg1 : i32, i32
  }
  func.func @transform_3(%arg0: i32, %arg1: i32) -> (i32, i32, i32) {
    %c0_i32 = arith.constant 0 : i32
    %c0_i32_0 = arith.constant 0 : i32
    return %arg0, %c0_i32, %arg1 : i32, i32, i32
  }
}

</mosaic_0001>

<llo_original>
// kernel: tpu_custom_call.1
$region0: #{tpu_custom_call.1}
  #allocation0 [shape = 'u32[]', space=smem, size = 0x4, offset = 0x4, fixed_abs, tag = 'smem constant byte address 0x4 - core index']
  #allocation1 [shape = 'u32[144,128]{1,0:T(1,128)}', space=vmem, size = 0x12000, scoped, tag = 'internal scratch']
  %s0 = inlined_call_operand.vmem [shape: f32[2,18,18,4], index: 0, kind: input, shape index: {}]
  %s1 = inlined_call_operand.vmem [shape: f32[9,4,8], index: 1, kind: input, shape index: {}]
  %s2 = inlined_call_operand.vmem [shape: f32[1,8], index: 2, kind: input, shape index: {}]
  %s3 = inlined_call_operand.vmem [shape: f32[2,256,8], index: 3, kind: output, shape index: {}]
  %s4 = sld [smem:[#allocation0]]
  $region45: #{tpu_custom_call.1} parent=0
    _
  %s6 = ssub.s32 1, %s4
  %s7 = scalar_select 0, %s6, %s4
  loop: start=0, step=1, limit=4
  $region2: #{tpu_custom_call.1} parent=0 // loop_pre_header
    _
  $region3: #{tpu_custom_call.1} parent=0 // loop_header
    %s9 = sphi 0, %s13
    %p10 = scmp.ge.s32.totalorder %s9, 4
    %s16 = sphi 0, %s28
    %s17 = sphi 0, %s24
    %s18 = sphi 0, %s16
    %s19 = sphi 0, %s17
    %s20 = sphi 0, %s18
    %s21 = sphi 0, %s19
    %s31 = sphi 0, %s33
    %s34 = sphi 0, %s31
    %s35 = sphi 0, %s34
    %s51 = sphi 0, %s35
    %s57 = sphi 0, %s59
    %s60 = sphi 0, %s57
    %s61 = sphi 0, %s60
    %s77 = sphi 0, %s61
    %s83 = sphi 0, %s85
    %s86 = sphi 0, %s83
    %s87 = sphi 0, %s86
    %s103 = sphi 0, %s87
    %s111 = sphi 0, %s113
    %s114 = sphi 0, %s111
    %s115 = sphi 0, %s114
    %s131 = sphi 0, %s115
  $region4: #{tpu_custom_call.1} parent=0 // loop_header_branch
    %12 = sbr.rel (%p10) target = $region8
  $region5: #{tpu_custom_call.1} parent=0 // loop_body
    %s14 = ssub.s32 %s9, 1
    %s15 = ssub.s32 %s9, 2
    %s22 = sadd.s32 1, %s17
    %p23 = scmp.ge.s32.totalorder %s22, 1
    %s24 = scalar_select %p23, 0, %s22
    %s25 = sadd.s32 1, %s16
    %s26 = scalar_select %p23, %s25, %s16
    %p27 = scmp.ge.s32.totalorder %s26, 2
    %s28 = scalar_select %p27, 0, %s26
    %s29 = ssub.s32 %s16, %s28
    %p30 = scmp.eq.s32.totalorder %s29, 0
    %s32 = sadd.s32 %s31, 1
    %s33 = scalar_select %p30, %s31, %s32
    %p36 = pneg %p30
    %p37 = scmp.eq.s32.totalorder %s9, 1
    %p38 = por %p36, %p37
    %p39 = scmp.ne.s32.totalorder %s31, %s34
    %p40 = scmp.eq.s32.totalorder %s9, 0
    %p41 = por %p39, %p40
    %p42 = scmp.ne.s32.totalorder %s31, %s34
    %p43 = scmp.eq.s32.totalorder %s14, 1
    %p44 = por %p42, %p43
    %p45 = scmp.ne.s32.totalorder %s34, %s35
    %p46 = scmp.eq.s32.totalorder %s14, 0
    %p47 = por %p45, %p46
    %p48 = scmp.ne.s32.totalorder %s34, %s35
    %p49 = scmp.eq.s32.totalorder %s15, 1
    %p50 = por %p48, %p49
    %p52 = scmp.ne.s32.totalorder %s35, %s51
    %p53 = scmp.eq.s32.totalorder %s15, 0
    %p54 = por %p52, %p53
    %s55 = ssub.s32 %s17, %s24
    %p56 = scmp.eq.s32.totalorder %s55, 0
    %s58 = sadd.s32 %s57, 1
    %s59 = scalar_select %p56, %s57, %s58
    %p62 = pneg %p56
    %p63 = scmp.eq.s32.totalorder %s9, 1
    %p64 = por %p62, %p63
    %p65 = scmp.ne.s32.totalorder %s57, %s60
    %p66 = scmp.eq.s32.totalorder %s9, 0
    %p67 = por %p65, %p66
    %p68 = scmp.ne.s32.totalorder %s57, %s60
    %p69 = scmp.eq.s32.totalorder %s14, 1
    %p70 = por %p68, %p69
    %p71 = scmp.ne.s32.totalorder %s60, %s61
    %p72 = scmp.eq.s32.totalorder %s14, 0
    %p73 = por %p71, %p72
    %p74 = scmp.ne.s32.totalorder %s60, %s61
    %p75 = scmp.eq.s32.totalorder %s15, 1
    %p76 = por %p74, %p75
    %p78 = scmp.ne.s32.totalorder %s61, %s77
    %p79 = scmp.eq.s32.totalorder %s15, 0
    %p80 = por %p78, %p79
    %s81 = ssub.s32 %s17, %s24
    %p82 = scmp.eq.s32.totalorder %s81, 0
    %s84 = sadd.s32 %s83, 1
    %s85 = scalar_select %p82, %s83, %s84
    %p88 = pneg %p82
    %p89 = scmp.eq.s32.totalorder %s9, 1
    %p90 = por %p88, %p89
    %p91 = scmp.ne.s32.totalorder %s83, %s86
    %p92 = scmp.eq.s32.totalorder %s9, 0
    %p93 = por %p91, %p92
    %p94 = scmp.ne.s32.totalorder %s83, %s86
    %p95 = scmp.eq.s32.totalorder %s14, 1
    %p96 = por %p94, %p95
    %p97 = scmp.ne.s32.totalorder %s86, %s87
    %p98 = scmp.eq.s32.totalorder %s14, 0
    %p99 = por %p97, %p98
    %p100 = scmp.ne.s32.totalorder %s86, %s87
    %p101 = scmp.eq.s32.totalorder %s15, 1
    %p102 = por %p100, %p101
    %p104 = scmp.ne.s32.totalorder %s87, %s103
    %p105 = scmp.eq.s32.totalorder %s15, 0
    %p106 = por %p104, %p105
    %s107 = ssub.s32 %s16, %s28
    %s108 = ssub.s32 %s17, %s24
    %s109 = sor.u32 %s107, %s108
    %p110 = scmp.eq.s32.totalorder %s109, 0
    %s112 = sadd.s32 %s111, 1
    %s113 = scalar_select %p110, %s111, %s112
    %p116 = pneg %p110
    %p117 = scmp.eq.s32.totalorder %s9, 1
    %p118 = por %p116, %p117
    %p119 = scmp.ne.s32.totalorder %s111, %s114
    %p120 = scmp.eq.s32.totalorder %s9, 0
    %p121 = por %p119, %p120
    %p122 = scmp.ne.s32.totalorder %s111, %s114
    %p123 = scmp.eq.s32.totalorder %s14, 1
    %p124 = por %p122, %p123
    %p125 = scmp.ne.s32.totalorder %s114, %s115
    %p126 = scmp.eq.s32.totalorder %s14, 0
    %p127 = por %p125, %p126
    %p128 = scmp.ne.s32.totalorder %s114, %s115
    %p129 = scmp.eq.s32.totalorder %s15, 1
    %p130 = por %p128, %p129
    %p132 = scmp.ne.s32.totalorder %s115, %s131
    %p133 = scmp.eq.s32.totalorder %s15, 0
    %p134 = por %p132, %p133
    %p135 = scmp.le.s32.totalorder 1, %s9
    %p136 = scmp.lt.s32.totalorder %s9, 3
    %p137 = pnand %p135, %p136
    %p138 = pneg %p137
    // Predicated region
    $region9: #{tpu_custom_call.1} parent=5 // pred_check
      _
    $region10: #{tpu_custom_call.1} parent=5 // pred_check_branch
      %140 = sbr.rel (%p137) target = $region12
    $region11: #{tpu_custom_call.1} parent=5 // pred_region
      %s141 = ssub.s32 %s9, 1
      // Predicated region
      $region13: #{tpu_custom_call.1} parent=11 // pred_check
        %p142 = pneg %p73
      $region14: #{tpu_custom_call.1} parent=11 // pred_check_branch
        %144 = sbr.rel (%p142) target = $region16
      $region15: #{tpu_custom_call.1} parent=11 // pred_region
        %p145 = scmp.lt.s32.totalorder %s19, 0
        %s146 = scalar_select %p145, %s19, 0
        %s147 = smul.addr %s146, 4
        %s148 = scalar_lea.vmem %s1, %s147
      $region16: #{tpu_custom_call.1} parent=11 // pred_fallthru
        _
      // Predicated region
      $region17: #{tpu_custom_call.1} parent=11 // pred_check
        %p149 = pneg %p99
      $region18: #{tpu_custom_call.1} parent=11 // pred_check_branch
        %151 = sbr.rel (%p149) target = $region20
      $region19: #{tpu_custom_call.1} parent=11 // pred_region
        %p152 = scmp.lt.s32.totalorder %s19, 0
        %s153 = scalar_select %p152, %s19, 0
        %s154 = scalar_lea.vmem %s2, %s153
      $region20: #{tpu_custom_call.1} parent=11 // pred_fallthru
        _
    $region12: #{tpu_custom_call.1} parent=5 // pred_fallthru
      _
    %p155 = scmp.lt.s32.totalorder %s9, 2
    // Predicated region
    $region21: #{tpu_custom_call.1} parent=5 // pred_check
      %p156 = pneg %p155
    $region22: #{tpu_custom_call.1} parent=5 // pred_check_branch
      %158 = sbr.rel (%p156) target = $region24
    $region23: #{tpu_custom_call.1} parent=5 // pred_region
      // Predicated region
      $region25: #{tpu_custom_call.1} parent=23 // pred_check
        %p159 = pneg %p41
      $region26: #{tpu_custom_call.1} parent=23 // pred_check_branch
        %161 = sbr.rel (%p159) target = $region28
      $region27: #{tpu_custom_call.1} parent=23 // pred_region
        %p162 = scmp.lt.s32.totalorder %s16, 1
        %s163 = scalar_select %p162, %s16, 1
        %s164 = smul.addr %s163, 54
        %s165 = smul.addr %s164, 8
        %s166 = scalar_lea.vmem %s0, %s165
      $region28: #{tpu_custom_call.1} parent=23 // pred_fallthru
        _
    $region24: #{tpu_custom_call.1} parent=5 // pred_fallthru
      _
    %p167 = scmp.le.s32.totalorder 1, %s9
    %p168 = scmp.lt.s32.totalorder %s9, 3
    %p169 = pnand %p167, %p168
    %p170 = pneg %p169
    // Predicated region
    $region29: #{tpu_custom_call.1} parent=5 // pred_check
      _
    $region30: #{tpu_custom_call.1} parent=5 // pred_check_branch
      %172 = sbr.rel (%p169) target = $region32
    $region31: #{tpu_custom_call.1} parent=5 // pred_region
      %s173 = ssub.s32 %s9, 1
      %p174 = scmp.lt.s32.totalorder %s18, 1
      %s175 = scalar_select %p174, %s18, 1
      %s176 = smul.addr %s175, 54
      %s177 = smul.addr %s176, 8
      %s178 = scalar_lea.vmem %s0, %s177
      %p179 = pneg %p47
      %p180 = pneg %p44
      %p181 = scmp.lt.s32.totalorder %s19, 0
      %s182 = scalar_select %p181, %s19, 0
      %s183 = smul.addr %s182, 4
      %s184 = scalar_lea.vmem %s1, %s183
      %p185 = pneg %p73
      %p186 = pneg %p70
      %p187 = scmp.lt.s32.totalorder %s19, 0
      %s188 = scalar_select %p187, %s19, 0
      %s189 = scalar_lea.vmem %s2, %s188
      %p190 = pneg %p99
      %p191 = pneg %p96
      %p192 = pneg %p127
      %p193 = pneg %p124
      %p194 = scmp.lt.s32.totalorder %s18, 1
      %s195 = scalar_select %p194, %s18, 1
      %p196 = scmp.lt.s32.totalorder %s19, 0
      %s197 = scalar_select %p196, %s19, 0
      %s198 = smul.addr %s195, 32
      %s199 = sadd.s32 %s197, %s198
      %s200 = smul.addr %s199, 8
      %s201 = scalar_lea.vmem %s3, %s200
      %p202 = scmp.lt.s32.totalorder %s18, 1
      %s203 = scalar_select %p202, %s18, 1
      %s204 = smul.addr %s203, 54
      %s205 = smul.addr %s204, 8
      %s206 = scalar_lea.vmem %s0, %s205
      %p207 = scmp.lt.s32.totalorder %s19, 0
      %s208 = scalar_select %p207, %s19, 0
      %s209 = smul.addr %s208, 4
      %s210 = scalar_lea.vmem %s1, %s209
      %p211 = scmp.lt.s32.totalorder %s19, 0
      %s212 = scalar_select %p211, %s19, 0
      %s213 = scalar_lea.vmem %s2, %s212
      %p214 = scmp.lt.s32.totalorder %s18, 1
      %s215 = scalar_select %p214, %s18, 1
      %p216 = scmp.lt.s32.totalorder %s19, 0
      %s217 = scalar_select %p216, %s19, 0
      %s218 = smul.addr %s215, 32
      %s219 = sadd.s32 %s217, %s218
      %s220 = smul.addr %s219, 8
      %s221 = scalar_lea.vmem %s3, %s220
      %v222 = vld [vmem:[%s213] sm:$0x1]
      %v224 = vlaneseq
      %v225 = vshrl.u32 %v224, 7
      %v226 = vsub.s32 0, %v225
      %v227 = vrot.slane %v222, %v226
      %v229 = vld [vmem:[%s206] sm:$0xff]
      %v230 = vld [vmem:[%s206 + $0x8] sm:$0xff]
      %v231 = vld [vmem:[%s206 + $0x18] sm:$0xff]
      %v232 = vld [vmem:[%s206 + $0x20] sm:$0xff]
      %v233 = vld [vmem:[%s206 + $0x30] sm:$0xff]
      %v234 = vld [vmem:[%s206 + $0x38] sm:$0xff]
      %v235 = vld [vmem:[%s206 + $0x48] sm:$0xff]
      %v236 = vld [vmem:[%s206 + $0x50] sm:$0xff]
      %v237 = vld [vmem:[%s206 + $0x60] sm:$0xff]
      %v238 = vld [vmem:[%s206 + $0x68] sm:$0xff]
      %v239 = vld [vmem:[%s206 + $0x78] sm:$0xff]
      %v240 = vld [vmem:[%s206 + $0x80] sm:$0xff]
      %v241 = vld [vmem:[%s206 + $0x90] sm:$0xff]
      %v242 = vld [vmem:[%s206 + $0x98] sm:$0xff]
      %v243 = vld [vmem:[%s206 + $0xa8] sm:$0xff]
      %v244 = vld [vmem:[%s206 + $0xb0] sm:$0xff]
      %v245 = vld [vmem:[%s206 + $0xc0] sm:$0xff]
      %v246 = vld [vmem:[%s206 + $0xc8] sm:$0xff]
      %v247 = vld [vmem:[%s206 + $0xd8] sm:$0xff]
      %v248 = vld [vmem:[%s206 + $0xe0] sm:$0xff]
      %v249 = vld [vmem:[%s206 + $0xf0] sm:$0xff]
      %v250 = vld [vmem:[%s206 + $0xf8] sm:$0xff]
      %v251 = vld [vmem:[%s206 + $0x108] sm:$0xff]
      %v252 = vld [vmem:[%s206 + $0x110] sm:$0xff]
      %v253 = vld [vmem:[%s206 + $0x120] sm:$0xff]
      %v254 = vld [vmem:[%s206 + $0x128] sm:$0xff]
      %v255 = vld [vmem:[%s206 + $0x138] sm:$0xff]
      %v256 = vld [vmem:[%s206 + $0x140] sm:$0xff]
      %v257 = vld [vmem:[%s206 + $0x150] sm:$0xff]
      %v258 = vld [vmem:[%s206 + $0x158] sm:$0xff]
      %v259 = vld [vmem:[%s206 + $0x168] sm:$0xff]
      %v260 = vld [vmem:[%s206 + $0x170] sm:$0xff]
      %v261 = vld [vmem:[%s210] sm:$0xf]
      %vm262 = vcmask 31744
      %v264 = vsel %vm262, %v229, 0
      %v267 = vsel %vm262, %v230, 0
      %v270 = vsel %vm262, %v231, 0
      %v273 = vsel %vm262, %v232, 0
      %v276 = vsel %vm262, %v233, 0
      %v279 = vsel %vm262, %v234, 0
      %v282 = vsel %vm262, %v235, 0
      %v285 = vsel %vm262, %v236, 0
      %v288 = vsel %vm262, %v237, 0
      %v291 = vsel %vm262, %v238, 0
      %v294 = vsel %vm262, %v239, 0
      %v297 = vsel %vm262, %v240, 0
      %v300 = vsel %vm262, %v241, 0
      %v303 = vsel %vm262, %v242, 0
      %v306 = vsel %vm262, %v243, 0
      %v309 = vsel %vm262, %v244, 0
      %v312 = vsel %vm262, %v245, 0
      %v315 = vsel %vm262, %v246, 0
      %v318 = vsel %vm262, %v247, 0
      %v321 = vsel %vm262, %v248, 0
      %v324 = vsel %vm262, %v249, 0
      %v327 = vsel %vm262, %v250, 0
      %v330 = vsel %vm262, %v251, 0
      %v333 = vsel %vm262, %v252, 0
      %v336 = vsel %vm262, %v253, 0
      %v339 = vsel %vm262, %v254, 0
      %v342 = vsel %vm262, %v255, 0
      %v345 = vsel %vm262, %v256, 0
      %v348 = vsel %vm262, %v257, 0
      %v351 = vsel %vm262, %v258, 0
      %v354 = vsel %vm262, %v259, 0
      %v357 = vsel %vm262, %v260, 0
      %vm359 = vcmask 1043456
      %v361 = vsel %vm359, %v261, 0
      %363 = vmatprep.subr.mxu0 0.0
      %364 = vmatpush1.msra.mxu0 0.0
      %365 = vmatprep.subr.mxu0 0.0
      %366 = vmatpush1.msra.mxu0 0.0
      %367 = vmatprep.subr.mxu0 0.0
      %368 = vmatpush1.msra.mxu0 0.0
      %369 = vmatprep.subr.mxu0 0.0
      %370 = vmatpush1.msra.mxu0 0.0
      %371 = vmatprep.subr.mxu0 0.0
      %372 = vmatpush1.msra.mxu0 0.0
      %373 = vmatprep.subr.mxu0 0.0
      %374 = vmatpush1.msra.mxu0 0.0
      %375 = vmatprep.subr.mxu0 0.0
      %376 = vmatpush1.msra.mxu0 0.0
      %377 = vmatprep.subr.mxu0 0.0
      %378 = vmatpush1.msra.mxu0 0.0
      %379 = vmatprep.subr.mxu0 0.0
      %380 = vmatpush1.msra.mxu0 0.0
      %381 = vmatprep.subr.mxu0 0.0
      %382 = vmatpush1.msra.mxu0 0.0
      %383 = vmatprep.subr.mxu0 0.0
      %384 = vmatpush1.msra.mxu0 0.0
      %385 = vmatprep.subr.mxu0 0.0
      %386 = vmatpush1.msra.mxu0 0.0
      %387 = vmatprep.subr.mxu0 0.0
      %388 = vmatpush1.msra.mxu0 0.0
      %389 = vmatprep.subr.mxu0 0.0
      %390 = vmatpush1.msra.mxu0 0.0
      %391 = vmatprep.subr.mxu0 0.0
      %392 = vmatpush1.msra.mxu0 0.0
      %393 = vmatprep.subr.mxu0 0.0
      %394 = vmatpush1.msra.mxu0 %v361
      %395 = vmatprep.subr.mxu0 0.0
      %396 = vmatpush2.msra.mxu0 0.0
      %397 = vmatprep.subr.mxu0 0.0
      %398 = vmatpush2.msra.mxu0 0.0
      %399 = vmatprep.subr.mxu0 0.0
      %400 = vmatpush2.msra.mxu0 0.0
      %401 = vmatprep.subr.mxu0 0.0
      %402 = vmatpush2.msra.mxu0 0.0
      %403 = vmatprep.subr.mxu0 0.0
      %404 = vmatpush2.msra.mxu0 0.0
      %405 = vmatprep.subr.mxu0 0.0
      %406 = vmatpush2.msra.mxu0 0.0
      %407 = vmatprep.subr.mxu0 0.0
      %408 = vmatpush2.msra.mxu0 0.0
      %409 = vmatprep.subr.mxu0 0.0
      %410 = vmatpush2.msra.mxu0 0.0
      %411 = vmatprep.subr.mxu0 0.0
      %412 = vmatpush2.msra.mxu0 0.0
      %413 = vmatprep.subr.mxu0 0.0
      %414 = vmatpush2.msra.mxu0 0.0
      %415 = vmatprep.subr.mxu0 0.0
      %416 = vmatpush2.msra.mxu0 0.0
      %417 = vmatprep.subr.mxu0 0.0
      %418 = vmatpush2.msra.mxu0 0.0
      %419 = vmatprep.subr.mxu0 0.0
      %420 = vmatpush2.msra.mxu0 0.0
      %421 = vmatprep.subr.mxu0 0.0
      %422 = vmatpush2.msra.mxu0 0.0
      %423 = vmatprep.subr.mxu0 0.0
      %424 = vmatpush2.msra.mxu0 0.0
      %425 = vmatprep.subr.mxu0 0.0
      %426 = vmatpush2.msra.mxu0 0.0
      %427 = vmatprep.mubr.f32.mxu0 0.0
      %428 = vmatmul.mubr.f32.gmra.mxu0 %v264
      %v429 = vpop.f32.mrf.mxu0
      %v430 = vadd.f32 0.0, %v429
      %v431 = vpop.f32.mrf.mxu0
      %432 = vmatprep.mubr.f32.mxu0 0.0
      %433 = vmatmul.mubr.f32.gmra.mxu0 %v267
      %v434 = vpop.f32.mrf.mxu0
      %v435 = vadd.f32 0.0, %v434
      %v436 = vpop.f32.mrf.mxu0
      %437 = vmatprep.mubr.f32.mxu0 0.0
      %438 = vmatmul.mubr.f32.gmra.mxu0 %v270
      %v439 = vpop.f32.mrf.mxu0
      %v440 = vadd.f32 0.0, %v439
      %v441 = vpop.f32.mrf.mxu0
      %442 = vmatprep.mubr.f32.mxu0 0.0
      %443 = vmatmul.mubr.f32.gmra.mxu0 %v273
      %v444 = vpop.f32.mrf.mxu0
      %v445 = vadd.f32 0.0, %v444
      %v446 = vpop.f32.mrf.mxu0
      %447 = vmatprep.mubr.f32.mxu0 0.0
      %448 = vmatmul.mubr.f32.gmra.mxu0 %v276
      %v449 = vpop.f32.mrf.mxu0
      %v450 = vadd.f32 0.0, %v449
      %v451 = vpop.f32.mrf.mxu0
      %452 = vmatprep.mubr.f32.mxu0 0.0
      %453 = vmatmul.mubr.f32.gmra.mxu0 %v279
      %v454 = vpop.f32.mrf.mxu0
      %v455 = vadd.f32 0.0, %v454
      %v456 = vpop.f32.mrf.mxu0
      %457 = vmatprep.mubr.f32.mxu0 0.0
      %458 = vmatmul.mubr.f32.gmra.mxu0 %v282
      %v459 = vpop.f32.mrf.mxu0
      %v460 = vadd.f32 0.0, %v459
      %v461 = vpop.f32.mrf.mxu0
      %462 = vmatprep.mubr.f32.mxu0 0.0
      %463 = vmatmul.mubr.f32.gmra.mxu0 %v285
      %v464 = vpop.f32.mrf.mxu0
      %v465 = vadd.f32 0.0, %v464
      %v466 = vpop.f32.mrf.mxu0
      %467 = vmatprep.mubr.f32.mxu0 0.0
      %468 = vmatmul.mubr.f32.gmra.mxu0 %v288
      %v469 = vpop.f32.mrf.mxu0
      %v470 = vadd.f32 0.0, %v469
      %v471 = vpop.f32.mrf.mxu0
      %472 = vmatprep.mubr.f32.mxu0 0.0
      %473 = vmatmul.mubr.f32.gmra.mxu0 %v291
      %v474 = vpop.f32.mrf.mxu0
      %v475 = vadd.f32 0.0, %v474
      %v476 = vpop.f32.mrf.mxu0
      %477 = vmatprep.mubr.f32.mxu0 0.0
      %478 = vmatmul.mubr.f32.gmra.mxu0 %v294
      %v479 = vpop.f32.mrf.mxu0
      %v480 = vadd.f32 0.0, %v479
      %v481 = vpop.f32.mrf.mxu0
      %482 = vmatprep.mubr.f32.mxu0 0.0
      %483 = vmatmul.mubr.f32.gmra.mxu0 %v297
      %v484 = vpop.f32.mrf.mxu0
      %v485 = vadd.f32 0.0, %v484
      %v486 = vpop.f32.mrf.mxu0
      %487 = vmatprep.mubr.f32.mxu0 0.0
      %488 = vmatmul.mubr.f32.gmra.mxu0 %v300
      %v489 = vpop.f32.mrf.mxu0
      %v490 = vadd.f32 0.0, %v489
      %v491 = vpop.f32.mrf.mxu0
      %492 = vmatprep.mubr.f32.mxu0 0.0
      %493 = vmatmul.mubr.f32.gmra.mxu0 %v303
      %v494 = vpop.f32.mrf.mxu0
      %v495 = vadd.f32 0.0, %v494
      %v496 = vpop.f32.mrf.mxu0
      %497 = vmatprep.mubr.f32.mxu0 0.0
      %498 = vmatmul.mubr.f32.gmra.mxu0 %v306
      %v499 = vpop.f32.mrf.mxu0
      %v500 = vadd.f32 0.0, %v499
      %v501 = vpop.f32.mrf.mxu0
      %502 = vmatprep.mubr.f32.mxu0 0.0
      %503 = vmatmul.mubr.f32.gmra.mxu0 %v309
      %v504 = vpop.f32.mrf.mxu0
      %v505 = vadd.f32 0.0, %v504
      %v506 = vpop.f32.mrf.mxu0
      %507 = vmatprep.mubr.f32.mxu0 0.0
      %508 = vmatmul.mubr.f32.gmra.mxu0 %v312
      %v509 = vpop.f32.mrf.mxu0
      %v510 = vadd.f32 0.0, %v509
      %v511 = vpop.f32.mrf.mxu0
      %512 = vmatprep.mubr.f32.mxu0 0.0
      %513 = vmatmul.mubr.f32.gmra.mxu0 %v315
      %v514 = vpop.f32.mrf.mxu0
      %v515 = vadd.f32 0.0, %v514
      %v516 = vpop.f32.mrf.mxu0
      %517 = vmatprep.mubr.f32.mxu0 0.0
      %518 = vmatmul.mubr.f32.gmra.mxu0 %v318
      %v519 = vpop.f32.mrf.mxu0
      %v520 = vadd.f32 0.0, %v519
      %v521 = vpop.f32.mrf.mxu0
      %522 = vmatprep.mubr.f32.mxu0 0.0
      %523 = vmatmul.mubr.f32.gmra.mxu0 %v321
      %v524 = vpop.f32.mrf.mxu0
      %v525 = vadd.f32 0.0, %v524
      %v526 = vpop.f32.mrf.mxu0
      %527 = vmatprep.mubr.f32.mxu0 0.0
      %528 = vmatmul.mubr.f32.gmra.mxu0 %v324
      %v529 = vpop.f32.mrf.mxu0
      %v530 = vadd.f32 0.0, %v529
      %v531 = vpop.f32.mrf.mxu0
      %532 = vmatprep.mubr.f32.mxu0 0.0
      %533 = vmatmul.mubr.f32.gmra.mxu0 %v327
      %v534 = vpop.f32.mrf.mxu0
      %v535 = vadd.f32 0.0, %v534
      %v536 = vpop.f32.mrf.mxu0
      %537 = vmatprep.mubr.f32.mxu0 0.0
      %538 = vmatmul.mubr.f32.gmra.mxu0 %v330
      %v539 = vpop.f32.mrf.mxu0
      %v540 = vadd.f32 0.0, %v539
      %v541 = vpop.f32.mrf.mxu0
      %542 = vmatprep.mubr.f32.mxu0 0.0
      %543 = vmatmul.mubr.f32.gmra.mxu0 %v333
      %v544 = vpop.f32.mrf.mxu0
      %v545 = vadd.f32 0.0, %v544
      %v546 = vpop.f32.mrf.mxu0
      %547 = vmatprep.mubr.f32.mxu0 0.0
      %548 = vmatmul.mubr.f32.gmra.mxu0 %v336
      %v549 = vpop.f32.mrf.mxu0
      %v550 = vadd.f32 0.0, %v549
      %v551 = vpop.f32.mrf.mxu0
      %552 = vmatprep.mubr.f32.mxu0 0.0
      %553 = vmatmul.mubr.f32.gmra.mxu0 %v339
      %v554 = vpop.f32.mrf.mxu0
      %v555 = vadd.f32 0.0, %v554
      %v556 = vpop.f32.mrf.mxu0
      %557 = vmatprep.mubr.f32.mxu0 0.0
      %558 = vmatmul.mubr.f32.gmra.mxu0 %v342
      %v559 = vpop.f32.mrf.mxu0
      %v560 = vadd.f32 0.0, %v559
      %v561 = vpop.f32.mrf.mxu0
      %562 = vmatprep.mubr.f32.mxu0 0.0
      %563 = vmatmul.mubr.f32.gmra.mxu0 %v345
      %v564 = vpop.f32.mrf.mxu0
      %v565 = vadd.f32 0.0, %v564
      %v566 = vpop.f32.mrf.mxu0
      %567 = vmatprep.mubr.f32.mxu0 0.0
      %568 = vmatmul.mubr.f32.gmra.mxu0 %v348
      %v569 = vpop.f32.mrf.mxu0
      %v570 = vadd.f32 0.0, %v569
      %v571 = vpop.f32.mrf.mxu0
      %572 = vmatprep.mubr.f32.mxu0 0.0
      %573 = vmatmul.mubr.f32.gmra.mxu0 %v351
      %v574 = vpop.f32.mrf.mxu0
      %v575 = vadd.f32 0.0, %v574
      %v576 = vpop.f32.mrf.mxu0
      %577 = vmatprep.mubr.f32.mxu0 0.0
      %578 = vmatmul.mubr.f32.gmra.mxu0 %v354
      %v579 = vpop.f32.mrf.mxu0
      %v580 = vadd.f32 0.0, %v579
      %v581 = vpop.f32.mrf.mxu0
      %582 = vmatprep.mubr.f32.mxu0 0.0
      %583 = vmatmul.mubr.f32.gmra.mxu0 %v357
      %v584 = vpop.f32.mrf.mxu0
      %v585 = vadd.f32 0.0, %v584
      %v586 = vpop.f32.mrf.mxu0
      %587 = vdwg.mxu0
      %v588 = vadd.f32 %v227, %v430
      %v589 = vadd.f32 %v227, %v435
      %v590 = vadd.f32 %v227, %v440
      %v591 = vadd.f32 %v227, %v445
      %v592 = vadd.f32 %v227, %v450
      %v593 = vadd.f32 %v227, %v455
      %v594 = vadd.f32 %v227, %v460
      %v595 = vadd.f32 %v227, %v465
      %v596 = vadd.f32 %v227, %v470
      %v597 = vadd.f32 %v227, %v475
      %v598 = vadd.f32 %v227, %v480
      %v599 = vadd.f32 %v227, %v485
      %v600 = vadd.f32 %v227, %v490
      %v601 = vadd.f32 %v227, %v495
      %v602 = vadd.f32 %v227, %v500
      %v603 = vadd.f32 %v227, %v505
      %v604 = vadd.f32 %v227, %v510
      %v605 = vadd.f32 %v227, %v515
      %v606 = vadd.f32 %v227, %v520
      %v607 = vadd.f32 %v227, %v525
      %v608 = vadd.f32 %v227, %v530
      %v609 = vadd.f32 %v227, %v535
      %v610 = vadd.f32 %v227, %v540
      %v611 = vadd.f32 %v227, %v545
      %v612 = vadd.f32 %v227, %v550
      %v613 = vadd.f32 %v227, %v555
      %v614 = vadd.f32 %v227, %v560
      %v615 = vadd.f32 %v227, %v565
      %v616 = vadd.f32 %v227, %v570
      %v617 = vadd.f32 %v227, %v575
      %v618 = vadd.f32 %v227, %v580
      %v619 = vadd.f32 %v227, %v585
      %v620 = vld [vmem:[%s206 + $0x1] sm:$0xff]
      %v621 = vld [vmem:[%s206 + $0x9] sm:$0xff]
      %v622 = vld [vmem:[%s206 + $0x19] sm:$0xff]
      %v623 = vld [vmem:[%s206 + $0x21] sm:$0xff]
      %v624 = vld [vmem:[%s206 + $0x31] sm:$0xff]
      %v625 = vld [vmem:[%s206 + $0x39] sm:$0xff]
      %v626 = vld [vmem:[%s206 + $0x49] sm:$0xff]
      %v627 = vld [vmem:[%s206 + $0x51] sm:$0xff]
      %v628 = vld [vmem:[%s206 + $0x61] sm:$0xff]
      %v629 = vld [vmem:[%s206 + $0x69] sm:$0xff]
      %v630 = vld [vmem:[%s206 + $0x79] sm:$0xff]
      %v631 = vld [vmem:[%s206 + $0x81] sm:$0xff]
      %v632 = vld [vmem:[%s206 + $0x91] sm:$0xff]
      %v633 = vld [vmem:[%s206 + $0x99] sm:$0xff]
      %v634 = vld [vmem:[%s206 + $0xa9] sm:$0xff]
      %v635 = vld [vmem:[%s206 + $0xb1] sm:$0xff]
      %v636 = vld [vmem:[%s206 + $0xc1] sm:$0xff]
      %v637 = vld [vmem:[%s206 + $0xc9] sm:$0xff]
      %v638 = vld [vmem:[%s206 + $0xd9] sm:$0xff]
      %v639 = vld [vmem:[%s206 + $0xe1] sm:$0xff]
      %v640 = vld [vmem:[%s206 + $0xf1] sm:$0xff]
      %v641 = vld [vmem:[%s206 + $0xf9] sm:$0xff]
      %v642 = vld [vmem:[%s206 + $0x109] sm:$0xff]
      %v643 = vld [vmem:[%s206 + $0x111] sm:$0xff]
      %v644 = vld [vmem:[%s206 + $0x121] sm:$0xff]
      %v645 = vld [vmem:[%s206 + $0x129] sm:$0xff]
      %v646 = vld [vmem:[%s206 + $0x139] sm:$0xff]
      %v647 = vld [vmem:[%s206 + $0x141] sm:$0xff]
      %v648 = vld [vmem:[%s206 + $0x151] sm:$0xff]
      %v649 = vld [vmem:[%s206 + $0x159] sm:$0xff]
      %v650 = vld [vmem:[%s206 + $0x169] sm:$0xff]
      %v651 = vld [vmem:[%s206 + $0x171] sm:$0xff]
      %s652 = scalar_lea.vmem %s210, 4
      %v653 = vld [vmem:[%s652] sm:$0xf]
      %v655 = vsel %vm262, %v620, 0
      %v658 = vsel %vm262, %v621, 0
      %v661 = vsel %vm262, %v622, 0
      %v664 = vsel %vm262, %v623, 0
      %v667 = vsel %vm262, %v624, 0
      %v670 = vsel %vm262, %v625, 0
      %v673 = vsel %vm262, %v626, 0
      %v676 = vsel %vm262, %v627, 0
      %v679 = vsel %vm262, %v628, 0
      %v682 = vsel %vm262, %v629, 0
      %v685 = vsel %vm262, %v630, 0
      %v688 = vsel %vm262, %v631, 0
      %v691 = vsel %vm262, %v632, 0
      %v694 = vsel %vm262, %v633, 0
      %v697 = vsel %vm262, %v634, 0
      %v700 = vsel %vm262, %v635, 0
      %v703 = vsel %vm262, %v636, 0
      %v706 = vsel %vm262, %v637, 0
      %v709 = vsel %vm262, %v638, 0
      %v712 = vsel %vm262, %v639, 0
      %v715 = vsel %vm262, %v640, 0
      %v718 = vsel %vm262, %v641, 0
      %v721 = vsel %vm262, %v642, 0
      %v724 = vsel %vm262, %v643, 0
      %v727 = vsel %vm262, %v644, 0
      %v730 = vsel %vm262, %v645, 0
      %v733 = vsel %vm262, %v646, 0
      %v736 = vsel %vm262, %v647, 0
      %v739 = vsel %vm262, %v648, 0
      %v742 = vsel %vm262, %v649, 0
      %v745 = vsel %vm262, %v650, 0
      %v748 = vsel %vm262, %v651, 0
      %v751 = vsel %vm359, %v653, 0
      %753 = vmatprep.subr.mxu0 0.0
      %754 = vmatpush1.msra.mxu0 0.0
      %755 = vmatprep.subr.mxu0 0.0
      %756 = vmatpush1.msra.mxu0 0.0
      %757 = vmatprep.subr.mxu0 0.0
      %758 = vmatpush1.msra.mxu0 0.0
      %759 = vmatprep.subr.mxu0 0.0
      %760 = vmatpush1.msra.mxu0 0.0
      %761 = vmatprep.subr.mxu0 0.0
      %762 = vmatpush1.msra.mxu0 0.0
      %763 = vmatprep.subr.mxu0 0.0
      %764 = vmatpush1.msra.mxu0 0.0
      %765 = vmatprep.subr.mxu0 0.0
      %766 = vmatpush1.msra.mxu0 0.0
      %767 = vmatprep.subr.mxu0 0.0
      %768 = vmatpush1.msra.mxu0 0.0
      %769 = vmatprep.subr.mxu0 0.0
      %770 = vmatpush1.msra.mxu0 0.0
      %771 = vmatprep.subr.mxu0 0.0
      %772 = vmatpush1.msra.mxu0 0.0
      %773 = vmatprep.subr.mxu0 0.0
      %774 = vmatpush1.msra.mxu0 0.0
      %775 = vmatprep.subr.mxu0 0.0
      %776 = vmatpush1.msra.mxu0 0.0
      %777 = vmatprep.subr.mxu0 0.0
      %778 = vmatpush1.msra.mxu0 0.0
      %779 = vmatprep.subr.mxu0 0.0
      %780 = vmatpush1.msra.mxu0 0.0
      %781 = vmatprep.subr.mxu0 0.0
      %782 = vmatpush1.msra.mxu0 0.0
      %783 = vmatprep.subr.mxu0 0.0
      %784 = vmatpush1.msra.mxu0 %v751
      %785 = vmatprep.subr.mxu0 0.0
      %786 = vmatpush2.msra.mxu0 0.0
      %787 = vmatprep.subr.mxu0 0.0
      %788 = vmatpush2.msra.mxu0 0.0
      %789 = vmatprep.subr.mxu0 0.0
      %790 = vmatpush2.msra.mxu0 0.0
      %791 = vmatprep.subr.mxu0 0.0
      %792 = vmatpush2.msra.mxu0 0.0
      %793 = vmatprep.subr.mxu0 0.0
      %794 = vmatpush2.msra.mxu0 0.0
      %795 = vmatprep.subr.mxu0 0.0
      %796 = vmatpush2.msra.mxu0 0.0
      %797 = vmatprep.subr.mxu0 0.0
      %798 = vmatpush2.msra.mxu0 0.0
      %799 = vmatprep.subr.mxu0 0.0
      %800 = vmatpush2.msra.mxu0 0.0
      %801 = vmatprep.subr.mxu0 0.0
      %802 = vmatpush2.msra.mxu0 0.0
      %803 = vmatprep.subr.mxu0 0.0
      %804 = vmatpush2.msra.mxu0 0.0
      %805 = vmatprep.subr.mxu0 0.0
      %806 = vmatpush2.msra.mxu0 0.0
      %807 = vmatprep.subr.mxu0 0.0
      %808 = vmatpush2.msra.mxu0 0.0
      %809 = vmatprep.subr.mxu0 0.0
      %810 = vmatpush2.msra.mxu0 0.0
      %811 = vmatprep.subr.mxu0 0.0
      %812 = vmatpush2.msra.mxu0 0.0
      %813 = vmatprep.subr.mxu0 0.0
      %814 = vmatpush2.msra.mxu0 0.0
      %815 = vmatprep.subr.mxu0 0.0
      %816 = vmatpush2.msra.mxu0 0.0
      %817 = vmatprep.mubr.f32.mxu0 0.0
      %818 = vmatmul.mubr.f32.gmra.mxu0 %v655
      %v819 = vpop.f32.mrf.mxu0
      %v820 = vadd.f32 0.0, %v819
      %v821 = vpop.f32.mrf.mxu0
      %822 = vmatprep.mubr.f32.mxu0 0.0
      %823 = vmatmul.mubr.f32.gmra.mxu0 %v658
      %v824 = vpop.f32.mrf.mxu0
      %v825 = vadd.f32 0.0, %v824
      %v826 = vpop.f32.mrf.mxu0
      %827 = vmatprep.mubr.f32.mxu0 0.0
      %828 = vmatmul.mubr.f32.gmra.mxu0 %v661
      %v829 = vpop.f32.mrf.mxu0
      %v830 = vadd.f32 0.0, %v829
      %v831 = vpop.f32.mrf.mxu0
      %832 = vmatprep.mubr.f32.mxu0 0.0
      %833 = vmatmul.mubr.f32.gmra.mxu0 %v664
      %v834 = vpop.f32.mrf.mxu0
      %v835 = vadd.f32 0.0, %v834
      %v836 = vpop.f32.mrf.mxu0
      %837 = vmatprep.mubr.f32.mxu0 0.0
      %838 = vmatmul.mubr.f32.gmra.mxu0 %v667
      %v839 = vpop.f32.mrf.mxu0
      %v840 = vadd.f32 0.0, %v839
      %v841 = vpop.f32.mrf.mxu0
      %842 = vmatprep.mubr.f32.mxu0 0.0
      %843 = vmatmul.mubr.f32.gmra.mxu0 %v670
      %v844 = vpop.f32.mrf.mxu0
      %v845 = vadd.f32 0.0, %v844
      %v846 = vpop.f32.mrf.mxu0
      %847 = vmatprep.mubr.f32.mxu0 0.0
      %848 = vmatmul.mubr.f32.gmra.mxu0 %v673
      %v849 = vpop.f32.mrf.mxu0
      %v850 = vadd.f32 0.0, %v849
      %v851 = vpop.f32.mrf.mxu0
      %852 = vmatprep.mubr.f32.mxu0 0.0
      %853 = vmatmul.mubr.f32.gmra.mxu0 %v676
      %v854 = vpop.f32.mrf.mxu0
      %v855 = vadd.f32 0.0, %v854
      %v856 = vpop.f32.mrf.mxu0
      %857 = vmatprep.mubr.f32.mxu0 0.0
      %858 = vmatmul.mubr.f32.gmra.mxu0 %v679
      %v859 = vpop.f32.mrf.mxu0
      %v860 = vadd.f32 0.0, %v859
      %v861 = vpop.f32.mrf.mxu0
      %862 = vmatprep.mubr.f32.mxu0 0.0
      %863 = vmatmul.mubr.f32.gmra.mxu0 %v682
      %v864 = vpop.f32.mrf.mxu0
      %v865 = vadd.f32 0.0, %v864
      %v866 = vpop.f32.mrf.mxu0
      %867 = vmatprep.mubr.f32.mxu0 0.0
      %868 = vmatmul.mubr.f32.gmra.mxu0 %v685
      %v869 = vpop.f32.mrf.mxu0
      %v870 = vadd.f32 0.0, %v869
      %v871 = vpop.f32.mrf.mxu0
      %872 = vmatprep.mubr.f32.mxu0 0.0
      %873 = vmatmul.mubr.f32.gmra.mxu0 %v688
      %v874 = vpop.f32.mrf.mxu0
      %v875 = vadd.f32 0.0, %v874
      %v876 = vpop.f32.mrf.mxu0
      %877 = vmatprep.mubr.f32.mxu0 0.0
      %878 = vmatmul.mubr.f32.gmra.mxu0 %v691
      %v879 = vpop.f32.mrf.mxu0
      %v880 = vadd.f32 0.0, %v879
      %v881 = vpop.f32.mrf.mxu0
      %882 = vmatprep.mubr.f32.mxu0 0.0
      %883 = vmatmul.mubr.f32.gmra.mxu0 %v694
      %v884 = vpop.f32.mrf.mxu0
      %v885 = vadd.f32 0.0, %v884
      %v886 = vpop.f32.mrf.mxu0
      %887 = vmatprep.mubr.f32.mxu0 0.0
      %888 = vmatmul.mubr.f32.gmra.mxu0 %v697
      %v889 = vpop.f32.mrf.mxu0
      %v890 = vadd.f32 0.0, %v889
      %v891 = vpop.f32.mrf.mxu0
      %892 = vmatprep.mubr.f32.mxu0 0.0
      %893 = vmatmul.mubr.f32.gmra.mxu0 %v700
      %v894 = vpop.f32.mrf.mxu0
      %v895 = vadd.f32 0.0, %v894
      %v896 = vpop.f32.mrf.mxu0
      %897 = vmatprep.mubr.f32.mxu0 0.0
      %898 = vmatmul.mubr.f32.gmra.mxu0 %v703
      %v899 = vpop.f32.mrf.mxu0
      %v900 = vadd.f32 0.0, %v899
      %v901 = vpop.f32.mrf.mxu0
      %902 = vmatprep.mubr.f32.mxu0 0.0
      %903 = vmatmul.mubr.f32.gmra.mxu0 %v706
      %v904 = vpop.f32.mrf.mxu0
      %v905 = vadd.f32 0.0, %v904
      %v906 = vpop.f32.mrf.mxu0
      %907 = vmatprep.mubr.f32.mxu0 0.0
      %908 = vmatmul.mubr.f32.gmra.mxu0 %v709
      %v909 = vpop.f32.mrf.mxu0
      %v910 = vadd.f32 0.0, %v909
      %v911 = vpop.f32.mrf.mxu0
      %912 = vmatprep.mubr.f32.mxu0 0.0
      %913 = vmatmul.mubr.f32.gmra.mxu0 %v712
      %v914 = vpop.f32.mrf.mxu0
      %v915 = vadd.f32 0.0, %v914
      %v916 = vpop.f32.mrf.mxu0
      %917 = vmatprep.mubr.f32.mxu0 0.0
      %918 = vmatmul.mubr.f32.gmra.mxu0 %v715
      %v919 = vpop.f32.mrf.mxu0
      %v920 = vadd.f32 0.0, %v919
      %v921 = vpop.f32.mrf.mxu0
      %922 = vmatprep.mubr.f32.mxu0 0.0
      %923 = vmatmul.mubr.f32.gmra.mxu0 %v718
      %v924 = vpop.f32.mrf.mxu0
      %v925 = vadd.f32 0.0, %v924
      %v926 = vpop.f32.mrf.mxu0
      %927 = vmatprep.mubr.f32.mxu0 0.0
      %928 = vmatmul.mubr.f32.gmra.mxu0 %v721
      %v929 = vpop.f32.mrf.mxu0
      %v930 = vadd.f32 0.0, %v929
      %v931 = vpop.f32.mrf.mxu0
      %932 = vmatprep.mubr.f32.mxu0 0.0
      %933 = vmatmul.mubr.f32.gmra.mxu0 %v724
      %v934 = vpop.f32.mrf.mxu0
      %v935 = vadd.f32 0.0, %v934
      %v936 = vpop.f32.mrf.mxu0
      %937 = vmatprep.mubr.f32.mxu0 0.0
      %938 = vmatmul.mubr.f32.gmra.mxu0 %v727
      %v939 = vpop.f32.mrf.mxu0
      %v940 = vadd.f32 0.0, %v939
      %v941 = vpop.f32.mrf.mxu0
      %942 = vmatprep.mubr.f32.mxu0 0.0
      %943 = vmatmul.mubr.f32.gmra.mxu0 %v730
      %v944 = vpop.f32.mrf.mxu0
      %v945 = vadd.f32 0.0, %v944
      %v946 = vpop.f32.mrf.mxu0
      %947 = vmatprep.mubr.f32.mxu0 0.0
      %948 = vmatmul.mubr.f32.gmra.mxu0 %v733
      %v949 = vpop.f32.mrf.mxu0
      %v950 = vadd.f32 0.0, %v949
      %v951 = vpop.f32.mrf.mxu0
      %952 = vmatprep.mubr.f32.mxu0 0.0
      %953 = vmatmul.mubr.f32.gmra.mxu0 %v736
      %v954 = vpop.f32.mrf.mxu0
      %v955 = vadd.f32 0.0, %v954
      %v956 = vpop.f32.mrf.mxu0
      %957 = vmatprep.mubr.f32.mxu0 0.0
      %958 = vmatmul.mubr.f32.gmra.mxu0 %v739
      %v959 = vpop.f32.mrf.mxu0
      %v960 = vadd.f32 0.0, %v959
      %v961 = vpop.f32.mrf.mxu0
      %962 = vmatprep.mubr.f32.mxu0 0.0
      %963 = vmatmul.mubr.f32.gmra.mxu0 %v742
      %v964 = vpop.f32.mrf.mxu0
      %v965 = vadd.f32 0.0, %v964
      %v966 = vpop.f32.mrf.mxu0
      %967 = vmatprep.mubr.f32.mxu0 0.0
      %968 = vmatmul.mubr.f32.gmra.mxu0 %v745
      %v969 = vpop.f32.mrf.mxu0
      %v970 = vadd.f32 0.0, %v969
      %v971 = vpop.f32.mrf.mxu0
      %972 = vmatprep.mubr.f32.mxu0 0.0
      %973 = vmatmul.mubr.f32.gmra.mxu0 %v748
      %v974 = vpop.f32.mrf.mxu0
      %v975 = vadd.f32 0.0, %v974
      %v976 = vpop.f32.mrf.mxu0
      %977 = vdwg.mxu0
      %v978 = vadd.f32 %v588, %v820
      %v979 = vadd.f32 %v589, %v825
      %v980 = vadd.f32 %v590, %v830
      %v981 = vadd.f32 %v591, %v835
      %v982 = vadd.f32 %v592, %v840
      %v983 = vadd.f32 %v593, %v845
      %v984 = vadd.f32 %v594, %v850
      %v985 = vadd.f32 %v595, %v855
      %v986 = vadd.f32 %v596, %v860
      %v987 = vadd.f32 %v597, %v865
      %v988 = vadd.f32 %v598, %v870
      %v989 = vadd.f32 %v599, %v875
      %v990 = vadd.f32 %v600, %v880
      %v991 = vadd.f32 %v601, %v885
      %v992 = vadd.f32 %v602, %v890
      %v993 = vadd.f32 %v603, %v895
      %v994 = vadd.f32 %v604, %v900
      %v995 = vadd.f32 %v605, %v905
      %v996 = vadd.f32 %v606, %v910
      %v997 = vadd.f32 %v607, %v915
      %v998 = vadd.f32 %v608, %v920
      %v999 = vadd.f32 %v609, %v925
      %v1000 = vadd.f32 %v610, %v930
      %v1001 = vadd.f32 %v611, %v935
      %v1002 = vadd.f32 %v612, %v940
      %v1003 = vadd.f32 %v613, %v945
      %v1004 = vadd.f32 %v614, %v950
      %v1005 = vadd.f32 %v615, %v955
      %v1006 = vadd.f32 %v616, %v960
      %v1007 = vadd.f32 %v617, %v965
      %v1008 = vadd.f32 %v618, %v970
      %v1009 = vadd.f32 %v619, %v975
      %v1010 = vld [vmem:[%s206 + $0x2] sm:$0xff]
      %v1011 = vld [vmem:[%s206 + $0xa] sm:$0xff]
      %v1012 = vld [vmem:[%s206 + $0x1a] sm:$0xff]
      %v1013 = vld [vmem:[%s206 + $0x22] sm:$0xff]
      %v1014 = vld [vmem:[%s206 + $0x32] sm:$0xff]
      %v1015 = vld [vmem:[%s206 + $0x3a] sm:$0xff]
      %v1016 = vld [vmem:[%s206 + $0x4a] sm:$0xff]
      %v1017 = vld [vmem:[%s206 + $0x52] sm:$0xff]
      %v1018 = vld [vmem:[%s206 + $0x62] sm:$0xff]
      %v1019 = vld [vmem:[%s206 + $0x6a] sm:$0xff]
      %v1020 = vld [vmem:[%s206 + $0x7a] sm:$0xff]
      %v1021 = vld [vmem:[%s206 + $0x82] sm:$0xff]
      %v1022 = vld [vmem:[%s206 + $0x92] sm:$0xff]
      %v1023 = vld [vmem:[%s206 + $0x9a] sm:$0xff]
      %v1024 = vld [vmem:[%s206 + $0xaa] sm:$0xff]
      %v1025 = vld [vmem:[%s206 + $0xb2] sm:$0xff]
      %v1026 = vld [vmem:[%s206 + $0xc2] sm:$0xff]
      %v1027 = vld [vmem:[%s206 + $0xca] sm:$0xff]
      %v1028 = vld [vmem:[%s206 + $0xda] sm:$0xff]
      %v1029 = vld [vmem:[%s206 + $0xe2] sm:$0xff]
      %v1030 = vld [vmem:[%s206 + $0xf2] sm:$0xff]
      %v1031 = vld [vmem:[%s206 + $0xfa] sm:$0xff]
      %v1032 = vld [vmem:[%s206 + $0x10a] sm:$0xff]
      %v1033 = vld [vmem:[%s206 + $0x112] sm:$0xff]
      %v1034 = vld [vmem:[%s206 + $0x122] sm:$0xff]
      %v1035 = vld [vmem:[%s206 + $0x12a] sm:$0xff]
      %v1036 = vld [vmem:[%s206 + $0x13a] sm:$0xff]
      %v1037 = vld [vmem:[%s206 + $0x142] sm:$0xff]
      %v1038 = vld [vmem:[%s206 + $0x152] sm:$0xff]
      %v1039 = vld [vmem:[%s206 + $0x15a] sm:$0xff]
      %v1040 = vld [vmem:[%s206 + $0x16a] sm:$0xff]
      %v1041 = vld [vmem:[%s206 + $0x172] sm:$0xff]
      %s1042 = scalar_lea.vmem %s210, 8
      %v1043 = vld [vmem:[%s1042] sm:$0xf]
      %v1045 = vsel %vm262, %v1010, 0
      %v1048 = vsel %vm262, %v1011, 0
      %v1051 = vsel %vm262, %v1012, 0
      %v1054 = vsel %vm262, %v1013, 0
      %v1057 = vsel %vm262, %v1014, 0
      %v1060 = vsel %vm262, %v1015, 0
      %v1063 = vsel %vm262, %v1016, 0
      %v1066 = vsel %vm262, %v1017, 0
      %v1069 = vsel %vm262, %v1018, 0
      %v1072 = vsel %vm262, %v1019, 0
      %v1075 = vsel %vm262, %v1020, 0
      %v1078 = vsel %vm262, %v1021, 0
      %v1081 = vsel %vm262, %v1022, 0
      %v1084 = vsel %vm262, %v1023, 0
      %v1087 = vsel %vm262, %v1024, 0
      %v1090 = vsel %vm262, %v1025, 0
      %v1093 = vsel %vm262, %v1026, 0
      %v1096 = vsel %vm262, %v1027, 0
      %v1099 = vsel %vm262, %v1028, 0
      %v1102 = vsel %vm262, %v1029, 0
      %v1105 = vsel %vm262, %v1030, 0
      %v1108 = vsel %vm262, %v1031, 0
      %v1111 = vsel %vm262, %v1032, 0
      %v1114 = vsel %vm262, %v1033, 0
      %v1117 = vsel %vm262, %v1034, 0
      %v1120 = vsel %vm262, %v1035, 0
      %v1123 = vsel %vm262, %v1036, 0
      %v1126 = vsel %vm262, %v1037, 0
      %v1129 = vsel %vm262, %v1038, 0
      %v1132 = vsel %vm262, %v1039, 0
      %v1135 = vsel %vm262, %v1040, 0
      %v1138 = vsel %vm262, %v1041, 0
      %v1141 = vsel %vm359, %v1043, 0
      %1143 = vmatprep.subr.mxu0 0.0
      %1144 = vmatpush1.msra.mxu0 0.0
      %1145 = vmatprep.subr.mxu0 0.0
      %1146 = vmatpush1.msra.mxu0 0.0
      %1147 = vmatprep.subr.mxu0 0.0
      %1148 = vmatpush1.msra.mxu0 0.0
      %1149 = vmatprep.subr.mxu0 0.0
      %1150 = vmatpush1.msra.mxu0 0.0
      %1151 = vmatprep.subr.mxu0 0.0
      %1152 = vmatpush1.msra.mxu0 0.0
      %1153 = vmatprep.subr.mxu0 0.0
      %1154 = vmatpush1.msra.mxu0 0.0
      %1155 = vmatprep.subr.mxu0 0.0
      %1156 = vmatpush1.msra.mxu0 0.0
      %1157 = vmatprep.subr.mxu0 0.0
      %1158 = vmatpush1.msra.mxu0 0.0
      %1159 = vmatprep.subr.mxu0 0.0
      %1160 = vmatpush1.msra.mxu0 0.0
      %1161 = vmatprep.subr.mxu0 0.0
      %1162 = vmatpush1.msra.mxu0 0.0
      %1163 = vmatprep.subr.mxu0 0.0
      %1164 = vmatpush1.msra.mxu0 0.0
      %1165 = vmatprep.subr.mxu0 0.0
      %1166 = vmatpush1.msra.mxu0 0.0
      %1167 = vmatprep.subr.mxu0 0.0
      %1168 = vmatpush1.msra.mxu0 0.0
      %1169 = vmatprep.subr.mxu0 0.0
      %1170 = vmatpush1.msra.mxu0 0.0
      %1171 = vmatprep.subr.mxu0 0.0
      %1172 = vmatpush1.msra.mxu0 0.0
      %1173 = vmatprep.subr.mxu0 0.0
      %1174 = vmatpush1.msra.mxu0 %v1141
      %1175 = vmatprep.subr.mxu0 0.0
      %1176 = vmatpush2.msra.mxu0 0.0
      %1177 = vmatprep.subr.mxu0 0.0
      %1178 = vmatpush2.msra.mxu0 0.0
      %1179 = vmatprep.subr.mxu0 0.0
      %1180 = vmatpush2.msra.mxu0 0.0
      %1181 = vmatprep.subr.mxu0 0.0
      %1182 = vmatpush2.msra.mxu0 0.0
      %1183 = vmatprep.subr.mxu0 0.0
      %1184 = vmatpush2.msra.mxu0 0.0
      %1185 = vmatprep.subr.mxu0 0.0
      %1186 = vmatpush2.msra.mxu0 0.0
      %1187 = vmatprep.subr.mxu0 0.0
      %1188 = vmatpush2.msra.mxu0 0.0
      %1189 = vmatprep.subr.mxu0 0.0
      %1190 = vmatpush2.msra.mxu0 0.0
      %1191 = vmatprep.subr.mxu0 0.0
      %1192 = vmatpush2.msra.mxu0 0.0
      %1193 = vmatprep.subr.mxu0 0.0
      %1194 = vmatpush2.msra.mxu0 0.0
      %1195 = vmatprep.subr.mxu0 0.0
      %1196 = vmatpush2.msra.mxu0 0.0
      %1197 = vmatprep.subr.mxu0 0.0
      %1198 = vmatpush2.msra.mxu0 0.0
      %1199 = vmatprep.subr.mxu0 0.0
      %1200 = vmatpush2.msra.mxu0 0.0
      %1201 = vmatprep.subr.mxu0 0.0
      %1202 = vmatpush2.msra.mxu0 0.0
      %1203 = vmatprep.subr.mxu0 0.0
      %1204 = vmatpush2.msra.mxu0 0.0
      %1205 = vmatprep.subr.mxu0 0.0
      %1206 = vmatpush2.msra.mxu0 0.0
      %1207 = vmatprep.mubr.f32.mxu0 0.0
      %1208 = vmatmul.mubr.f32.gmra.mxu0 %v1045
      %v1209 = vpop.f32.mrf.mxu0
      %v1210 = vadd.f32 0.0, %v1209
      %v1211 = vpop.f32.mrf.mxu0
      %1212 = vmatprep.mubr.f32.mxu0 0.0
      %1213 = vmatmul.mubr.f32.gmra.mxu0 %v1048
      %v1214 = vpop.f32.mrf.mxu0
      %v1215 = vadd.f32 0.0, %v1214
      %v1216 = vpop.f32.mrf.mxu0
      %1217 = vmatprep.mubr.f32.mxu0 0.0
      %1218 = vmatmul.mubr.f32.gmra.mxu0 %v1051
      %v1219 = vpop.f32.mrf.mxu0
      %v1220 = vadd.f32 0.0, %v1219
      %v1221 = vpop.f32.mrf.mxu0
      %1222 = vmatprep.mubr.f32.mxu0 0.0
      %1223 = vmatmul.mubr.f32.gmra.mxu0 %v1054
      %v1224 = vpop.f32.mrf.mxu0
      %v1225 = vadd.f32 0.0, %v1224
      %v1226 = vpop.f32.mrf.mxu0
      %1227 = vmatprep.mubr.f32.mxu0 0.0
      %1228 = vmatmul.mubr.f32.gmra.mxu0 %v1057
      %v1229 = vpop.f32.mrf.mxu0
      %v1230 = vadd.f32 0.0, %v1229
      %v1231 = vpop.f32.mrf.mxu0
      %1232 = vmatprep.mubr.f32.mxu0 0.0
      %1233 = vmatmul.mubr.f32.gmra.mxu0 %v1060
      %v1234 = vpop.f32.mrf.mxu0
      %v1235 = vadd.f32 0.0, %v1234
      %v1236 = vpop.f32.mrf.mxu0
      %1237 = vmatprep.mubr.f32.mxu0 0.0
      %1238 = vmatmul.mubr.f32.gmra.mxu0 %v1063
      %v1239 = vpop.f32.mrf.mxu0
      %v1240 = vadd.f32 0.0, %v1239
      %v1241 = vpop.f32.mrf.mxu0
      %1242 = vmatprep.mubr.f32.mxu0 0.0
      %1243 = vmatmul.mubr.f32.gmra.mxu0 %v1066
      %v1244 = vpop.f32.mrf.mxu0
      %v1245 = vadd.f32 0.0, %v1244
      %v1246 = vpop.f32.mrf.mxu0
      %1247 = vmatprep.mubr.f32.mxu0 0.0
      %1248 = vmatmul.mubr.f32.gmra.mxu0 %v1069
      %v1249 = vpop.f32.mrf.mxu0
      %v1250 = vadd.f32 0.0, %v1249
      %v1251 = vpop.f32.mrf.mxu0
      %1252 = vmatprep.mubr.f32.mxu0 0.0
      %1253 = vmatmul.mubr.f32.gmra.mxu0 %v1072
      %v1254 = vpop.f32.mrf.mxu0
      %v1255 = vadd.f32 0.0, %v1254
      %v1256 = vpop.f32.mrf.mxu0
      %1257 = vmatprep.mubr.f32.mxu0 0.0
      %1258 = vmatmul.mubr.f32.gmra.mxu0 %v1075
      %v1259 = vpop.f32.mrf.mxu0
      %v1260 = vadd.f32 0.0, %v1259
      %v1261 = vpop.f32.mrf.mxu0
      %1262 = vmatprep.mubr.f32.mxu0 0.0
      %1263 = vmatmul.mubr.f32.gmra.mxu0 %v1078
      %v1264 = vpop.f32.mrf.mxu0
      %v1265 = vadd.f32 0.0, %v1264
      %v1266 = vpop.f32.mrf.mxu0
      %1267 = vmatprep.mubr.f32.mxu0 0.0
      %1268 = vmatmul.mubr.f32.gmra.mxu0 %v1081
      %v1269 = vpop.f32.mrf.mxu0
      %v1270 = vadd.f32 0.0, %v1269
      %v1271 = vpop.f32.mrf.mxu0
      %1272 = vmatprep.mubr.f32.mxu0 0.0
      %1273 = vmatmul.mubr.f32.gmra.mxu0 %v1084
      %v1274 = vpop.f32.mrf.mxu0
      %v1275 = vadd.f32 0.0, %v1274
      %v1276 = vpop.f32.mrf.mxu0
      %1277 = vmatprep.mubr.f32.mxu0 0.0
      %1278 = vmatmul.mubr.f32.gmra.mxu0 %v1087
      %v1279 = vpop.f32.mrf.mxu0
      %v1280 = vadd.f32 0.0, %v1279
      %v1281 = vpop.f32.mrf.mxu0
      %1282 = vmatprep.mubr.f32.mxu0 0.0
      %1283 = vmatmul.mubr.f32.gmra.mxu0 %v1090
      %v1284 = vpop.f32.mrf.mxu0
      %v1285 = vadd.f32 0.0, %v1284
      %v1286 = vpop.f32.mrf.mxu0
      %1287 = vmatprep.mubr.f32.mxu0 0.0
      %1288 = vmatmul.mubr.f32.gmra.mxu0 %v1093
      %v1289 = vpop.f32.mrf.mxu0
      %v1290 = vadd.f32 0.0, %v1289
      %v1291 = vpop.f32.mrf.mxu0
      %1292 = vmatprep.mubr.f32.mxu0 0.0
      %1293 = vmatmul.mubr.f32.gmra.mxu0 %v1096
      %v1294 = vpop.f32.mrf.mxu0
      %v1295 = vadd.f32 0.0, %v1294
      %v1296 = vpop.f32.mrf.mxu0
      %1297 = vmatprep.mubr.f32.mxu0 0.0
      %1298 = vmatmul.mubr.f32.gmra.mxu0 %v1099
      %v1299 = vpop.f32.mrf.mxu0
      %v1300 = vadd.f32 0.0, %v1299
      %v1301 = vpop.f32.mrf.mxu0
      %1302 = vmatprep.mubr.f32.mxu0 0.0
      %1303 = vmatmul.mubr.f32.gmra.mxu0 %v1102
      %v1304 = vpop.f32.mrf.mxu0
      %v1305 = vadd.f32 0.0, %v1304
      %v1306 = vpop.f32.mrf.mxu0
      %1307 = vmatprep.mubr.f32.mxu0 0.0
      %1308 = vmatmul.mubr.f32.gmra.mxu0 %v1105
      %v1309 = vpop.f32.mrf.mxu0
      %v1310 = vadd.f32 0.0, %v1309
      %v1311 = vpop.f32.mrf.mxu0
      %1312 = vmatprep.mubr.f32.mxu0 0.0
      %1313 = vmatmul.mubr.f32.gmra.mxu0 %v1108
      %v1314 = vpop.f32.mrf.mxu0
      %v1315 = vadd.f32 0.0, %v1314
      %v1316 = vpop.f32.mrf.mxu0
      %1317 = vmatprep.mubr.f32.mxu0 0.0
      %1318 = vmatmul.mubr.f32.gmra.mxu0 %v1111
      %v1319 = vpop.f32.mrf.mxu0
      %v1320 = vadd.f32 0.0, %v1319
      %v1321 = vpop.f32.mrf.mxu0
      %1322 = vmatprep.mubr.f32.mxu0 0.0
      %1323 = vmatmul.mubr.f32.gmra.mxu0 %v1114
      %v1324 = vpop.f32.mrf.mxu0
      %v1325 = vadd.f32 0.0, %v1324
      %v1326 = vpop.f32.mrf.mxu0
      %1327 = vmatprep.mubr.f32.mxu0 0.0
      %1328 = vmatmul.mubr.f32.gmra.mxu0 %v1117
      %v1329 = vpop.f32.mrf.mxu0
      %v1330 = vadd.f32 0.0, %v1329
      %v1331 = vpop.f32.mrf.mxu0
      %1332 = vmatprep.mubr.f32.mxu0 0.0
      %1333 = vmatmul.mubr.f32.gmra.mxu0 %v1120
      %v1334 = vpop.f32.mrf.mxu0
      %v1335 = vadd.f32 0.0, %v1334
      %v1336 = vpop.f32.mrf.mxu0
      %1337 = vmatprep.mubr.f32.mxu0 0.0
      %1338 = vmatmul.mubr.f32.gmra.mxu0 %v1123
      %v1339 = vpop.f32.mrf.mxu0
      %v1340 = vadd.f32 0.0, %v1339
      %v1341 = vpop.f32.mrf.mxu0
      %1342 = vmatprep.mubr.f32.mxu0 0.0
      %1343 = vmatmul.mubr.f32.gmra.mxu0 %v1126
      %v1344 = vpop.f32.mrf.mxu0
      %v1345 = vadd.f32 0.0, %v1344
      %v1346 = vpop.f32.mrf.mxu0
      %1347 = vmatprep.mubr.f32.mxu0 0.0
      %1348 = vmatmul.mubr.f32.gmra.mxu0 %v1129
      %v1349 = vpop.f32.mrf.mxu0
      %v1350 = vadd.f32 0.0, %v1349
      %v1351 = vpop.f32.mrf.mxu0
      %1352 = vmatprep.mubr.f32.mxu0 0.0
      %1353 = vmatmul.mubr.f32.gmra.mxu0 %v1132
      %v1354 = vpop.f32.mrf.mxu0
      %v1355 = vadd.f32 0.0, %v1354
      %v1356 = vpop.f32.mrf.mxu0
      %1357 = vmatprep.mubr.f32.mxu0 0.0
      %1358 = vmatmul.mubr.f32.gmra.mxu0 %v1135
      %v1359 = vpop.f32.mrf.mxu0
      %v1360 = vadd.f32 0.0, %v1359
      %v1361 = vpop.f32.mrf.mxu0
      %1362 = vmatprep.mubr.f32.mxu0 0.0
      %1363 = vmatmul.mubr.f32.gmra.mxu0 %v1138
      %v1364 = vpop.f32.mrf.mxu0
      %v1365 = vadd.f32 0.0, %v1364
      %v1366 = vpop.f32.mrf.mxu0
      %1367 = vdwg.mxu0
      %v1368 = vadd.f32 %v978, %v1210
      %v1369 = vadd.f32 %v979, %v1215
      %v1370 = vadd.f32 %v980, %v1220
      %v1371 = vadd.f32 %v981, %v1225
      %v1372 = vadd.f32 %v982, %v1230
      %v1373 = vadd.f32 %v983, %v1235
      %v1374 = vadd.f32 %v984, %v1240
      %v1375 = vadd.f32 %v985, %v1245
      %v1376 = vadd.f32 %v986, %v1250
      %v1377 = vadd.f32 %v987, %v1255
      %v1378 = vadd.f32 %v988, %v1260
      %v1379 = vadd.f32 %v989, %v1265
      %v1380 = vadd.f32 %v990, %v1270
      %v1381 = vadd.f32 %v991, %v1275
      %v1382 = vadd.f32 %v992, %v1280
      %v1383 = vadd.f32 %v993, %v1285
      %v1384 = vadd.f32 %v994, %v1290
      %v1385 = vadd.f32 %v995, %v1295
      %v1386 = vadd.f32 %v996, %v1300
      %v1387 = vadd.f32 %v997, %v1305
      %v1388 = vadd.f32 %v998, %v1310
      %v1389 = vadd.f32 %v999, %v1315
      %v1390 = vadd.f32 %v1000, %v1320
      %v1391 = vadd.f32 %v1001, %v1325
      %v1392 = vadd.f32 %v1002, %v1330
      %v1393 = vadd.f32 %v1003, %v1335
      %v1394 = vadd.f32 %v1004, %v1340
      %v1395 = vadd.f32 %v1005, %v1345
      %v1396 = vadd.f32 %v1006, %v1350
      %v1397 = vadd.f32 %v1007, %v1355
      %v1398 = vadd.f32 %v1008, %v1360
      %v1399 = vadd.f32 %v1009, %v1365
      %s1400 = scalar_lea.vmem %s206, 24
      %v1401 = vld [vmem:[%s1400] sm:$0xff]
      %v1402 = vld [vmem:[%s1400 + $0x8] sm:$0xff]
      %v1403 = vld [vmem:[%s1400 + $0x18] sm:$0xff]
      %v1404 = vld [vmem:[%s1400 + $0x20] sm:$0xff]
      %v1405 = vld [vmem:[%s1400 + $0x30] sm:$0xff]
      %v1406 = vld [vmem:[%s1400 + $0x38] sm:$0xff]
      %v1407 = vld [vmem:[%s1400 + $0x48] sm:$0xff]
      %v1408 = vld [vmem:[%s1400 + $0x50] sm:$0xff]
      %v1409 = vld [vmem:[%s1400 + $0x60] sm:$0xff]
      %v1410 = vld [vmem:[%s1400 + $0x68] sm:$0xff]
      %v1411 = vld [vmem:[%s1400 + $0x78] sm:$0xff]
      %v1412 = vld [vmem:[%s1400 + $0x80] sm:$0xff]
      %v1413 = vld [vmem:[%s1400 + $0x90] sm:$0xff]
      %v1414 = vld [vmem:[%s1400 + $0x98] sm:$0xff]
      %v1415 = vld [vmem:[%s1400 + $0xa8] sm:$0xff]
      %v1416 = vld [vmem:[%s1400 + $0xb0] sm:$0xff]
      %v1417 = vld [vmem:[%s1400 + $0xc0] sm:$0xff]
      %v1418 = vld [vmem:[%s1400 + $0xc8] sm:$0xff]
      %v1419 = vld [vmem:[%s1400 + $0xd8] sm:$0xff]
      %v1420 = vld [vmem:[%s1400 + $0xe0] sm:$0xff]
      %v1421 = vld [vmem:[%s1400 + $0xf0] sm:$0xff]
      %v1422 = vld [vmem:[%s1400 + $0xf8] sm:$0xff]
      %v1423 = vld [vmem:[%s1400 + $0x108] sm:$0xff]
      %v1424 = vld [vmem:[%s1400 + $0x110] sm:$0xff]
      %v1425 = vld [vmem:[%s1400 + $0x120] sm:$0xff]
      %v1426 = vld [vmem:[%s1400 + $0x128] sm:$0xff]
      %v1427 = vld [vmem:[%s1400 + $0x138] sm:$0xff]
      %v1428 = vld [vmem:[%s1400 + $0x140] sm:$0xff]
      %v1429 = vld [vmem:[%s1400 + $0x150] sm:$0xff]
      %v1430 = vld [vmem:[%s1400 + $0x158] sm:$0xff]
      %v1431 = vld [vmem:[%s1400 + $0x168] sm:$0xff]
      %v1432 = vld [vmem:[%s1400 + $0x170] sm:$0xff]
      %s1433 = scalar_lea.vmem %s210, 12
      %v1434 = vld [vmem:[%s1433] sm:$0xf]
      %v1436 = vsel %vm262, %v1401, 0
      %v1439 = vsel %vm262, %v1402, 0
      %v1442 = vsel %vm262, %v1403, 0
      %v1445 = vsel %vm262, %v1404, 0
      %v1448 = vsel %vm262, %v1405, 0
      %v1451 = vsel %vm262, %v1406, 0
      %v1454 = vsel %vm262, %v1407, 0
      %v1457 = vsel %vm262, %v1408, 0
      %v1460 = vsel %vm262, %v1409, 0
      %v1463 = vsel %vm262, %v1410, 0
      %v1466 = vsel %vm262, %v1411, 0
      %v1469 = vsel %vm262, %v1412, 0
      %v1472 = vsel %vm262, %v1413, 0
      %v1475 = vsel %vm262, %v1414, 0
      %v1478 = vsel %vm262, %v1415, 0
      %v1481 = vsel %vm262, %v1416, 0
      %v1484 = vsel %vm262, %v1417, 0
      %v1487 = vsel %vm262, %v1418, 0
      %v1490 = vsel %vm262, %v1419, 0
      %v1493 = vsel %vm262, %v1420, 0
      %v1496 = vsel %vm262, %v1421, 0
      %v1499 = vsel %vm262, %v1422, 0
      %v1502 = vsel %vm262, %v1423, 0
      %v1505 = vsel %vm262, %v1424, 0
      %v1508 = vsel %vm262, %v1425, 0
      %v1511 = vsel %vm262, %v1426, 0
      %v1514 = vsel %vm262, %v1427, 0
      %v1517 = vsel %vm262, %v1428, 0
      %v1520 = vsel %vm262, %v1429, 0
      %v1523 = vsel %vm262, %v1430, 0
      %v1526 = vsel %vm262, %v1431, 0
      %v1529 = vsel %vm262, %v1432, 0
      %v1532 = vsel %vm359, %v1434, 0
      %1534 = vmatprep.subr.mxu0 0.0
      %1535 = vmatpush1.msra.mxu0 0.0
      %1536 = vmatprep.subr.mxu0 0.0
      %1537 = vmatpush1.msra.mxu0 0.0
      %1538 = vmatprep.subr.mxu0 0.0
      %1539 = vmatpush1.msra.mxu0 0.0
      %1540 = vmatprep.subr.mxu0 0.0
      %1541 = vmatpush1.msra.mxu0 0.0
      %1542 = vmatprep.subr.mxu0 0.0
      %1543 = vmatpush1.msra.mxu0 0.0
      %1544 = vmatprep.subr.mxu0 0.0
      %1545 = vmatpush1.msra.mxu0 0.0
      %1546 = vmatprep.subr.mxu0 0.0
      %1547 = vmatpush1.msra.mxu0 0.0
      %1548 = vmatprep.subr.mxu0 0.0
      %1549 = vmatpush1.msra.mxu0 0.0
      %1550 = vmatprep.subr.mxu0 0.0
      %1551 = vmatpush1.msra.mxu0 0.0
      %1552 = vmatprep.subr.mxu0 0.0
      %1553 = vmatpush1.msra.mxu0 0.0
      %1554 = vmatprep.subr.mxu0 0.0
      %1555 = vmatpush1.msra.mxu0 0.0
      %1556 = vmatprep.subr.mxu0 0.0
      %1557 = vmatpush1.msra.mxu0 0.0
      %1558 = vmatprep.subr.mxu0 0.0
      %1559 = vmatpush1.msra.mxu0 0.0
      %1560 = vmatprep.subr.mxu0 0.0
      %1561 = vmatpush1.msra.mxu0 0.0
      %1562 = vmatprep.subr.mxu0 0.0
      %1563 = vmatpush1.msra.mxu0 0.0
      %1564 = vmatprep.subr.mxu0 0.0
      %1565 = vmatpush1.msra.mxu0 %v1532
      %1566 = vmatprep.subr.mxu0 0.0
      %1567 = vmatpush2.msra.mxu0 0.0
      %1568 = vmatprep.subr.mxu0 0.0
      %1569 = vmatpush2.msra.mxu0 0.0
      %1570 = vmatprep.subr.mxu0 0.0
      %1571 = vmatpush2.msra.mxu0 0.0
      %1572 = vmatprep.subr.mxu0 0.0
      %1573 = vmatpush2.msra.mxu0 0.0
      %1574 = vmatprep.subr.mxu0 0.0
      %1575 = vmatpush2.msra.mxu0 0.0
      %1576 = vmatprep.subr.mxu0 0.0
      %1577 = vmatpush2.msra.mxu0 0.0
      %1578 = vmatprep.subr.mxu0 0.0
      %1579 = vmatpush2.msra.mxu0 0.0
      %1580 = vmatprep.subr.mxu0 0.0
      %1581 = vmatpush2.msra.mxu0 0.0
      %1582 = vmatprep.subr.mxu0 0.0
      %1583 = vmatpush2.msra.mxu0 0.0
      %1584 = vmatprep.subr.mxu0 0.0
      %1585 = vmatpush2.msra.mxu0 0.0
      %1586 = vmatprep.subr.mxu0 0.0
      %1587 = vmatpush2.msra.mxu0 0.0
      %1588 = vmatprep.subr.mxu0 0.0
      %1589 = vmatpush2.msra.mxu0 0.0
      %1590 = vmatprep.subr.mxu0 0.0
      %1591 = vmatpush2.msra.mxu0 0.0
      %1592 = vmatprep.subr.mxu0 0.0
      %1593 = vmatpush2.msra.mxu0 0.0
      %1594 = vmatprep.subr.mxu0 0.0
      %1595 = vmatpush2.msra.mxu0 0.0
      %1596 = vmatprep.subr.mxu0 0.0
      %1597 = vmatpush2.msra.mxu0 0.0
      %1598 = vmatprep.mubr.f32.mxu0 0.0
      %1599 = vmatmul.mubr.f32.gmra.mxu0 %v1436
      %v1600 = vpop.f32.mrf.mxu0
      %v1601 = vadd.f32 0.0, %v1600
      %v1602 = vpop.f32.mrf.mxu0
      %1603 = vmatprep.mubr.f32.mxu0 0.0
      %1604 = vmatmul.mubr.f32.gmra.mxu0 %v1439
      %v1605 = vpop.f32.mrf.mxu0
      %v1606 = vadd.f32 0.0, %v1605
      %v1607 = vpop.f32.mrf.mxu0
      %1608 = vmatprep.mubr.f32.mxu0 0.0
      %1609 = vmatmul.mubr.f32.gmra.mxu0 %v1442
      %v1610 = vpop.f32.mrf.mxu0
      %v1611 = vadd.f32 0.0, %v1610
      %v1612 = vpop.f32.mrf.mxu0
      %1613 = vmatprep.mubr.f32.mxu0 0.0
      %1614 = vmatmul.mubr.f32.gmra.mxu0 %v1445
      %v1615 = vpop.f32.mrf.mxu0
      %v1616 = vadd.f32 0.0, %v1615
      %v1617 = vpop.f32.mrf.mxu0
      %1618 = vmatprep.mubr.f32.mxu0 0.0
      %1619 = vmatmul.mubr.f32.gmra.mxu0 %v1448
      %v1620 = vpop.f32.mrf.mxu0
      %v1621 = vadd.f32 0.0, %v1620
      %v1622 = vpop.f32.mrf.mxu0
      %1623 = vmatprep.mubr.f32.mxu0 0.0
      %1624 = vmatmul.mubr.f32.gmra.mxu0 %v1451
      %v1625 = vpop.f32.mrf.mxu0
      %v1626 = vadd.f32 0.0, %v1625
      %v1627 = vpop.f32.mrf.mxu0
      %1628 = vmatprep.mubr.f32.mxu0 0.0
      %1629 = vmatmul.mubr.f32.gmra.mxu0 %v1454
      %v1630 = vpop.f32.mrf.mxu0
      %v1631 = vadd.f32 0.0, %v1630
      %v1632 = vpop.f32.mrf.mxu0
      %1633 = vmatprep.mubr.f32.mxu0 0.0
      %1634 = vmatmul.mubr.f32.gmra.mxu0 %v1457
      %v1635 = vpop.f32.mrf.mxu0
      %v1636 = vadd.f32 0.0, %v1635
      %v1637 = vpop.f32.mrf.mxu0
      %1638 = vmatprep.mubr.f32.mxu0 0.0
      %1639 = vmatmul.mubr.f32.gmra.mxu0 %v1460
      %v1640 = vpop.f32.mrf.mxu0
      %v1641 = vadd.f32 0.0, %v1640
      %v1642 = vpop.f32.mrf.mxu0
      %1643 = vmatprep.mubr.f32.mxu0 0.0
      %1644 = vmatmul.mubr.f32.gmra.mxu0 %v1463
      %v1645 = vpop.f32.mrf.mxu0
      %v1646 = vadd.f32 0.0, %v1645
      %v1647 = vpop.f32.mrf.mxu0
      %1648 = vmatprep.mubr.f32.mxu0 0.0
      %1649 = vmatmul.mubr.f32.gmra.mxu0 %v1466
      %v1650 = vpop.f32.mrf.mxu0
      %v1651 = vadd.f32 0.0, %v1650
      %v1652 = vpop.f32.mrf.mxu0
      %1653 = vmatprep.mubr.f32.mxu0 0.0
      %1654 = vmatmul.mubr.f32.gmra.mxu0 %v1469
      %v1655 = vpop.f32.mrf.mxu0
      %v1656 = vadd.f32 0.0, %v1655
      %v1657 = vpop.f32.mrf.mxu0
      %1658 = vmatprep.mubr.f32.mxu0 0.0
      %1659 = vmatmul.mubr.f32.gmra.mxu0 %v1472
      %v1660 = vpop.f32.mrf.mxu0
      %v1661 = vadd.f32 0.0, %v1660
      %v1662 = vpop.f32.mrf.mxu0
      %1663 = vmatprep.mubr.f32.mxu0 0.0
      %1664 = vmatmul.mubr.f32.gmra.mxu0 %v1475
      %v1665 = vpop.f32.mrf.mxu0
      %v1666 = vadd.f32 0.0, %v1665
      %v1667 = vpop.f32.mrf.mxu0
      %1668 = vmatprep.mubr.f32.mxu0 0.0
      %1669 = vmatmul.mubr.f32.gmra.mxu0 %v1478
      %v1670 = vpop.f32.mrf.mxu0
      %v1671 = vadd.f32 0.0, %v1670
      %v1672 = vpop.f32.mrf.mxu0
      %1673 = vmatprep.mubr.f32.mxu0 0.0
      %1674 = vmatmul.mubr.f32.gmra.mxu0 %v1481
      %v1675 = vpop.f32.mrf.mxu0
      %v1676 = vadd.f32 0.0, %v1675
      %v1677 = vpop.f32.mrf.mxu0
      %1678 = vmatprep.mubr.f32.mxu0 0.0
      %1679 = vmatmul.mubr.f32.gmra.mxu0 %v1484
      %v1680 = vpop.f32.mrf.mxu0
      %v1681 = vadd.f32 0.0, %v1680
      %v1682 = vpop.f32.mrf.mxu0
      %1683 = vmatprep.mubr.f32.mxu0 0.0
      %1684 = vmatmul.mubr.f32.gmra.mxu0 %v1487
      %v1685 = vpop.f32.mrf.mxu0
      %v1686 = vadd.f32 0.0, %v1685
      %v1687 = vpop.f32.mrf.mxu0
      %1688 = vmatprep.mubr.f32.mxu0 0.0
      %1689 = vmatmul.mubr.f32.gmra.mxu0 %v1490
      %v1690 = vpop.f32.mrf.mxu0
      %v1691 = vadd.f32 0.0, %v1690
      %v1692 = vpop.f32.mrf.mxu0
      %1693 = vmatprep.mubr.f32.mxu0 0.0
      %1694 = vmatmul.mubr.f32.gmra.mxu0 %v1493
      %v1695 = vpop.f32.mrf.mxu0
      %v1696 = vadd.f32 0.0, %v1695
      %v1697 = vpop.f32.mrf.mxu0
      %1698 = vmatprep.mubr.f32.mxu0 0.0
      %1699 = vmatmul.mubr.f32.gmra.mxu0 %v1496
      %v1700 = vpop.f32.mrf.mxu0
      %v1701 = vadd.f32 0.0, %v1700
      %v1702 = vpop.f32.mrf.mxu0
      %1703 = vmatprep.mubr.f32.mxu0 0.0
      %1704 = vmatmul.mubr.f32.gmra.mxu0 %v1499
      %v1705 = vpop.f32.mrf.mxu0
      %v1706 = vadd.f32 0.0, %v1705
      %v1707 = vpop.f32.mrf.mxu0
      %1708 = vmatprep.mubr.f32.mxu0 0.0
      %1709 = vmatmul.mubr.f32.gmra.mxu0 %v1502
      %v1710 = vpop.f32.mrf.mxu0
      %v1711 = vadd.f32 0.0, %v1710
      %v1712 = vpop.f32.mrf.mxu0
      %1713 = vmatprep.mubr.f32.mxu0 0.0
      %1714 = vmatmul.mubr.f32.gmra.mxu0 %v1505
      %v1715 = vpop.f32.mrf.mxu0
      %v1716 = vadd.f32 0.0, %v1715
      %v1717 = vpop.f32.mrf.mxu0
      %1718 = vmatprep.mubr.f32.mxu0 0.0
      %1719 = vmatmul.mubr.f32.gmra.mxu0 %v1508
      %v1720 = vpop.f32.mrf.mxu0
      %v1721 = vadd.f32 0.0, %v1720
      %v1722 = vpop.f32.mrf.mxu0
      %1723 = vmatprep.mubr.f32.mxu0 0.0
      %1724 = vmatmul.mubr.f32.gmra.mxu0 %v1511
      %v1725 = vpop.f32.mrf.mxu0
      %v1726 = vadd.f32 0.0, %v1725
      %v1727 = vpop.f32.mrf.mxu0
      %1728 = vmatprep.mubr.f32.mxu0 0.0
      %1729 = vmatmul.mubr.f32.gmra.mxu0 %v1514
      %v1730 = vpop.f32.mrf.mxu0
      %v1731 = vadd.f32 0.0, %v1730
      %v1732 = vpop.f32.mrf.mxu0
      %1733 = vmatprep.mubr.f32.mxu0 0.0
      %1734 = vmatmul.mubr.f32.gmra.mxu0 %v1517
      %v1735 = vpop.f32.mrf.mxu0
      %v1736 = vadd.f32 0.0, %v1735
      %v1737 = vpop.f32.mrf.mxu0
      %1738 = vmatprep.mubr.f32.mxu0 0.0
      %1739 = vmatmul.mubr.f32.gmra.mxu0 %v1520
      %v1740 = vpop.f32.mrf.mxu0
      %v1741 = vadd.f32 0.0, %v1740
      %v1742 = vpop.f32.mrf.mxu0
      %1743 = vmatprep.mubr.f32.mxu0 0.0
      %1744 = vmatmul.mubr.f32.gmra.mxu0 %v1523
      %v1745 = vpop.f32.mrf.mxu0
      %v1746 = vadd.f32 0.0, %v1745
      %v1747 = vpop.f32.mrf.mxu0
      %1748 = vmatprep.mubr.f32.mxu0 0.0
      %1749 = vmatmul.mubr.f32.gmra.mxu0 %v1526
      %v1750 = vpop.f32.mrf.mxu0
      %v1751 = vadd.f32 0.0, %v1750
      %v1752 = vpop.f32.mrf.mxu0
      %1753 = vmatprep.mubr.f32.mxu0 0.0
      %1754 = vmatmul.mubr.f32.gmra.mxu0 %v1529
      %v1755 = vpop.f32.mrf.mxu0
      %v1756 = vadd.f32 0.0, %v1755
      %v1757 = vpop.f32.mrf.mxu0
      %1758 = vdwg.mxu0
      %v1759 = vadd.f32 %v1368, %v1601
      %v1760 = vadd.f32 %v1369, %v1606
      %v1761 = vadd.f32 %v1370, %v1611
      %v1762 = vadd.f32 %v1371, %v1616
      %v1763 = vadd.f32 %v1372, %v1621
      %v1764 = vadd.f32 %v1373, %v1626
      %v1765 = vadd.f32 %v1374, %v1631
      %v1766 = vadd.f32 %v1375, %v1636
      %v1767 = vadd.f32 %v1376, %v1641
      %v1768 = vadd.f32 %v1377, %v1646
      %v1769 = vadd.f32 %v1378, %v1651
      %v1770 = vadd.f32 %v1379, %v1656
      %v1771 = vadd.f32 %v1380, %v1661
      %v1772 = vadd.f32 %v1381, %v1666
      %v1773 = vadd.f32 %v1382, %v1671
      %v1774 = vadd.f32 %v1383, %v1676
      %v1775 = vadd.f32 %v1384, %v1681
      %v1776 = vadd.f32 %v1385, %v1686
      %v1777 = vadd.f32 %v1386, %v1691
      %v1778 = vadd.f32 %v1387, %v1696
      %v1779 = vadd.f32 %v1388, %v1701
      %v1780 = vadd.f32 %v1389, %v1706
      %v1781 = vadd.f32 %v1390, %v1711
      %v1782 = vadd.f32 %v1391, %v1716
      %v1783 = vadd.f32 %v1392, %v1721
      %v1784 = vadd.f32 %v1393, %v1726
      %v1785 = vadd.f32 %v1394, %v1731
      %v1786 = vadd.f32 %v1395, %v1736
      %v1787 = vadd.f32 %v1396, %v1741
      %v1788 = vadd.f32 %v1397, %v1746
      %v1789 = vadd.f32 %v1398, %v1751
      %v1790 = vadd.f32 %v1399, %v1756
      %v1791 = vld [vmem:[%s1400 + $0x1] sm:$0xff]
      %v1792 = vld [vmem:[%s1400 + $0x9] sm:$0xff]
      %v1793 = vld [vmem:[%s1400 + $0x19] sm:$0xff]
      %v1794 = vld [vmem:[%s1400 + $0x21] sm:$0xff]
      %v1795 = vld [vmem:[%s1400 + $0x31] sm:$0xff]
      %v1796 = vld [vmem:[%s1400 + $0x39] sm:$0xff]
      %v1797 = vld [vmem:[%s1400 + $0x49] sm:$0xff]
      %v1798 = vld [vmem:[%s1400 + $0x51] sm:$0xff]
      %v1799 = vld [vmem:[%s1400 + $0x61] sm:$0xff]
      %v1800 = vld [vmem:[%s1400 + $0x69] sm:$0xff]
      %v1801 = vld [vmem:[%s1400 + $0x79] sm:$0xff]
      %v1802 = vld [vmem:[%s1400 + $0x81] sm:$0xff]
      %v1803 = vld [vmem:[%s1400 + $0x91] sm:$0xff]
      %v1804 = vld [vmem:[%s1400 + $0x99] sm:$0xff]
      %v1805 = vld [vmem:[%s1400 + $0xa9] sm:$0xff]
      %v1806 = vld [vmem:[%s1400 + $0xb1] sm:$0xff]
      %v1807 = vld [vmem:[%s1400 + $0xc1] sm:$0xff]
      %v1808 = vld [vmem:[%s1400 + $0xc9] sm:$0xff]
      %v1809 = vld [vmem:[%s1400 + $0xd9] sm:$0xff]
      %v1810 = vld [vmem:[%s1400 + $0xe1] sm:$0xff]
      %v1811 = vld [vmem:[%s1400 + $0xf1] sm:$0xff]
      %v1812 = vld [vmem:[%s1400 + $0xf9] sm:$0xff]
      %v1813 = vld [vmem:[%s1400 + $0x109] sm:$0xff]
      %v1814 = vld [vmem:[%s1400 + $0x111] sm:$0xff]
      %v1815 = vld [vmem:[%s1400 + $0x121] sm:$0xff]
      %v1816 = vld [vmem:[%s1400 + $0x129] sm:$0xff]
      %v1817 = vld [vmem:[%s1400 + $0x139] sm:$0xff]
      %v1818 = vld [vmem:[%s1400 + $0x141] sm:$0xff]
      %v1819 = vld [vmem:[%s1400 + $0x151] sm:$0xff]
      %v1820 = vld [vmem:[%s1400 + $0x159] sm:$0xff]
      %v1821 = vld [vmem:[%s1400 + $0x169] sm:$0xff]
      %v1822 = vld [vmem:[%s1400 + $0x171] sm:$0xff]
      %s1823 = scalar_lea.vmem %s210, 16
      %v1824 = vld [vmem:[%s1823] sm:$0xf]
      %v1826 = vsel %vm262, %v1791, 0
      %v1829 = vsel %vm262, %v1792, 0
      %v1832 = vsel %vm262, %v1793, 0
      %v1835 = vsel %vm262, %v1794, 0
      %v1838 = vsel %vm262, %v1795, 0
      %v1841 = vsel %vm262, %v1796, 0
      %v1844 = vsel %vm262, %v1797, 0
      %v1847 = vsel %vm262, %v1798, 0
      %v1850 = vsel %vm262, %v1799, 0
      %v1853 = vsel %vm262, %v1800, 0
      %v1856 = vsel %vm262, %v1801, 0
      %v1859 = vsel %vm262, %v1802, 0
      %v1862 = vsel %vm262, %v1803, 0
      %v1865 = vsel %vm262, %v1804, 0
      %v1868 = vsel %vm262, %v1805, 0
      %v1871 = vsel %vm262, %v1806, 0
      %v1874 = vsel %vm262, %v1807, 0
      %v1877 = vsel %vm262, %v1808, 0
      %v1880 = vsel %vm262, %v1809, 0
      %v1883 = vsel %vm262, %v1810, 0
      %v1886 = vsel %vm262, %v1811, 0
      %v1889 = vsel %vm262, %v1812, 0
      %v1892 = vsel %vm262, %v1813, 0
      %v1895 = vsel %vm262, %v1814, 0
      %v1898 = vsel %vm262, %v1815, 0
      %v1901 = vsel %vm262, %v1816, 0
      %v1904 = vsel %vm262, %v1817, 0
      %v1907 = vsel %vm262, %v1818, 0
      %v1910 = vsel %vm262, %v1819, 0
      %v1913 = vsel %vm262, %v1820, 0
      %v1916 = vsel %vm262, %v1821, 0
      %v1919 = vsel %vm262, %v1822, 0
      %v1922 = vsel %vm359, %v1824, 0
      %1924 = vmatprep.subr.mxu0 0.0
      %1925 = vmatpush1.msra.mxu0 0.0
      %1926 = vmatprep.subr.mxu0 0.0
      %1927 = vmatpush1.msra.mxu0 0.0
      %1928 = vmatprep.subr.mxu0 0.0
      %1929 = vmatpush1.msra.mxu0 0.0
      %1930 = vmatprep.subr.mxu0 0.0
      %1931 = vmatpush1.msra.mxu0 0.0
      %1932 = vmatprep.subr.mxu0 0.0
      %1933 = vmatpush1.msra.mxu0 0.0
      %1934 = vmatprep.subr.mxu0 0.0
      %1935 = vmatpush1.msra.mxu0 0.0
      %1936 = vmatprep.subr.mxu0 0.0
      %1937 = vmatpush1.msra.mxu0 0.0
      %1938 = vmatprep.subr.mxu0 0.0
      %1939 = vmatpush1.msra.mxu0 0.0
      %1940 = vmatprep.subr.mxu0 0.0
      %1941 = vmatpush1.msra.mxu0 0.0
      %1942 = vmatprep.subr.mxu0 0.0
      %1943 = vmatpush1.msra.mxu0 0.0
      %1944 = vmatprep.subr.mxu0 0.0
      %1945 = vmatpush1.msra.mxu0 0.0
      %1946 = vmatprep.subr.mxu0 0.0
      %1947 = vmatpush1.msra.mxu0 0.0
      %1948 = vmatprep.subr.mxu0 0.0
      %1949 = vmatpush1.msra.mxu0 0.0
      %1950 = vmatprep.subr.mxu0 0.0
      %1951 = vmatpush1.msra.mxu0 0.0
      %1952 = vmatprep.subr.mxu0 0.0
      %1953 = vmatpush1.msra.mxu0 0.0
      %1954 = vmatprep.subr.mxu0 0.0
      %1955 = vmatpush1.msra.mxu0 %v1922
      %1956 = vmatprep.subr.mxu0 0.0
      %1957 = vmatpush2.msra.mxu0 0.0
      %1958 = vmatprep.subr.mxu0 0.0
      %1959 = vmatpush2.msra.mxu0 0.0
      %1960 = vmatprep.subr.mxu0 0.0
      %1961 = vmatpush2.msra.mxu0 0.0
      %1962 = vmatprep.subr.mxu0 0.0
      %1963 = vmatpush2.msra.mxu0 0.0
      %1964 = vmatprep.subr.mxu0 0.0
      %1965 = vmatpush2.msra.mxu0 0.0
      %1966 = vmatprep.subr.mxu0 0.0
      %1967 = vmatpush2.msra.mxu0 0.0
      %1968 = vmatprep.subr.mxu0 0.0
      %1969 = vmatpush2.msra.mxu0 0.0
      %1970 = vmatprep.subr.mxu0 0.0
      %1971 = vmatpush2.msra.mxu0 0.0
      %1972 = vmatprep.subr.mxu0 0.0
      %1973 = vmatpush2.msra.mxu0 0.0
      %1974 = vmatprep.subr.mxu0 0.0
      %1975 = vmatpush2.msra.mxu0 0.0
      %1976 = vmatprep.subr.mxu0 0.0
      %1977 = vmatpush2.msra.mxu0 0.0
      %1978 = vmatprep.subr.mxu0 0.0
      %1979 = vmatpush2.msra.mxu0 0.0
      %1980 = vmatprep.subr.mxu0 0.0
      %1981 = vmatpush2.msra.mxu0 0.0
      %1982 = vmatprep.subr.mxu0 0.0
      %1983 = vmatpush2.msra.mxu0 0.0
      %1984 = vmatprep.subr.mxu0 0.0
      %1985 = vmatpush2.msra.mxu0 0.0
      %1986 = vmatprep.subr.mxu0 0.0
      %1987 = vmatpush2.msra.mxu0 0.0
      %1988 = vmatprep.mubr.f32.mxu0 0.0
      %1989 = vmatmul.mubr.f32.gmra.mxu0 %v1826
      %v1990 = vpop.f32.mrf.mxu0
      %v1991 = vadd.f32 0.0, %v1990
      %v1992 = vpop.f32.mrf.mxu0
      %1993 = vmatprep.mubr.f32.mxu0 0.0
      %1994 = vmatmul.mubr.f32.gmra.mxu0 %v1829
      %v1995 = vpop.f32.mrf.mxu0
      %v1996 = vadd.f32 0.0, %v1995
      %v1997 = vpop.f32.mrf.mxu0
      %1998 = vmatprep.mubr.f32.mxu0 0.0
      %1999 = vmatmul.mubr.f32.gmra.mxu0 %v1832
      %v2000 = vpop.f32.mrf.mxu0
      %v2001 = vadd.f32 0.0, %v2000
      %v2002 = vpop.f32.mrf.mxu0
      %2003 = vmatprep.mubr.f32.mxu0 0.0
      %2004 = vmatmul.mubr.f32.gmra.mxu0 %v1835
      %v2005 = vpop.f32.mrf.mxu0
      %v2006 = vadd.f32 0.0, %v2005
      %v2007 = vpop.f32.mrf.mxu0
      %2008 = vmatprep.mubr.f32.mxu0 0.0
      %2009 = vmatmul.mubr.f32.gmra.mxu0 %v1838
      %v2010 = vpop.f32.mrf.mxu0
      %v2011 = vadd.f32 0.0, %v2010
      %v2012 = vpop.f32.mrf.mxu0
      %2013 = vmatprep.mubr.f32.mxu0 0.0
      %2014 = vmatmul.mubr.f32.gmra.mxu0 %v1841
      %v2015 = vpop.f32.mrf.mxu0
      %v2016 = vadd.f32 0.0, %v2015
      %v2017 = vpop.f32.mrf.mxu0
      %2018 = vmatprep.mubr.f32.mxu0 0.0
      %2019 = vmatmul.mubr.f32.gmra.mxu0 %v1844
      %v2020 = vpop.f32.mrf.mxu0
      %v2021 = vadd.f32 0.0, %v2020
      %v2022 = vpop.f32.mrf.mxu0
      %2023 = vmatprep.mubr.f32.mxu0 0.0
      %2024 = vmatmul.mubr.f32.gmra.mxu0 %v1847
      %v2025 = vpop.f32.mrf.mxu0
      %v2026 = vadd.f32 0.0, %v2025
      %v2027 = vpop.f32.mrf.mxu0
      %2028 = vmatprep.mubr.f32.mxu0 0.0
      %2029 = vmatmul.mubr.f32.gmra.mxu0 %v1850
      %v2030 = vpop.f32.mrf.mxu0
      %v2031 = vadd.f32 0.0, %v2030
      %v2032 = vpop.f32.mrf.mxu0
      %2033 = vmatprep.mubr.f32.mxu0 0.0
      %2034 = vmatmul.mubr.f32.gmra.mxu0 %v1853
      %v2035 = vpop.f32.mrf.mxu0
      %v2036 = vadd.f32 0.0, %v2035
      %v2037 = vpop.f32.mrf.mxu0
      %2038 = vmatprep.mubr.f32.mxu0 0.0
      %2039 = vmatmul.mubr.f32.gmra.mxu0 %v1856
      %v2040 = vpop.f32.mrf.mxu0
      %v2041 = vadd.f32 0.0, %v2040
      %v2042 = vpop.f32.mrf.mxu0
      %2043 = vmatprep.mubr.f32.mxu0 0.0
      %2044 = vmatmul.mubr.f32.gmra.mxu0 %v1859
      %v2045 = vpop.f32.mrf.mxu0
      %v2046 = vadd.f32 0.0, %v2045
      %v2047 = vpop.f32.mrf.mxu0
      %2048 = vmatprep.mubr.f32.mxu0 0.0
      %2049 = vmatmul.mubr.f32.gmra.mxu0 %v1862
      %v2050 = vpop.f32.mrf.mxu0
      %v2051 = vadd.f32 0.0, %v2050
      %v2052 = vpop.f32.mrf.mxu0
      %2053 = vmatprep.mubr.f32.mxu0 0.0
      %2054 = vmatmul.mubr.f32.gmra.mxu0 %v1865
      %v2055 = vpop.f32.mrf.mxu0
      %v2056 = vadd.f32 0.0, %v2055
      %v2057 = vpop.f32.mrf.mxu0
      %2058 = vmatprep.mubr.f32.mxu0 0.0
      %2059 = vmatmul.mubr.f32.gmra.mxu0 %v1868
      %v2060 = vpop.f32.mrf.mxu0
      %v2061 = vadd.f32 0.0, %v2060
      %v2062 = vpop.f32.mrf.mxu0
      %2063 = vmatprep.mubr.f32.mxu0 0.0
      %2064 = vmatmul.mubr.f32.gmra.mxu0 %v1871
      %v2065 = vpop.f32.mrf.mxu0
      %v2066 = vadd.f32 0.0, %v2065
      %v2067 = vpop.f32.mrf.mxu0
      %2068 = vmatprep.mubr.f32.mxu0 0.0
      %2069 = vmatmul.mubr.f32.gmra.mxu0 %v1874
      %v2070 = vpop.f32.mrf.mxu0
      %v2071 = vadd.f32 0.0, %v2070
      %v2072 = vpop.f32.mrf.mxu0
      %2073 = vmatprep.mubr.f32.mxu0 0.0
      %2074 = vmatmul.mubr.f32.gmra.mxu0 %v1877
      %v2075 = vpop.f32.mrf.mxu0
      %v2076 = vadd.f32 0.0, %v2075
      %v2077 = vpop.f32.mrf.mxu0
      %2078 = vmatprep.mubr.f32.mxu0 0.0
      %2079 = vmatmul.mubr.f32.gmra.mxu0 %v1880
      %v2080 = vpop.f32.mrf.mxu0
      %v2081 = vadd.f32 0.0, %v2080
      %v2082 = vpop.f32.mrf.mxu0
      %2083 = vmatprep.mubr.f32.mxu0 0.0
      %2084 = vmatmul.mubr.f32.gmra.mxu0 %v1883
      %v2085 = vpop.f32.mrf.mxu0
      %v2086 = vadd.f32 0.0, %v2085
      %v2087 = vpop.f32.mrf.mxu0
      %2088 = vmatprep.mubr.f32.mxu0 0.0
      %2089 = vmatmul.mubr.f32.gmra.mxu0 %v1886
      %v2090 = vpop.f32.mrf.mxu0
      %v2091 = vadd.f32 0.0, %v2090
      %v2092 = vpop.f32.mrf.mxu0
      %2093 = vmatprep.mubr.f32.mxu0 0.0
      %2094 = vmatmul.mubr.f32.gmra.mxu0 %v1889
      %v2095 = vpop.f32.mrf.mxu0
      %v2096 = vadd.f32 0.0, %v2095
      %v2097 = vpop.f32.mrf.mxu0
      %2098 = vmatprep.mubr.f32.mxu0 0.0
      %2099 = vmatmul.mubr.f32.gmra.mxu0 %v1892
      %v2100 = vpop.f32.mrf.mxu0
      %v2101 = vadd.f32 0.0, %v2100
      %v2102 = vpop.f32.mrf.mxu0
      %2103 = vmatprep.mubr.f32.mxu0 0.0
      %2104 = vmatmul.mubr.f32.gmra.mxu0 %v1895
      %v2105 = vpop.f32.mrf.mxu0
      %v2106 = vadd.f32 0.0, %v2105
      %v2107 = vpop.f32.mrf.mxu0
      %2108 = vmatprep.mubr.f32.mxu0 0.0
      %2109 = vmatmul.mubr.f32.gmra.mxu0 %v1898
      %v2110 = vpop.f32.mrf.mxu0
      %v2111 = vadd.f32 0.0, %v2110
      %v2112 = vpop.f32.mrf.mxu0
      %2113 = vmatprep.mubr.f32.mxu0 0.0
      %2114 = vmatmul.mubr.f32.gmra.mxu0 %v1901
      %v2115 = vpop.f32.mrf.mxu0
      %v2116 = vadd.f32 0.0, %v2115
      %v2117 = vpop.f32.mrf.mxu0
      %2118 = vmatprep.mubr.f32.mxu0 0.0
      %2119 = vmatmul.mubr.f32.gmra.mxu0 %v1904
      %v2120 = vpop.f32.mrf.mxu0
      %v2121 = vadd.f32 0.0, %v2120
      %v2122 = vpop.f32.mrf.mxu0
      %2123 = vmatprep.mubr.f32.mxu0 0.0
      %2124 = vmatmul.mubr.f32.gmra.mxu0 %v1907
      %v2125 = vpop.f32.mrf.mxu0
      %v2126 = vadd.f32 0.0, %v2125
      %v2127 = vpop.f32.mrf.mxu0
      %2128 = vmatprep.mubr.f32.mxu0 0.0
      %2129 = vmatmul.mubr.f32.gmra.mxu0 %v1910
      %v2130 = vpop.f32.mrf.mxu0
      %v2131 = vadd.f32 0.0, %v2130
      %v2132 = vpop.f32.mrf.mxu0
      %2133 = vmatprep.mubr.f32.mxu0 0.0
      %2134 = vmatmul.mubr.f32.gmra.mxu0 %v1913
      %v2135 = vpop.f32.mrf.mxu0
      %v2136 = vadd.f32 0.0, %v2135
      %v2137 = vpop.f32.mrf.mxu0
      %2138 = vmatprep.mubr.f32.mxu0 0.0
      %2139 = vmatmul.mubr.f32.gmra.mxu0 %v1916
      %v2140 = vpop.f32.mrf.mxu0
      %v2141 = vadd.f32 0.0, %v2140
      %v2142 = vpop.f32.mrf.mxu0
      %2143 = vmatprep.mubr.f32.mxu0 0.0
      %2144 = vmatmul.mubr.f32.gmra.mxu0 %v1919
      %v2145 = vpop.f32.mrf.mxu0
      %v2146 = vadd.f32 0.0, %v2145
      %v2147 = vpop.f32.mrf.mxu0
      %2148 = vdwg.mxu0
      %v2149 = vadd.f32 %v1759, %v1991
      %v2150 = vadd.f32 %v1760, %v1996
      %v2151 = vadd.f32 %v1761, %v2001
      %v2152 = vadd.f32 %v1762, %v2006
      %v2153 = vadd.f32 %v1763, %v2011
      %v2154 = vadd.f32 %v1764, %v2016
      %v2155 = vadd.f32 %v1765, %v2021
      %v2156 = vadd.f32 %v1766, %v2026
      %v2157 = vadd.f32 %v1767, %v2031
      %v2158 = vadd.f32 %v1768, %v2036
      %v2159 = vadd.f32 %v1769, %v2041
      %v2160 = vadd.f32 %v1770, %v2046
      %v2161 = vadd.f32 %v1771, %v2051
      %v2162 = vadd.f32 %v1772, %v2056
      %v2163 = vadd.f32 %v1773, %v2061
      %v2164 = vadd.f32 %v1774, %v2066
      %v2165 = vadd.f32 %v1775, %v2071
      %v2166 = vadd.f32 %v1776, %v2076
      %v2167 = vadd.f32 %v1777, %v2081
      %v2168 = vadd.f32 %v1778, %v2086
      %v2169 = vadd.f32 %v1779, %v2091
      %v2170 = vadd.f32 %v1780, %v2096
      %v2171 = vadd.f32 %v1781, %v2101
      %v2172 = vadd.f32 %v1782, %v2106
      %v2173 = vadd.f32 %v1783, %v2111
      %v2174 = vadd.f32 %v1784, %v2116
      %v2175 = vadd.f32 %v1785, %v2121
      %v2176 = vadd.f32 %v1786, %v2126
      %v2177 = vadd.f32 %v1787, %v2131
      %v2178 = vadd.f32 %v1788, %v2136
      %v2179 = vadd.f32 %v1789, %v2141
      %v2180 = vadd.f32 %v1790, %v2146
      %v2181 = vld [vmem:[%s1400 + $0x2] sm:$0xff]
      %v2182 = vld [vmem:[%s1400 + $0xa] sm:$0xff]
      %v2183 = vld [vmem:[%s1400 + $0x1a] sm:$0xff]
      %v2184 = vld [vmem:[%s1400 + $0x22] sm:$0xff]
      %v2185 = vld [vmem:[%s1400 + $0x32] sm:$0xff]
      %v2186 = vld [vmem:[%s1400 + $0x3a] sm:$0xff]
      %v2187 = vld [vmem:[%s1400 + $0x4a] sm:$0xff]
      %v2188 = vld [vmem:[%s1400 + $0x52] sm:$0xff]
      %v2189 = vld [vmem:[%s1400 + $0x62] sm:$0xff]
      %v2190 = vld [vmem:[%s1400 + $0x6a] sm:$0xff]
      %v2191 = vld [vmem:[%s1400 + $0x7a] sm:$0xff]
      %v2192 = vld [vmem:[%s1400 + $0x82] sm:$0xff]
      %v2193 = vld [vmem:[%s1400 + $0x92] sm:$0xff]
      %v2194 = vld [vmem:[%s1400 + $0x9a] sm:$0xff]
      %v2195 = vld [vmem:[%s1400 + $0xaa] sm:$0xff]
      %v2196 = vld [vmem:[%s1400 + $0xb2] sm:$0xff]
      %v2197 = vld [vmem:[%s1400 + $0xc2] sm:$0xff]
      %v2198 = vld [vmem:[%s1400 + $0xca] sm:$0xff]
      %v2199 = vld [vmem:[%s1400 + $0xda] sm:$0xff]
      %v2200 = vld [vmem:[%s1400 + $0xe2] sm:$0xff]
      %v2201 = vld [vmem:[%s1400 + $0xf2] sm:$0xff]
      %v2202 = vld [vmem:[%s1400 + $0xfa] sm:$0xff]
      %v2203 = vld [vmem:[%s1400 + $0x10a] sm:$0xff]
      %v2204 = vld [vmem:[%s1400 + $0x112] sm:$0xff]
      %v2205 = vld [vmem:[%s1400 + $0x122] sm:$0xff]
      %v2206 = vld [vmem:[%s1400 + $0x12a] sm:$0xff]
      %v2207 = vld [vmem:[%s1400 + $0x13a] sm:$0xff]
      %v2208 = vld [vmem:[%s1400 + $0x142] sm:$0xff]
      %v2209 = vld [vmem:[%s1400 + $0x152] sm:$0xff]
      %v2210 = vld [vmem:[%s1400 + $0x15a] sm:$0xff]
      %v2211 = vld [vmem:[%s1400 + $0x16a] sm:$0xff]
      %v2212 = vld [vmem:[%s1400 + $0x172] sm:$0xff]
      %s2213 = scalar_lea.vmem %s210, 20
      %v2214 = vld [vmem:[%s2213] sm:$0xf]
      %v2216 = vsel %vm262, %v2181, 0
      %v2219 = vsel %vm262, %v2182, 0
      %v2222 = vsel %vm262, %v2183, 0
      %v2225 = vsel %vm262, %v2184, 0
      %v2228 = vsel %vm262, %v2185, 0
      %v2231 = vsel %vm262, %v2186, 0
      %v2234 = vsel %vm262, %v2187, 0
      %v2237 = vsel %vm262, %v2188, 0
      %v2240 = vsel %vm262, %v2189, 0
      %v2243 = vsel %vm262, %v2190, 0
      %v2246 = vsel %vm262, %v2191, 0
      %v2249 = vsel %vm262, %v2192, 0
      %v2252 = vsel %vm262, %v2193, 0
      %v2255 = vsel %vm262, %v2194, 0
      %v2258 = vsel %vm262, %v2195, 0
      %v2261 = vsel %vm262, %v2196, 0
      %v2264 = vsel %vm262, %v2197, 0
      %v2267 = vsel %vm262, %v2198, 0
      %v2270 = vsel %vm262, %v2199, 0
      %v2273 = vsel %vm262, %v2200, 0
      %v2276 = vsel %vm262, %v2201, 0
      %v2279 = vsel %vm262, %v2202, 0
      %v2282 = vsel %vm262, %v2203, 0
      %v2285 = vsel %vm262, %v2204, 0
      %v2288 = vsel %vm262, %v2205, 0
      %v2291 = vsel %vm262, %v2206, 0
      %v2294 = vsel %vm262, %v2207, 0
      %v2297 = vsel %vm262, %v2208, 0
      %v2300 = vsel %vm262, %v2209, 0
      %v2303 = vsel %vm262, %v2210, 0
      %v2306 = vsel %vm262, %v2211, 0
      %v2309 = vsel %vm262, %v2212, 0
      %v2312 = vsel %vm359, %v2214, 0
      %2314 = vmatprep.subr.mxu0 0.0
      %2315 = vmatpush1.msra.mxu0 0.0
      %2316 = vmatprep.subr.mxu0 0.0
      %2317 = vmatpush1.msra.mxu0 0.0
      %2318 = vmatprep.subr.mxu0 0.0
      %2319 = vmatpush1.msra.mxu0 0.0
      %2320 = vmatprep.subr.mxu0 0.0
      %2321 = vmatpush1.msra.mxu0 0.0
      %2322 = vmatprep.subr.mxu0 0.0
      %2323 = vmatpush1.msra.mxu0 0.0
      %2324 = vmatprep.subr.mxu0 0.0
      %2325 = vmatpush1.msra.mxu0 0.0
      %2326 = vmatprep.subr.mxu0 0.0
      %2327 = vmatpush1.msra.mxu0 0.0
      %2328 = vmatprep.subr.mxu0 0.0
      %2329 = vmatpush1.msra.mxu0 0.0
      %2330 = vmatprep.subr.mxu0 0.0
      %2331 = vmatpush1.msra.mxu0 0.0
      %2332 = vmatprep.subr.mxu0 0.0
      %2333 = vmatpush1.msra.mxu0 0.0
      %2334 = vmatprep.subr.mxu0 0.0
      %2335 = vmatpush1.msra.mxu0 0.0
      %2336 = vmatprep.subr.mxu0 0.0
      %2337 = vmatpush1.msra.mxu0 0.0
      %2338 = vmatprep.subr.mxu0 0.0
      %2339 = vmatpush1.msra.mxu0 0.0
      %2340 = vmatprep.subr.mxu0 0.0
      %2341 = vmatpush1.msra.mxu0 0.0
      %2342 = vmatprep.subr.mxu0 0.0
      %2343 = vmatpush1.msra.mxu0 0.0
      %2344 = vmatprep.subr.mxu0 0.0
      %2345 = vmatpush1.msra.mxu0 %v2312
      %2346 = vmatprep.subr.mxu0 0.0
      %2347 = vmatpush2.msra.mxu0 0.0
      %2348 = vmatprep.subr.mxu0 0.0
      %2349 = vmatpush2.msra.mxu0 0.0
      %2350 = vmatprep.subr.mxu0 0.0
      %2351 = vmatpush2.msra.mxu0 0.0
      %2352 = vmatprep.subr.mxu0 0.0
      %2353 = vmatpush2.msra.mxu0 0.0
      %2354 = vmatprep.subr.mxu0 0.0
      %2355 = vmatpush2.msra.mxu0 0.0
      %2356 = vmatprep.subr.mxu0 0.0
      %2357 = vmatpush2.msra.mxu0 0.0
      %2358 = vmatprep.subr.mxu0 0.0
      %2359 = vmatpush2.msra.mxu0 0.0
      %2360 = vmatprep.subr.mxu0 0.0
      %2361 = vmatpush2.msra.mxu0 0.0
      %2362 = vmatprep.subr.mxu0 0.0
      %2363 = vmatpush2.msra.mxu0 0.0
      %2364 = vmatprep.subr.mxu0 0.0
      %2365 = vmatpush2.msra.mxu0 0.0
      %2366 = vmatprep.subr.mxu0 0.0
      %2367 = vmatpush2.msra.mxu0 0.0
      %2368 = vmatprep.subr.mxu0 0.0
      %2369 = vmatpush2.msra.mxu0 0.0
      %2370 = vmatprep.subr.mxu0 0.0
      %2371 = vmatpush2.msra.mxu0 0.0
      %2372 = vmatprep.subr.mxu0 0.0
      %2373 = vmatpush2.msra.mxu0 0.0
      %2374 = vmatprep.subr.mxu0 0.0
      %2375 = vmatpush2.msra.mxu0 0.0
      %2376 = vmatprep.subr.mxu0 0.0
      %2377 = vmatpush2.msra.mxu0 0.0
      %2378 = vmatprep.mubr.f32.mxu0 0.0
      %2379 = vmatmul.mubr.f32.gmra.mxu0 %v2216
      %v2380 = vpop.f32.mrf.mxu0
      %v2381 = vadd.f32 0.0, %v2380
      %v2382 = vpop.f32.mrf.mxu0
      %2383 = vmatprep.mubr.f32.mxu0 0.0
      %2384 = vmatmul.mubr.f32.gmra.mxu0 %v2219
      %v2385 = vpop.f32.mrf.mxu0
      %v2386 = vadd.f32 0.0, %v2385
      %v2387 = vpop.f32.mrf.mxu0
      %2388 = vmatprep.mubr.f32.mxu0 0.0
      %2389 = vmatmul.mubr.f32.gmra.mxu0 %v2222
      %v2390 = vpop.f32.mrf.mxu0
      %v2391 = vadd.f32 0.0, %v2390
      %v2392 = vpop.f32.mrf.mxu0
      %2393 = vmatprep.mubr.f32.mxu0 0.0
      %2394 = vmatmul.mubr.f32.gmra.mxu0 %v2225
      %v2395 = vpop.f32.mrf.mxu0
      %v2396 = vadd.f32 0.0, %v2395
      %v2397 = vpop.f32.mrf.mxu0
      %2398 = vmatprep.mubr.f32.mxu0 0.0
      %2399 = vmatmul.mubr.f32.gmra.mxu0 %v2228
      %v2400 = vpop.f32.mrf.mxu0
      %v2401 = vadd.f32 0.0, %v2400
      %v2402 = vpop.f32.mrf.mxu0
      %2403 = vmatprep.mubr.f32.mxu0 0.0
      %2404 = vmatmul.mubr.f32.gmra.mxu0 %v2231
      %v2405 = vpop.f32.mrf.mxu0
      %v2406 = vadd.f32 0.0, %v2405
      %v2407 = vpop.f32.mrf.mxu0
      %2408 = vmatprep.mubr.f32.mxu0 0.0
      %2409 = vmatmul.mubr.f32.gmra.mxu0 %v2234
      %v2410 = vpop.f32.mrf.mxu0
      %v2411 = vadd.f32 0.0, %v2410
      %v2412 = vpop.f32.mrf.mxu0
      %2413 = vmatprep.mubr.f32.mxu0 0.0
      %2414 = vmatmul.mubr.f32.gmra.mxu0 %v2237
      %v2415 = vpop.f32.mrf.mxu0
      %v2416 = vadd.f32 0.0, %v2415
      %v2417 = vpop.f32.mrf.mxu0
      %2418 = vmatprep.mubr.f32.mxu0 0.0
      %2419 = vmatmul.mubr.f32.gmra.mxu0 %v2240
      %v2420 = vpop.f32.mrf.mxu0
      %v2421 = vadd.f32 0.0, %v2420
      %v2422 = vpop.f32.mrf.mxu0
      %2423 = vmatprep.mubr.f32.mxu0 0.0
      %2424 = vmatmul.mubr.f32.gmra.mxu0 %v2243
      %v2425 = vpop.f32.mrf.mxu0
      %v2426 = vadd.f32 0.0, %v2425
      %v2427 = vpop.f32.mrf.mxu0
      %2428 = vmatprep.mubr.f32.mxu0 0.0
      %2429 = vmatmul.mubr.f32.gmra.mxu0 %v2246
      %v2430 = vpop.f32.mrf.mxu0
      %v2431 = vadd.f32 0.0, %v2430
      %v2432 = vpop.f32.mrf.mxu0
      %2433 = vmatprep.mubr.f32.mxu0 0.0
      %2434 = vmatmul.mubr.f32.gmra.mxu0 %v2249
      %v2435 = vpop.f32.mrf.mxu0
      %v2436 = vadd.f32 0.0, %v2435
      %v2437 = vpop.f32.mrf.mxu0
      %2438 = vmatprep.mubr.f32.mxu0 0.0
      %2439 = vmatmul.mubr.f32.gmra.mxu0 %v2252
      %v2440 = vpop.f32.mrf.mxu0
      %v2441 = vadd.f32 0.0, %v2440
      %v2442 = vpop.f32.mrf.mxu0
      %2443 = vmatprep.mubr.f32.mxu0 0.0
      %2444 = vmatmul.mubr.f32.gmra.mxu0 %v2255
      %v2445 = vpop.f32.mrf.mxu0
      %v2446 = vadd.f32 0.0, %v2445
      %v2447 = vpop.f32.mrf.mxu0
      %2448 = vmatprep.mubr.f32.mxu0 0.0
      %2449 = vmatmul.mubr.f32.gmra.mxu0 %v2258
      %v2450 = vpop.f32.mrf.mxu0
      %v2451 = vadd.f32 0.0, %v2450
      %v2452 = vpop.f32.mrf.mxu0
      %2453 = vmatprep.mubr.f32.mxu0 0.0
      %2454 = vmatmul.mubr.f32.gmra.mxu0 %v2261
      %v2455 = vpop.f32.mrf.mxu0
      %v2456 = vadd.f32 0.0, %v2455
      %v2457 = vpop.f32.mrf.mxu0
      %2458 = vmatprep.mubr.f32.mxu0 0.0
      %2459 = vmatmul.mubr.f32.gmra.mxu0 %v2264
      %v2460 = vpop.f32.mrf.mxu0
      %v2461 = vadd.f32 0.0, %v2460
      %v2462 = vpop.f32.mrf.mxu0
      %2463 = vmatprep.mubr.f32.mxu0 0.0
      %2464 = vmatmul.mubr.f32.gmra.mxu0 %v2267
      %v2465 = vpop.f32.mrf.mxu0
      %v2466 = vadd.f32 0.0, %v2465
      %v2467 = vpop.f32.mrf.mxu0
      %2468 = vmatprep.mubr.f32.mxu0 0.0
      %2469 = vmatmul.mubr.f32.gmra.mxu0 %v2270
      %v2470 = vpop.f32.mrf.mxu0
      %v2471 = vadd.f32 0.0, %v2470
      %v2472 = vpop.f32.mrf.mxu0
      %2473 = vmatprep.mubr.f32.mxu0 0.0
      %2474 = vmatmul.mubr.f32.gmra.mxu0 %v2273
      %v2475 = vpop.f32.mrf.mxu0
      %v2476 = vadd.f32 0.0, %v2475
      %v2477 = vpop.f32.mrf.mxu0
      %2478 = vmatprep.mubr.f32.mxu0 0.0
      %2479 = vmatmul.mubr.f32.gmra.mxu0 %v2276
      %v2480 = vpop.f32.mrf.mxu0
      %v2481 = vadd.f32 0.0, %v2480
      %v2482 = vpop.f32.mrf.mxu0
      %2483 = vmatprep.mubr.f32.mxu0 0.0
      %2484 = vmatmul.mubr.f32.gmra.mxu0 %v2279
      %v2485 = vpop.f32.mrf.mxu0
      %v2486 = vadd.f32 0.0, %v2485
      %v2487 = vpop.f32.mrf.mxu0
      %2488 = vmatprep.mubr.f32.mxu0 0.0
      %2489 = vmatmul.mubr.f32.gmra.mxu0 %v2282
      %v2490 = vpop.f32.mrf.mxu0
      %v2491 = vadd.f32 0.0, %v2490
      %v2492 = vpop.f32.mrf.mxu0
      %2493 = vmatprep.mubr.f32.mxu0 0.0
      %2494 = vmatmul.mubr.f32.gmra.mxu0 %v2285
      %v2495 = vpop.f32.mrf.mxu0
      %v2496 = vadd.f32 0.0, %v2495
      %v2497 = vpop.f32.mrf.mxu0
      %2498 = vmatprep.mubr.f32.mxu0 0.0
      %2499 = vmatmul.mubr.f32.gmra.mxu0 %v2288
      %v2500 = vpop.f32.mrf.mxu0
      %v2501 = vadd.f32 0.0, %v2500
      %v2502 = vpop.f32.mrf.mxu0
      %2503 = vmatprep.mubr.f32.mxu0 0.0
      %2504 = vmatmul.mubr.f32.gmra.mxu0 %v2291
      %v2505 = vpop.f32.mrf.mxu0
      %v2506 = vadd.f32 0.0, %v2505
      %v2507 = vpop.f32.mrf.mxu0
      %2508 = vmatprep.mubr.f32.mxu0 0.0
      %2509 = vmatmul.mubr.f32.gmra.mxu0 %v2294
      %v2510 = vpop.f32.mrf.mxu0
      %v2511 = vadd.f32 0.0, %v2510
      %v2512 = vpop.f32.mrf.mxu0
      %2513 = vmatprep.mubr.f32.mxu0 0.0
      %2514 = vmatmul.mubr.f32.gmra.mxu0 %v2297
      %v2515 = vpop.f32.mrf.mxu0
      %v2516 = vadd.f32 0.0, %v2515
      %v2517 = vpop.f32.mrf.mxu0
      %2518 = vmatprep.mubr.f32.mxu0 0.0
      %2519 = vmatmul.mubr.f32.gmra.mxu0 %v2300
      %v2520 = vpop.f32.mrf.mxu0
      %v2521 = vadd.f32 0.0, %v2520
      %v2522 = vpop.f32.mrf.mxu0
      %2523 = vmatprep.mubr.f32.mxu0 0.0
      %2524 = vmatmul.mubr.f32.gmra.mxu0 %v2303
      %v2525 = vpop.f32.mrf.mxu0
      %v2526 = vadd.f32 0.0, %v2525
      %v2527 = vpop.f32.mrf.mxu0
      %2528 = vmatprep.mubr.f32.mxu0 0.0
      %2529 = vmatmul.mubr.f32.gmra.mxu0 %v2306
      %v2530 = vpop.f32.mrf.mxu0
      %v2531 = vadd.f32 0.0, %v2530
      %v2532 = vpop.f32.mrf.mxu0
      %2533 = vmatprep.mubr.f32.mxu0 0.0
      %2534 = vmatmul.mubr.f32.gmra.mxu0 %v2309
      %v2535 = vpop.f32.mrf.mxu0
      %v2536 = vadd.f32 0.0, %v2535
      %v2537 = vpop.f32.mrf.mxu0
      %2538 = vdwg.mxu0
      %v2539 = vadd.f32 %v2149, %v2381
      %v2540 = vadd.f32 %v2150, %v2386
      %v2541 = vadd.f32 %v2151, %v2391
      %v2542 = vadd.f32 %v2152, %v2396
      %v2543 = vadd.f32 %v2153, %v2401
      %v2544 = vadd.f32 %v2154, %v2406
      %v2545 = vadd.f32 %v2155, %v2411
      %v2546 = vadd.f32 %v2156, %v2416
      %v2547 = vadd.f32 %v2157, %v2421
      %v2548 = vadd.f32 %v2158, %v2426
      %v2549 = vadd.f32 %v2159, %v2431
      %v2550 = vadd.f32 %v2160, %v2436
      %v2551 = vadd.f32 %v2161, %v2441
      %v2552 = vadd.f32 %v2162, %v2446
      %v2553 = vadd.f32 %v2163, %v2451
      %v2554 = vadd.f32 %v2164, %v2456
      %v2555 = vadd.f32 %v2165, %v2461
      %v2556 = vadd.f32 %v2166, %v2466
      %v2557 = vadd.f32 %v2167, %v2471
      %v2558 = vadd.f32 %v2168, %v2476
      %v2559 = vadd.f32 %v2169, %v2481
      %v2560 = vadd.f32 %v2170, %v2486
      %v2561 = vadd.f32 %v2171, %v2491
      %v2562 = vadd.f32 %v2172, %v2496
      %v2563 = vadd.f32 %v2173, %v2501
      %v2564 = vadd.f32 %v2174, %v2506
      %v2565 = vadd.f32 %v2175, %v2511
      %v2566 = vadd.f32 %v2176, %v2516
      %v2567 = vadd.f32 %v2177, %v2521
      %v2568 = vadd.f32 %v2178, %v2526
      %v2569 = vadd.f32 %v2179, %v2531
      %v2570 = vadd.f32 %v2180, %v2536
      %s2571 = scalar_lea.vmem %s206, 48
      %v2572 = vld [vmem:[%s2571] sm:$0xff]
      %v2573 = vld [vmem:[%s2571 + $0x8] sm:$0xff]
      %v2574 = vld [vmem:[%s2571 + $0x18] sm:$0xff]
      %v2575 = vld [vmem:[%s2571 + $0x20] sm:$0xff]
      %v2576 = vld [vmem:[%s2571 + $0x30] sm:$0xff]
      %v2577 = vld [vmem:[%s2571 + $0x38] sm:$0xff]
      %v2578 = vld [vmem:[%s2571 + $0x48] sm:$0xff]
      %v2579 = vld [vmem:[%s2571 + $0x50] sm:$0xff]
      %v2580 = vld [vmem:[%s2571 + $0x60] sm:$0xff]
      %v2581 = vld [vmem:[%s2571 + $0x68] sm:$0xff]
      %v2582 = vld [vmem:[%s2571 + $0x78] sm:$0xff]
      %v2583 = vld [vmem:[%s2571 + $0x80] sm:$0xff]
      %v2584 = vld [vmem:[%s2571 + $0x90] sm:$0xff]
      %v2585 = vld [vmem:[%s2571 + $0x98] sm:$0xff]
      %v2586 = vld [vmem:[%s2571 + $0xa8] sm:$0xff]
      %v2587 = vld [vmem:[%s2571 + $0xb0] sm:$0xff]
      %v2588 = vld [vmem:[%s2571 + $0xc0] sm:$0xff]
      %v2589 = vld [vmem:[%s2571 + $0xc8] sm:$0xff]
      %v2590 = vld [vmem:[%s2571 + $0xd8] sm:$0xff]
      %v2591 = vld [vmem:[%s2571 + $0xe0] sm:$0xff]
      %v2592 = vld [vmem:[%s2571 + $0xf0] sm:$0xff]
      %v2593 = vld [vmem:[%s2571 + $0xf8] sm:$0xff]
      %v2594 = vld [vmem:[%s2571 + $0x108] sm:$0xff]
      %v2595 = vld [vmem:[%s2571 + $0x110] sm:$0xff]
      %v2596 = vld [vmem:[%s2571 + $0x120] sm:$0xff]
      %v2597 = vld [vmem:[%s2571 + $0x128] sm:$0xff]
      %v2598 = vld [vmem:[%s2571 + $0x138] sm:$0xff]
      %v2599 = vld [vmem:[%s2571 + $0x140] sm:$0xff]
      %v2600 = vld [vmem:[%s2571 + $0x150] sm:$0xff]
      %v2601 = vld [vmem:[%s2571 + $0x158] sm:$0xff]
      %v2602 = vld [vmem:[%s2571 + $0x168] sm:$0xff]
      %v2603 = vld [vmem:[%s2571 + $0x170] sm:$0xff]
      %s2604 = scalar_lea.vmem %s210, 24
      %v2605 = vld [vmem:[%s2604] sm:$0xf]
      %v2607 = vsel %vm262, %v2572, 0
      %v2610 = vsel %vm262, %v2573, 0
      %v2613 = vsel %vm262, %v2574, 0
      %v2616 = vsel %vm262, %v2575, 0
      %v2619 = vsel %vm262, %v2576, 0
      %v2622 = vsel %vm262, %v2577, 0
      %v2625 = vsel %vm262, %v2578, 0
      %v2628 = vsel %vm262, %v2579, 0
      %v2631 = vsel %vm262, %v2580, 0
      %v2634 = vsel %vm262, %v2581, 0
      %v2637 = vsel %vm262, %v2582, 0
      %v2640 = vsel %vm262, %v2583, 0
      %v2643 = vsel %vm262, %v2584, 0
      %v2646 = vsel %vm262, %v2585, 0
      %v2649 = vsel %vm262, %v2586, 0
      %v2652 = vsel %vm262, %v2587, 0
      %v2655 = vsel %vm262, %v2588, 0
      %v2658 = vsel %vm262, %v2589, 0
      %v2661 = vsel %vm262, %v2590, 0
      %v2664 = vsel %vm262, %v2591, 0
      %v2667 = vsel %vm262, %v2592, 0
      %v2670 = vsel %vm262, %v2593, 0
      %v2673 = vsel %vm262, %v2594, 0
      %v2676 = vsel %vm262, %v2595, 0
      %v2679 = vsel %vm262, %v2596, 0
      %v2682 = vsel %vm262, %v2597, 0
      %v2685 = vsel %vm262, %v2598, 0
      %v2688 = vsel %vm262, %v2599, 0
      %v2691 = vsel %vm262, %v2600, 0
      %v2694 = vsel %vm262, %v2601, 0
      %v2697 = vsel %vm262, %v2602, 0
      %v2700 = vsel %vm262, %v2603, 0
      %v2703 = vsel %vm359, %v2605, 0
      %2705 = vmatprep.subr.mxu0 0.0
      %2706 = vmatpush1.msra.mxu0 0.0
      %2707 = vmatprep.subr.mxu0 0.0
      %2708 = vmatpush1.msra.mxu0 0.0
      %2709 = vmatprep.subr.mxu0 0.0
      %2710 = vmatpush1.msra.mxu0 0.0
      %2711 = vmatprep.subr.mxu0 0.0
      %2712 = vmatpush1.msra.mxu0 0.0
      %2713 = vmatprep.subr.mxu0 0.0
      %2714 = vmatpush1.msra.mxu0 0.0
      %2715 = vmatprep.subr.mxu0 0.0
      %2716 = vmatpush1.msra.mxu0 0.0
      %2717 = vmatprep.subr.mxu0 0.0
      %2718 = vmatpush1.msra.mxu0 0.0
      %2719 = vmatprep.subr.mxu0 0.0
      %2720 = vmatpush1.msra.mxu0 0.0
      %2721 = vmatprep.subr.mxu0 0.0
      %2722 = vmatpush1.msra.mxu0 0.0
      %2723 = vmatprep.subr.mxu0 0.0
      %2724 = vmatpush1.msra.mxu0 0.0
      %2725 = vmatprep.subr.mxu0 0.0
      %2726 = vmatpush1.msra.mxu0 0.0
      %2727 = vmatprep.subr.mxu0 0.0
      %2728 = vmatpush1.msra.mxu0 0.0
      %2729 = vmatprep.subr.mxu0 0.0
      %2730 = vmatpush1.msra.mxu0 0.0
      %2731 = vmatprep.subr.mxu0 0.0
      %2732 = vmatpush1.msra.mxu0 0.0
      %2733 = vmatprep.subr.mxu0 0.0
      %2734 = vmatpush1.msra.mxu0 0.0
      %2735 = vmatprep.subr.mxu0 0.0
      %2736 = vmatpush1.msra.mxu0 %v2703
      %2737 = vmatprep.subr.mxu0 0.0
      %2738 = vmatpush2.msra.mxu0 0.0
      %2739 = vmatprep.subr.mxu0 0.0
      %2740 = vmatpush2.msra.mxu0 0.0
      %2741 = vmatprep.subr.mxu0 0.0
      %2742 = vmatpush2.msra.mxu0 0.0
      %2743 = vmatprep.subr.mxu0 0.0
      %2744 = vmatpush2.msra.mxu0 0.0
      %2745 = vmatprep.subr.mxu0 0.0
      %2746 = vmatpush2.msra.mxu0 0.0
      %2747 = vmatprep.subr.mxu0 0.0
      %2748 = vmatpush2.msra.mxu0 0.0
      %2749 = vmatprep.subr.mxu0 0.0
      %2750 = vmatpush2.msra.mxu0 0.0
      %2751 = vmatprep.subr.mxu0 0.0
      %2752 = vmatpush2.msra.mxu0 0.0
      %2753 = vmatprep.subr.mxu0 0.0
      %2754 = vmatpush2.msra.mxu0 0.0
      %2755 = vmatprep.subr.mxu0 0.0
      %2756 = vmatpush2.msra.mxu0 0.0
      %2757 = vmatprep.subr.mxu0 0.0
      %2758 = vmatpush2.msra.mxu0 0.0
      %2759 = vmatprep.subr.mxu0 0.0
      %2760 = vmatpush2.msra.mxu0 0.0
      %2761 = vmatprep.subr.mxu0 0.0
      %2762 = vmatpush2.msra.mxu0 0.0
      %2763 = vmatprep.subr.mxu0 0.0
      %2764 = vmatpush2.msra.mxu0 0.0
      %2765 = vmatprep.subr.mxu0 0.0
      %2766 = vmatpush2.msra.mxu0 0.0
      %2767 = vmatprep.subr.mxu0 0.0
      %2768 = vmatpush2.msra.mxu0 0.0
      %2769 = vmatprep.mubr.f32.mxu0 0.0
      %2770 = vmatmul.mubr.f32.gmra.mxu0 %v2607
      %v2771 = vpop.f32.mrf.mxu0
      %v2772 = vadd.f32 0.0, %v2771
      %v2773 = vpop.f32.mrf.mxu0
      %2774 = vmatprep.mubr.f32.mxu0 0.0
      %2775 = vmatmul.mubr.f32.gmra.mxu0 %v2610
      %v2776 = vpop.f32.mrf.mxu0
      %v2777 = vadd.f32 0.0, %v2776
      %v2778 = vpop.f32.mrf.mxu0
      %2779 = vmatprep.mubr.f32.mxu0 0.0
      %2780 = vmatmul.mubr.f32.gmra.mxu0 %v2613
      %v2781 = vpop.f32.mrf.mxu0
      %v2782 = vadd.f32 0.0, %v2781
      %v2783 = vpop.f32.mrf.mxu0
      %2784 = vmatprep.mubr.f32.mxu0 0.0
      %2785 = vmatmul.mubr.f32.gmra.mxu0 %v2616
      %v2786 = vpop.f32.mrf.mxu0
      %v2787 = vadd.f32 0.0, %v2786
      %v2788 = vpop.f32.mrf.mxu0
      %2789 = vmatprep.mubr.f32.mxu0 0.0
      %2790 = vmatmul.mubr.f32.gmra.mxu0 %v2619
      %v2791 = vpop.f32.mrf.mxu0
      %v2792 = vadd.f32 0.0, %v2791
      %v2793 = vpop.f32.mrf.mxu0
      %2794 = vmatprep.mubr.f32.mxu0 0.0
      %2795 = vmatmul.mubr.f32.gmra.mxu0 %v2622
      %v2796 = vpop.f32.mrf.mxu0
      %v2797 = vadd.f32 0.0, %v2796
      %v2798 = vpop.f32.mrf.mxu0
      %2799 = vmatprep.mubr.f32.mxu0 0.0
      %2800 = vmatmul.mubr.f32.gmra.mxu0 %v2625
      %v2801 = vpop.f32.mrf.mxu0
      %v2802 = vadd.f32 0.0, %v2801
      %v2803 = vpop.f32.mrf.mxu0
      %2804 = vmatprep.mubr.f32.mxu0 0.0
      %2805 = vmatmul.mubr.f32.gmra.mxu0 %v2628
      %v2806 = vpop.f32.mrf.mxu0
      %v2807 = vadd.f32 0.0, %v2806
      %v2808 = vpop.f32.mrf.mxu0
      %2809 = vmatprep.mubr.f32.mxu0 0.0
      %2810 = vmatmul.mubr.f32.gmra.mxu0 %v2631
      %v2811 = vpop.f32.mrf.mxu0
      %v2812 = vadd.f32 0.0, %v2811
      %v2813 = vpop.f32.mrf.mxu0
      %2814 = vmatprep.mubr.f32.mxu0 0.0
      %2815 = vmatmul.mubr.f32.gmra.mxu0 %v2634
      %v2816 = vpop.f32.mrf.mxu0
      %v2817 = vadd.f32 0.0, %v2816
      %v2818 = vpop.f32.mrf.mxu0
      %2819 = vmatprep.mubr.f32.mxu0 0.0
      %2820 = vmatmul.mubr.f32.gmra.mxu0 %v2637
      %v2821 = vpop.f32.mrf.mxu0
      %v2822 = vadd.f32 0.0, %v2821
      %v2823 = vpop.f32.mrf.mxu0
      %2824 = vmatprep.mubr.f32.mxu0 0.0
      %2825 = vmatmul.mubr.f32.gmra.mxu0 %v2640
      %v2826 = vpop.f32.mrf.mxu0
      %v2827 = vadd.f32 0.0, %v2826
      %v2828 = vpop.f32.mrf.mxu0
      %2829 = vmatprep.mubr.f32.mxu0 0.0
      %2830 = vmatmul.mubr.f32.gmra.mxu0 %v2643
      %v2831 = vpop.f32.mrf.mxu0
      %v2832 = vadd.f32 0.0, %v2831
      %v2833 = vpop.f32.mrf.mxu0
      %2834 = vmatprep.mubr.f32.mxu0 0.0
      %2835 = vmatmul.mubr.f32.gmra.mxu0 %v2646
      %v2836 = vpop.f32.mrf.mxu0
      %v2837 = vadd.f32 0.0, %v2836
      %v2838 = vpop.f32.mrf.mxu0
      %2839 = vmatprep.mubr.f32.mxu0 0.0
      %2840 = vmatmul.mubr.f32.gmra.mxu0 %v2649
      %v2841 = vpop.f32.mrf.mxu0
      %v2842 = vadd.f32 0.0, %v2841
      %v2843 = vpop.f32.mrf.mxu0
      %2844 = vmatprep.mubr.f32.mxu0 0.0
      %2845 = vmatmul.mubr.f32.gmra.mxu0 %v2652
      %v2846 = vpop.f32.mrf.mxu0
      %v2847 = vadd.f32 0.0, %v2846
      %v2848 = vpop.f32.mrf.mxu0
      %2849 = vmatprep.mubr.f32.mxu0 0.0
      %2850 = vmatmul.mubr.f32.gmra.mxu0 %v2655
      %v2851 = vpop.f32.mrf.mxu0
      %v2852 = vadd.f32 0.0, %v2851
      %v2853 = vpop.f32.mrf.mxu0
      %2854 = vmatprep.mubr.f32.mxu0 0.0
      %2855 = vmatmul.mubr.f32.gmra.mxu0 %v2658
      %v2856 = vpop.f32.mrf.mxu0
      %v2857 = vadd.f32 0.0, %v2856
      %v2858 = vpop.f32.mrf.mxu0
      %2859 = vmatprep.mubr.f32.mxu0 0.0
      %2860 = vmatmul.mubr.f32.gmra.mxu0 %v2661
      %v2861 = vpop.f32.mrf.mxu0
      %v2862 = vadd.f32 0.0, %v2861
      %v2863 = vpop.f32.mrf.mxu0
      %2864 = vmatprep.mubr.f32.mxu0 0.0
      %2865 = vmatmul.mubr.f32.gmra.mxu0 %v2664
      %v2866 = vpop.f32.mrf.mxu0
      %v2867 = vadd.f32 0.0, %v2866
      %v2868 = vpop.f32.mrf.mxu0
      %2869 = vmatprep.mubr.f32.mxu0 0.0
      %2870 = vmatmul.mubr.f32.gmra.mxu0 %v2667
      %v2871 = vpop.f32.mrf.mxu0
      %v2872 = vadd.f32 0.0, %v2871
      %v2873 = vpop.f32.mrf.mxu0
      %2874 = vmatprep.mubr.f32.mxu0 0.0
      %2875 = vmatmul.mubr.f32.gmra.mxu0 %v2670
      %v2876 = vpop.f32.mrf.mxu0
      %v2877 = vadd.f32 0.0, %v2876
      %v2878 = vpop.f32.mrf.mxu0
      %2879 = vmatprep.mubr.f32.mxu0 0.0
      %2880 = vmatmul.mubr.f32.gmra.mxu0 %v2673
      %v2881 = vpop.f32.mrf.mxu0
      %v2882 = vadd.f32 0.0, %v2881
      %v2883 = vpop.f32.mrf.mxu0
      %2884 = vmatprep.mubr.f32.mxu0 0.0
      %2885 = vmatmul.mubr.f32.gmra.mxu0 %v2676
      %v2886 = vpop.f32.mrf.mxu0
      %v2887 = vadd.f32 0.0, %v2886
      %v2888 = vpop.f32.mrf.mxu0
      %2889 = vmatprep.mubr.f32.mxu0 0.0
      %2890 = vmatmul.mubr.f32.gmra.mxu0 %v2679
      %v2891 = vpop.f32.mrf.mxu0
      %v2892 = vadd.f32 0.0, %v2891
      %v2893 = vpop.f32.mrf.mxu0
      %2894 = vmatprep.mubr.f32.mxu0 0.0
      %2895 = vmatmul.mubr.f32.gmra.mxu0 %v2682
      %v2896 = vpop.f32.mrf.mxu0
      %v2897 = vadd.f32 0.0, %v2896
      %v2898 = vpop.f32.mrf.mxu0
      %2899 = vmatprep.mubr.f32.mxu0 0.0
      %2900 = vmatmul.mubr.f32.gmra.mxu0 %v2685
      %v2901 = vpop.f32.mrf.mxu0
      %v2902 = vadd.f32 0.0, %v2901
      %v2903 = vpop.f32.mrf.mxu0
      %2904 = vmatprep.mubr.f32.mxu0 0.0
      %2905 = vmatmul.mubr.f32.gmra.mxu0 %v2688
      %v2906 = vpop.f32.mrf.mxu0
      %v2907 = vadd.f32 0.0, %v2906
      %v2908 = vpop.f32.mrf.mxu0
      %2909 = vmatprep.mubr.f32.mxu0 0.0
      %2910 = vmatmul.mubr.f32.gmra.mxu0 %v2691
      %v2911 = vpop.f32.mrf.mxu0
      %v2912 = vadd.f32 0.0, %v2911
      %v2913 = vpop.f32.mrf.mxu0
      %2914 = vmatprep.mubr.f32.mxu0 0.0
      %2915 = vmatmul.mubr.f32.gmra.mxu0 %v2694
      %v2916 = vpop.f32.mrf.mxu0
      %v2917 = vadd.f32 0.0, %v2916
      %v2918 = vpop.f32.mrf.mxu0
      %2919 = vmatprep.mubr.f32.mxu0 0.0
      %2920 = vmatmul.mubr.f32.gmra.mxu0 %v2697
      %v2921 = vpop.f32.mrf.mxu0
      %v2922 = vadd.f32 0.0, %v2921
      %v2923 = vpop.f32.mrf.mxu0
      %2924 = vmatprep.mubr.f32.mxu0 0.0
      %2925 = vmatmul.mubr.f32.gmra.mxu0 %v2700
      %v2926 = vpop.f32.mrf.mxu0
      %v2927 = vadd.f32 0.0, %v2926
      %v2928 = vpop.f32.mrf.mxu0
      %2929 = vdwg.mxu0
      %v2930 = vadd.f32 %v2539, %v2772
      %v2931 = vadd.f32 %v2540, %v2777
      %v2932 = vadd.f32 %v2541, %v2782
      %v2933 = vadd.f32 %v2542, %v2787
      %v2934 = vadd.f32 %v2543, %v2792
      %v2935 = vadd.f32 %v2544, %v2797
      %v2936 = vadd.f32 %v2545, %v2802
      %v2937 = vadd.f32 %v2546, %v2807
      %v2938 = vadd.f32 %v2547, %v2812
      %v2939 = vadd.f32 %v2548, %v2817
      %v2940 = vadd.f32 %v2549, %v2822
      %v2941 = vadd.f32 %v2550, %v2827
      %v2942 = vadd.f32 %v2551, %v2832
      %v2943 = vadd.f32 %v2552, %v2837
      %v2944 = vadd.f32 %v2553, %v2842
      %v2945 = vadd.f32 %v2554, %v2847
      %v2946 = vadd.f32 %v2555, %v2852
      %v2947 = vadd.f32 %v2556, %v2857
      %v2948 = vadd.f32 %v2557, %v2862
      %v2949 = vadd.f32 %v2558, %v2867
      %v2950 = vadd.f32 %v2559, %v2872
      %v2951 = vadd.f32 %v2560, %v2877
      %v2952 = vadd.f32 %v2561, %v2882
      %v2953 = vadd.f32 %v2562, %v2887
      %v2954 = vadd.f32 %v2563, %v2892
      %v2955 = vadd.f32 %v2564, %v2897
      %v2956 = vadd.f32 %v2565, %v2902
      %v2957 = vadd.f32 %v2566, %v2907
      %v2958 = vadd.f32 %v2567, %v2912
      %v2959 = vadd.f32 %v2568, %v2917
      %v2960 = vadd.f32 %v2569, %v2922
      %v2961 = vadd.f32 %v2570, %v2927
      %v2962 = vld [vmem:[%s2571 + $0x1] sm:$0xff]
      %v2963 = vld [vmem:[%s2571 + $0x9] sm:$0xff]
      %v2964 = vld [vmem:[%s2571 + $0x19] sm:$0xff]
      %v2965 = vld [vmem:[%s2571 + $0x21] sm:$0xff]
      %v2966 = vld [vmem:[%s2571 + $0x31] sm:$0xff]
      %v2967 = vld [vmem:[%s2571 + $0x39] sm:$0xff]
      %v2968 = vld [vmem:[%s2571 + $0x49] sm:$0xff]
      %v2969 = vld [vmem:[%s2571 + $0x51] sm:$0xff]
      %v2970 = vld [vmem:[%s2571 + $0x61] sm:$0xff]
      %v2971 = vld [vmem:[%s2571 + $0x69] sm:$0xff]
      %v2972 = vld [vmem:[%s2571 + $0x79] sm:$0xff]
      %v2973 = vld [vmem:[%s2571 + $0x81] sm:$0xff]
      %v2974 = vld [vmem:[%s2571 + $0x91] sm:$0xff]
      %v2975 = vld [vmem:[%s2571 + $0x99] sm:$0xff]
      %v2976 = vld [vmem:[%s2571 + $0xa9] sm:$0xff]
      %v2977 = vld [vmem:[%s2571 + $0xb1] sm:$0xff]
      %v2978 = vld [vmem:[%s2571 + $0xc1] sm:$0xff]
      %v2979 = vld [vmem:[%s2571 + $0xc9] sm:$0xff]
      %v2980 = vld [vmem:[%s2571 + $0xd9] sm:$0xff]
      %v2981 = vld [vmem:[%s2571 + $0xe1] sm:$0xff]
      %v2982 = vld [vmem:[%s2571 + $0xf1] sm:$0xff]
      %v2983 = vld [vmem:[%s2571 + $0xf9] sm:$0xff]
      %v2984 = vld [vmem:[%s2571 + $0x109] sm:$0xff]
      %v2985 = vld [vmem:[%s2571 + $0x111] sm:$0xff]
      %v2986 = vld [vmem:[%s2571 + $0x121] sm:$0xff]
      %v2987 = vld [vmem:[%s2571 + $0x129] sm:$0xff]
      %v2988 = vld [vmem:[%s2571 + $0x139] sm:$0xff]
      %v2989 = vld [vmem:[%s2571 + $0x141] sm:$0xff]
      %v2990 = vld [vmem:[%s2571 + $0x151] sm:$0xff]
      %v2991 = vld [vmem:[%s2571 + $0x159] sm:$0xff]
      %v2992 = vld [vmem:[%s2571 + $0x169] sm:$0xff]
      %v2993 = vld [vmem:[%s2571 + $0x171] sm:$0xff]
      %s2994 = scalar_lea.vmem %s210, 28
      %v2995 = vld [vmem:[%s2994] sm:$0xf]
      %v2997 = vsel %vm262, %v2962, 0
      %v3000 = vsel %vm262, %v2963, 0
      %v3003 = vsel %vm262, %v2964, 0
      %v3006 = vsel %vm262, %v2965, 0
      %v3009 = vsel %vm262, %v2966, 0
      %v3012 = vsel %vm262, %v2967, 0
      %v3015 = vsel %vm262, %v2968, 0
      %v3018 = vsel %vm262, %v2969, 0
      %v3021 = vsel %vm262, %v2970, 0
      %v3024 = vsel %vm262, %v2971, 0
      %v3027 = vsel %vm262, %v2972, 0
      %v3030 = vsel %vm262, %v2973, 0
      %v3033 = vsel %vm262, %v2974, 0
      %v3036 = vsel %vm262, %v2975, 0
      %v3039 = vsel %vm262, %v2976, 0
      %v3042 = vsel %vm262, %v2977, 0
      %v3045 = vsel %vm262, %v2978, 0
      %v3048 = vsel %vm262, %v2979, 0
      %v3051 = vsel %vm262, %v2980, 0
      %v3054 = vsel %vm262, %v2981, 0
      %v3057 = vsel %vm262, %v2982, 0
      %v3060 = vsel %vm262, %v2983, 0
      %v3063 = vsel %vm262, %v2984, 0
      %v3066 = vsel %vm262, %v2985, 0
      %v3069 = vsel %vm262, %v2986, 0
      %v3072 = vsel %vm262, %v2987, 0
      %v3075 = vsel %vm262, %v2988, 0
      %v3078 = vsel %vm262, %v2989, 0
      %v3081 = vsel %vm262, %v2990, 0
      %v3084 = vsel %vm262, %v2991, 0
      %v3087 = vsel %vm262, %v2992, 0
      %v3090 = vsel %vm262, %v2993, 0
      %v3093 = vsel %vm359, %v2995, 0
      %3095 = vmatprep.subr.mxu0 0.0
      %3096 = vmatpush1.msra.mxu0 0.0
      %3097 = vmatprep.subr.mxu0 0.0
      %3098 = vmatpush1.msra.mxu0 0.0
      %3099 = vmatprep.subr.mxu0 0.0
      %3100 = vmatpush1.msra.mxu0 0.0
      %3101 = vmatprep.subr.mxu0 0.0
      %3102 = vmatpush1.msra.mxu0 0.0
      %3103 = vmatprep.subr.mxu0 0.0
      %3104 = vmatpush1.msra.mxu0 0.0
      %3105 = vmatprep.subr.mxu0 0.0
      %3106 = vmatpush1.msra.mxu0 0.0
      %3107 = vmatprep.subr.mxu0 0.0
      %3108 = vmatpush1.msra.mxu0 0.0
      %3109 = vmatprep.subr.mxu0 0.0
      %3110 = vmatpush1.msra.mxu0 0.0
      %3111 = vmatprep.subr.mxu0 0.0
      %3112 = vmatpush1.msra.mxu0 0.0
      %3113 = vmatprep.subr.mxu0 0.0
      %3114 = vmatpush1.msra.mxu0 0.0
      %3115 = vmatprep.subr.mxu0 0.0
      %3116 = vmatpush1.msra.mxu0 0.0
      %3117 = vmatprep.subr.mxu0 0.0
      %3118 = vmatpush1.msra.mxu0 0.0
      %3119 = vmatprep.subr.mxu0 0.0
      %3120 = vmatpush1.msra.mxu0 0.0
      %3121 = vmatprep.subr.mxu0 0.0
      %3122 = vmatpush1.msra.mxu0 0.0
      %3123 = vmatprep.subr.mxu0 0.0
      %3124 = vmatpush1.msra.mxu0 0.0
      %3125 = vmatprep.subr.mxu0 0.0
      %3126 = vmatpush1.msra.mxu0 %v3093
      %3127 = vmatprep.subr.mxu0 0.0
      %3128 = vmatpush2.msra.mxu0 0.0
      %3129 = vmatprep.subr.mxu0 0.0
      %3130 = vmatpush2.msra.mxu0 0.0
      %3131 = vmatprep.subr.mxu0 0.0
      %3132 = vmatpush2.msra.mxu0 0.0
      %3133 = vmatprep.subr.mxu0 0.0
      %3134 = vmatpush2.msra.mxu0 0.0
      %3135 = vmatprep.subr.mxu0 0.0
      %3136 = vmatpush2.msra.mxu0 0.0
      %3137 = vmatprep.subr.mxu0 0.0
      %3138 = vmatpush2.msra.mxu0 0.0
      %3139 = vmatprep.subr.mxu0 0.0
      %3140 = vmatpush2.msra.mxu0 0.0
      %3141 = vmatprep.subr.mxu0 0.0
      %3142 = vmatpush2.msra.mxu0 0.0
      %3143 = vmatprep.subr.mxu0 0.0
      %3144 = vmatpush2.msra.mxu0 0.0
      %3145 = vmatprep.subr.mxu0 0.0
      %3146 = vmatpush2.msra.mxu0 0.0
      %3147 = vmatprep.subr.mxu0 0.0
      %3148 = vmatpush2.msra.mxu0 0.0
      %3149 = vmatprep.subr.mxu0 0.0
      %3150 = vmatpush2.msra.mxu0 0.0
      %3151 = vmatprep.subr.mxu0 0.0
      %3152 = vmatpush2.msra.mxu0 0.0
      %3153 = vmatprep.subr.mxu0 0.0
      %3154 = vmatpush2.msra.mxu0 0.0
      %3155 = vmatprep.subr.mxu0 0.0
      %3156 = vmatpush2.msra.mxu0 0.0
      %3157 = vmatprep.subr.mxu0 0.0
      %3158 = vmatpush2.msra.mxu0 0.0
      %3159 = vmatprep.mubr.f32.mxu0 0.0
      %3160 = vmatmul.mubr.f32.gmra.mxu0 %v2997
      %v3161 = vpop.f32.mrf.mxu0
      %v3162 = vadd.f32 0.0, %v3161
      %v3163 = vpop.f32.mrf.mxu0
      %3164 = vmatprep.mubr.f32.mxu0 0.0
      %3165 = vmatmul.mubr.f32.gmra.mxu0 %v3000
      %v3166 = vpop.f32.mrf.mxu0
      %v3167 = vadd.f32 0.0, %v3166
      %v3168 = vpop.f32.mrf.mxu0
      %3169 = vmatprep.mubr.f32.mxu0 0.0
      %3170 = vmatmul.mubr.f32.gmra.mxu0 %v3003
      %v3171 = vpop.f32.mrf.mxu0
      %v3172 = vadd.f32 0.0, %v3171
      %v3173 = vpop.f32.mrf.mxu0
      %3174 = vmatprep.mubr.f32.mxu0 0.0
      %3175 = vmatmul.mubr.f32.gmra.mxu0 %v3006
      %v3176 = vpop.f32.mrf.mxu0
      %v3177 = vadd.f32 0.0, %v3176
      %v3178 = vpop.f32.mrf.mxu0
      %3179 = vmatprep.mubr.f32.mxu0 0.0
      %3180 = vmatmul.mubr.f32.gmra.mxu0 %v3009
      %v3181 = vpop.f32.mrf.mxu0
      %v3182 = vadd.f32 0.0, %v3181
      %v3183 = vpop.f32.mrf.mxu0
      %3184 = vmatprep.mubr.f32.mxu0 0.0
      %3185 = vmatmul.mubr.f32.gmra.mxu0 %v3012
      %v3186 = vpop.f32.mrf.mxu0
      %v3187 = vadd.f32 0.0, %v3186
      %v3188 = vpop.f32.mrf.mxu0
      %3189 = vmatprep.mubr.f32.mxu0 0.0
      %3190 = vmatmul.mubr.f32.gmra.mxu0 %v3015
      %v3191 = vpop.f32.mrf.mxu0
      %v3192 = vadd.f32 0.0, %v3191
      %v3193 = vpop.f32.mrf.mxu0
      %3194 = vmatprep.mubr.f32.mxu0 0.0
      %3195 = vmatmul.mubr.f32.gmra.mxu0 %v3018
      %v3196 = vpop.f32.mrf.mxu0
      %v3197 = vadd.f32 0.0, %v3196
      %v3198 = vpop.f32.mrf.mxu0
      %3199 = vmatprep.mubr.f32.mxu0 0.0
      %3200 = vmatmul.mubr.f32.gmra.mxu0 %v3021
      %v3201 = vpop.f32.mrf.mxu0
      %v3202 = vadd.f32 0.0, %v3201
      %v3203 = vpop.f32.mrf.mxu0
      %3204 = vmatprep.mubr.f32.mxu0 0.0
      %3205 = vmatmul.mubr.f32.gmra.mxu0 %v3024
      %v3206 = vpop.f32.mrf.mxu0
      %v3207 = vadd.f32 0.0, %v3206
      %v3208 = vpop.f32.mrf.mxu0
      %3209 = vmatprep.mubr.f32.mxu0 0.0
      %3210 = vmatmul.mubr.f32.gmra.mxu0 %v3027
      %v3211 = vpop.f32.mrf.mxu0
      %v3212 = vadd.f32 0.0, %v3211
      %v3213 = vpop.f32.mrf.mxu0
      %3214 = vmatprep.mubr.f32.mxu0 0.0
      %3215 = vmatmul.mubr.f32.gmra.mxu0 %v3030
      %v3216 = vpop.f32.mrf.mxu0
      %v3217 = vadd.f32 0.0, %v3216
      %v3218 = vpop.f32.mrf.mxu0
      %3219 = vmatprep.mubr.f32.mxu0 0.0
      %3220 = vmatmul.mubr.f32.gmra.mxu0 %v3033
      %v3221 = vpop.f32.mrf.mxu0
      %v3222 = vadd.f32 0.0, %v3221
      %v3223 = vpop.f32.mrf.mxu0
      %3224 = vmatprep.mubr.f32.mxu0 0.0
      %3225 = vmatmul.mubr.f32.gmra.mxu0 %v3036
      %v3226 = vpop.f32.mrf.mxu0
      %v3227 = vadd.f32 0.0, %v3226
      %v3228 = vpop.f32.mrf.mxu0
      %3229 = vmatprep.mubr.f32.mxu0 0.0
      %3230 = vmatmul.mubr.f32.gmra.mxu0 %v3039
      %v3231 = vpop.f32.mrf.mxu0
      %v3232 = vadd.f32 0.0, %v3231
      %v3233 = vpop.f32.mrf.mxu0
      %3234 = vmatprep.mubr.f32.mxu0 0.0
      %3235 = vmatmul.mubr.f32.gmra.mxu0 %v3042
      %v3236 = vpop.f32.mrf.mxu0
      %v3237 = vadd.f32 0.0, %v3236
      %v3238 = vpop.f32.mrf.mxu0
      %3239 = vmatprep.mubr.f32.mxu0 0.0
      %3240 = vmatmul.mubr.f32.gmra.mxu0 %v3045
      %v3241 = vpop.f32.mrf.mxu0
      %v3242 = vadd.f32 0.0, %v3241
      %v3243 = vpop.f32.mrf.mxu0
      %3244 = vmatprep.mubr.f32.mxu0 0.0
      %3245 = vmatmul.mubr.f32.gmra.mxu0 %v3048
      %v3246 = vpop.f32.mrf.mxu0
      %v3247 = vadd.f32 0.0, %v3246
      %v3248 = vpop.f32.mrf.mxu0
      %3249 = vmatprep.mubr.f32.mxu0 0.0
      %3250 = vmatmul.mubr.f32.gmra.mxu0 %v3051
      %v3251 = vpop.f32.mrf.mxu0
      %v3252 = vadd.f32 0.0, %v3251
      %v3253 = vpop.f32.mrf.mxu0
      %3254 = vmatprep.mubr.f32.mxu0 0.0
      %3255 = vmatmul.mubr.f32.gmra.mxu0 %v3054
      %v3256 = vpop.f32.mrf.mxu0
      %v3257 = vadd.f32 0.0, %v3256
      %v3258 = vpop.f32.mrf.mxu0
      %3259 = vmatprep.mubr.f32.mxu0 0.0
      %3260 = vmatmul.mubr.f32.gmra.mxu0 %v3057
      %v3261 = vpop.f32.mrf.mxu0
      %v3262 = vadd.f32 0.0, %v3261
      %v3263 = vpop.f32.mrf.mxu0
      %3264 = vmatprep.mubr.f32.mxu0 0.0
      %3265 = vmatmul.mubr.f32.gmra.mxu0 %v3060
      %v3266 = vpop.f32.mrf.mxu0
      %v3267 = vadd.f32 0.0, %v3266
      %v3268 = vpop.f32.mrf.mxu0
      %3269 = vmatprep.mubr.f32.mxu0 0.0
      %3270 = vmatmul.mubr.f32.gmra.mxu0 %v3063
      %v3271 = vpop.f32.mrf.mxu0
      %v3272 = vadd.f32 0.0, %v3271
      %v3273 = vpop.f32.mrf.mxu0
      %3274 = vmatprep.mubr.f32.mxu0 0.0
      %3275 = vmatmul.mubr.f32.gmra.mxu0 %v3066
      %v3276 = vpop.f32.mrf.mxu0
      %v3277 = vadd.f32 0.0, %v3276
      %v3278 = vpop.f32.mrf.mxu0
      %3279 = vmatprep.mubr.f32.mxu0 0.0
      %3280 = vmatmul.mubr.f32.gmra.mxu0 %v3069
      %v3281 = vpop.f32.mrf.mxu0
      %v3282 = vadd.f32 0.0, %v3281
      %v3283 = vpop.f32.mrf.mxu0
      %3284 = vmatprep.mubr.f32.mxu0 0.0
      %3285 = vmatmul.mubr.f32.gmra.mxu0 %v3072
      %v3286 = vpop.f32.mrf.mxu0
      %v3287 = vadd.f32 0.0, %v3286
      %v3288 = vpop.f32.mrf.mxu0
      %3289 = vmatprep.mubr.f32.mxu0 0.0
      %3290 = vmatmul.mubr.f32.gmra.mxu0 %v3075
      %v3291 = vpop.f32.mrf.mxu0
      %v3292 = vadd.f32 0.0, %v3291
      %v3293 = vpop.f32.mrf.mxu0
      %3294 = vmatprep.mubr.f32.mxu0 0.0
      %3295 = vmatmul.mubr.f32.gmra.mxu0 %v3078
      %v3296 = vpop.f32.mrf.mxu0
      %v3297 = vadd.f32 0.0, %v3296
      %v3298 = vpop.f32.mrf.mxu0
      %3299 = vmatprep.mubr.f32.mxu0 0.0
      %3300 = vmatmul.mubr.f32.gmra.mxu0 %v3081
      %v3301 = vpop.f32.mrf.mxu0
      %v3302 = vadd.f32 0.0, %v3301
      %v3303 = vpop.f32.mrf.mxu0
      %3304 = vmatprep.mubr.f32.mxu0 0.0
      %3305 = vmatmul.mubr.f32.gmra.mxu0 %v3084
      %v3306 = vpop.f32.mrf.mxu0
      %v3307 = vadd.f32 0.0, %v3306
      %v3308 = vpop.f32.mrf.mxu0
      %3309 = vmatprep.mubr.f32.mxu0 0.0
      %3310 = vmatmul.mubr.f32.gmra.mxu0 %v3087
      %v3311 = vpop.f32.mrf.mxu0
      %v3312 = vadd.f32 0.0, %v3311
      %v3313 = vpop.f32.mrf.mxu0
      %3314 = vmatprep.mubr.f32.mxu0 0.0
      %3315 = vmatmul.mubr.f32.gmra.mxu0 %v3090
      %v3316 = vpop.f32.mrf.mxu0
      %v3317 = vadd.f32 0.0, %v3316
      %v3318 = vpop.f32.mrf.mxu0
      %3319 = vdwg.mxu0
      %v3320 = vadd.f32 %v2930, %v3162
      %v3321 = vadd.f32 %v2931, %v3167
      %v3322 = vadd.f32 %v2932, %v3172
      %v3323 = vadd.f32 %v2933, %v3177
      %v3324 = vadd.f32 %v2934, %v3182
      %v3325 = vadd.f32 %v2935, %v3187
      %v3326 = vadd.f32 %v2936, %v3192
      %v3327 = vadd.f32 %v2937, %v3197
      %v3328 = vadd.f32 %v2938, %v3202
      %v3329 = vadd.f32 %v2939, %v3207
      %v3330 = vadd.f32 %v2940, %v3212
      %v3331 = vadd.f32 %v2941, %v3217
      %v3332 = vadd.f32 %v2942, %v3222
      %v3333 = vadd.f32 %v2943, %v3227
      %v3334 = vadd.f32 %v2944, %v3232
      %v3335 = vadd.f32 %v2945, %v3237
      %v3336 = vadd.f32 %v2946, %v3242
      %v3337 = vadd.f32 %v2947, %v3247
      %v3338 = vadd.f32 %v2948, %v3252
      %v3339 = vadd.f32 %v2949, %v3257
      %v3340 = vadd.f32 %v2950, %v3262
      %v3341 = vadd.f32 %v2951, %v3267
      %v3342 = vadd.f32 %v2952, %v3272
      %v3343 = vadd.f32 %v2953, %v3277
      %v3344 = vadd.f32 %v2954, %v3282
      %v3345 = vadd.f32 %v2955, %v3287
      %v3346 = vadd.f32 %v2956, %v3292
      %v3347 = vadd.f32 %v2957, %v3297
      %v3348 = vadd.f32 %v2958, %v3302
      %v3349 = vadd.f32 %v2959, %v3307
      %v3350 = vadd.f32 %v2960, %v3312
      %v3351 = vadd.f32 %v2961, %v3317
      %v3352 = vld [vmem:[%s2571 + $0x2] sm:$0xff]
      %v3353 = vld [vmem:[%s2571 + $0xa] sm:$0xff]
      %v3354 = vld [vmem:[%s2571 + $0x1a] sm:$0xff]
      %v3355 = vld [vmem:[%s2571 + $0x22] sm:$0xff]
      %v3356 = vld [vmem:[%s2571 + $0x32] sm:$0xff]
      %v3357 = vld [vmem:[%s2571 + $0x3a] sm:$0xff]
      %v3358 = vld [vmem:[%s2571 + $0x4a] sm:$0xff]
      %v3359 = vld [vmem:[%s2571 + $0x52] sm:$0xff]
      %v3360 = vld [vmem:[%s2571 + $0x62] sm:$0xff]
      %v3361 = vld [vmem:[%s2571 + $0x6a] sm:$0xff]
      %v3362 = vld [vmem:[%s2571 + $0x7a] sm:$0xff]
      %v3363 = vld [vmem:[%s2571 + $0x82] sm:$0xff]
      %v3364 = vld [vmem:[%s2571 + $0x92] sm:$0xff]
      %v3365 = vld [vmem:[%s2571 + $0x9a] sm:$0xff]
      %v3366 = vld [vmem:[%s2571 + $0xaa] sm:$0xff]
      %v3367 = vld [vmem:[%s2571 + $0xb2] sm:$0xff]
      %v3368 = vld [vmem:[%s2571 + $0xc2] sm:$0xff]
      %v3369 = vld [vmem:[%s2571 + $0xca] sm:$0xff]
      %v3370 = vld [vmem:[%s2571 + $0xda] sm:$0xff]
      %v3371 = vld [vmem:[%s2571 + $0xe2] sm:$0xff]
      %v3372 = vld [vmem:[%s2571 + $0xf2] sm:$0xff]
      %v3373 = vld [vmem:[%s2571 + $0xfa] sm:$0xff]
      %v3374 = vld [vmem:[%s2571 + $0x10a] sm:$0xff]
      %v3375 = vld [vmem:[%s2571 + $0x112] sm:$0xff]
      %v3376 = vld [vmem:[%s2571 + $0x122] sm:$0xff]
      %v3377 = vld [vmem:[%s2571 + $0x12a] sm:$0xff]
      %v3378 = vld [vmem:[%s2571 + $0x13a] sm:$0xff]
      %v3379 = vld [vmem:[%s2571 + $0x142] sm:$0xff]
      %v3380 = vld [vmem:[%s2571 + $0x152] sm:$0xff]
      %v3381 = vld [vmem:[%s2571 + $0x15a] sm:$0xff]
      %v3382 = vld [vmem:[%s2571 + $0x16a] sm:$0xff]
      %v3383 = vld [vmem:[%s2571 + $0x172] sm:$0xff]
      %s3384 = scalar_lea.vmem %s210, 32
      %v3385 = vld [vmem:[%s3384] sm:$0xf]
      %v3387 = vsel %vm262, %v3352, 0
      %v3390 = vsel %vm262, %v3353, 0
      %v3393 = vsel %vm262, %v3354, 0
      %v3396 = vsel %vm262, %v3355, 0
      %v3399 = vsel %vm262, %v3356, 0
      %v3402 = vsel %vm262, %v3357, 0
      %v3405 = vsel %vm262, %v3358, 0
      %v3408 = vsel %vm262, %v3359, 0
      %v3411 = vsel %vm262, %v3360, 0
      %v3414 = vsel %vm262, %v3361, 0
      %v3417 = vsel %vm262, %v3362, 0
      %v3420 = vsel %vm262, %v3363, 0
      %v3423 = vsel %vm262, %v3364, 0
      %v3426 = vsel %vm262, %v3365, 0
      %v3429 = vsel %vm262, %v3366, 0
      %v3432 = vsel %vm262, %v3367, 0
      %v3435 = vsel %vm262, %v3368, 0
      %v3438 = vsel %vm262, %v3369, 0
      %v3441 = vsel %vm262, %v3370, 0
      %v3444 = vsel %vm262, %v3371, 0
      %v3447 = vsel %vm262, %v3372, 0
      %v3450 = vsel %vm262, %v3373, 0
      %v3453 = vsel %vm262, %v3374, 0
      %v3456 = vsel %vm262, %v3375, 0
      %v3459 = vsel %vm262, %v3376, 0
      %v3462 = vsel %vm262, %v3377, 0
      %v3465 = vsel %vm262, %v3378, 0
      %v3468 = vsel %vm262, %v3379, 0
      %v3471 = vsel %vm262, %v3380, 0
      %v3474 = vsel %vm262, %v3381, 0
      %v3477 = vsel %vm262, %v3382, 0
      %v3480 = vsel %vm262, %v3383, 0
      %v3483 = vsel %vm359, %v3385, 0
      %3485 = vmatprep.subr.mxu0 0.0
      %3486 = vmatpush1.msra.mxu0 0.0
      %3487 = vmatprep.subr.mxu0 0.0
      %3488 = vmatpush1.msra.mxu0 0.0
      %3489 = vmatprep.subr.mxu0 0.0
      %3490 = vmatpush1.msra.mxu0 0.0
      %3491 = vmatprep.subr.mxu0 0.0
      %3492 = vmatpush1.msra.mxu0 0.0
      %3493 = vmatprep.subr.mxu0 0.0
      %3494 = vmatpush1.msra.mxu0 0.0
      %3495 = vmatprep.subr.mxu0 0.0
      %3496 = vmatpush1.msra.mxu0 0.0
      %3497 = vmatprep.subr.mxu0 0.0
      %3498 = vmatpush1.msra.mxu0 0.0
      %3499 = vmatprep.subr.mxu0 0.0
      %3500 = vmatpush1.msra.mxu0 0.0
      %3501 = vmatprep.subr.mxu0 0.0
      %3502 = vmatpush1.msra.mxu0 0.0
      %3503 = vmatprep.subr.mxu0 0.0
      %3504 = vmatpush1.msra.mxu0 0.0
      %3505 = vmatprep.subr.mxu0 0.0
      %3506 = vmatpush1.msra.mxu0 0.0
      %3507 = vmatprep.subr.mxu0 0.0
      %3508 = vmatpush1.msra.mxu0 0.0
      %3509 = vmatprep.subr.mxu0 0.0
      %3510 = vmatpush1.msra.mxu0 0.0
      %3511 = vmatprep.subr.mxu0 0.0
      %3512 = vmatpush1.msra.mxu0 0.0
      %3513 = vmatprep.subr.mxu0 0.0
      %3514 = vmatpush1.msra.mxu0 0.0
      %3515 = vmatprep.subr.mxu0 0.0
      %3516 = vmatpush1.msra.mxu0 %v3483
      %3517 = vmatprep.subr.mxu0 0.0
      %3518 = vmatpush2.msra.mxu0 0.0
      %3519 = vmatprep.subr.mxu0 0.0
      %3520 = vmatpush2.msra.mxu0 0.0
      %3521 = vmatprep.subr.mxu0 0.0
      %3522 = vmatpush2.msra.mxu0 0.0
      %3523 = vmatprep.subr.mxu0 0.0
      %3524 = vmatpush2.msra.mxu0 0.0
      %3525 = vmatprep.subr.mxu0 0.0
      %3526 = vmatpush2.msra.mxu0 0.0
      %3527 = vmatprep.subr.mxu0 0.0
      %3528 = vmatpush2.msra.mxu0 0.0
      %3529 = vmatprep.subr.mxu0 0.0
      %3530 = vmatpush2.msra.mxu0 0.0
      %3531 = vmatprep.subr.mxu0 0.0
      %3532 = vmatpush2.msra.mxu0 0.0
      %3533 = vmatprep.subr.mxu0 0.0
      %3534 = vmatpush2.msra.mxu0 0.0
      %3535 = vmatprep.subr.mxu0 0.0
      %3536 = vmatpush2.msra.mxu0 0.0
      %3537 = vmatprep.subr.mxu0 0.0
      %3538 = vmatpush2.msra.mxu0 0.0
      %3539 = vmatprep.subr.mxu0 0.0
      %3540 = vmatpush2.msra.mxu0 0.0
      %3541 = vmatprep.subr.mxu0 0.0
      %3542 = vmatpush2.msra.mxu0 0.0
      %3543 = vmatprep.subr.mxu0 0.0
      %3544 = vmatpush2.msra.mxu0 0.0
      %3545 = vmatprep.subr.mxu0 0.0
      %3546 = vmatpush2.msra.mxu0 0.0
      %3547 = vmatprep.subr.mxu0 0.0
      %3548 = vmatpush2.msra.mxu0 0.0
      %3549 = vmatprep.mubr.f32.mxu0 0.0
      %3550 = vmatmul.mubr.f32.gmra.mxu0 %v3387
      %v3551 = vpop.f32.mrf.mxu0
      %v3552 = vadd.f32 0.0, %v3551
      %v3553 = vpop.f32.mrf.mxu0
      %3554 = vmatprep.mubr.f32.mxu0 0.0
      %3555 = vmatmul.mubr.f32.gmra.mxu0 %v3390
      %v3556 = vpop.f32.mrf.mxu0
      %v3557 = vadd.f32 0.0, %v3556
      %v3558 = vpop.f32.mrf.mxu0
      %3559 = vmatprep.mubr.f32.mxu0 0.0
      %3560 = vmatmul.mubr.f32.gmra.mxu0 %v3393
      %v3561 = vpop.f32.mrf.mxu0
      %v3562 = vadd.f32 0.0, %v3561
      %v3563 = vpop.f32.mrf.mxu0
      %3564 = vmatprep.mubr.f32.mxu0 0.0
      %3565 = vmatmul.mubr.f32.gmra.mxu0 %v3396
      %v3566 = vpop.f32.mrf.mxu0
      %v3567 = vadd.f32 0.0, %v3566
      %v3568 = vpop.f32.mrf.mxu0
      %3569 = vmatprep.mubr.f32.mxu0 0.0
      %3570 = vmatmul.mubr.f32.gmra.mxu0 %v3399
      %v3571 = vpop.f32.mrf.mxu0
      %v3572 = vadd.f32 0.0, %v3571
      %v3573 = vpop.f32.mrf.mxu0
      %3574 = vmatprep.mubr.f32.mxu0 0.0
      %3575 = vmatmul.mubr.f32.gmra.mxu0 %v3402
      %v3576 = vpop.f32.mrf.mxu0
      %v3577 = vadd.f32 0.0, %v3576
      %v3578 = vpop.f32.mrf.mxu0
      %3579 = vmatprep.mubr.f32.mxu0 0.0
      %3580 = vmatmul.mubr.f32.gmra.mxu0 %v3405
      %v3581 = vpop.f32.mrf.mxu0
      %v3582 = vadd.f32 0.0, %v3581
      %v3583 = vpop.f32.mrf.mxu0
      %3584 = vmatprep.mubr.f32.mxu0 0.0
      %3585 = vmatmul.mubr.f32.gmra.mxu0 %v3408
      %v3586 = vpop.f32.mrf.mxu0
      %v3587 = vadd.f32 0.0, %v3586
      %v3588 = vpop.f32.mrf.mxu0
      %3589 = vmatprep.mubr.f32.mxu0 0.0
      %3590 = vmatmul.mubr.f32.gmra.mxu0 %v3411
      %v3591 = vpop.f32.mrf.mxu0
      %v3592 = vadd.f32 0.0, %v3591
      %v3593 = vpop.f32.mrf.mxu0
      %3594 = vmatprep.mubr.f32.mxu0 0.0
      %3595 = vmatmul.mubr.f32.gmra.mxu0 %v3414
      %v3596 = vpop.f32.mrf.mxu0
      %v3597 = vadd.f32 0.0, %v3596
      %v3598 = vpop.f32.mrf.mxu0
      %3599 = vmatprep.mubr.f32.mxu0 0.0
      %3600 = vmatmul.mubr.f32.gmra.mxu0 %v3417
      %v3601 = vpop.f32.mrf.mxu0
      %v3602 = vadd.f32 0.0, %v3601
      %v3603 = vpop.f32.mrf.mxu0
      %3604 = vmatprep.mubr.f32.mxu0 0.0
      %3605 = vmatmul.mubr.f32.gmra.mxu0 %v3420
      %v3606 = vpop.f32.mrf.mxu0
      %v3607 = vadd.f32 0.0, %v3606
      %v3608 = vpop.f32.mrf.mxu0
      %3609 = vmatprep.mubr.f32.mxu0 0.0
      %3610 = vmatmul.mubr.f32.gmra.mxu0 %v3423
      %v3611 = vpop.f32.mrf.mxu0
      %v3612 = vadd.f32 0.0, %v3611
      %v3613 = vpop.f32.mrf.mxu0
      %3614 = vmatprep.mubr.f32.mxu0 0.0
      %3615 = vmatmul.mubr.f32.gmra.mxu0 %v3426
      %v3616 = vpop.f32.mrf.mxu0
      %v3617 = vadd.f32 0.0, %v3616
      %v3618 = vpop.f32.mrf.mxu0
      %3619 = vmatprep.mubr.f32.mxu0 0.0
      %3620 = vmatmul.mubr.f32.gmra.mxu0 %v3429
      %v3621 = vpop.f32.mrf.mxu0
      %v3622 = vadd.f32 0.0, %v3621
      %v3623 = vpop.f32.mrf.mxu0
      %3624 = vmatprep.mubr.f32.mxu0 0.0
      %3625 = vmatmul.mubr.f32.gmra.mxu0 %v3432
      %v3626 = vpop.f32.mrf.mxu0
      %v3627 = vadd.f32 0.0, %v3626
      %v3628 = vpop.f32.mrf.mxu0
      %3629 = vmatprep.mubr.f32.mxu0 0.0
      %3630 = vmatmul.mubr.f32.gmra.mxu0 %v3435
      %v3631 = vpop.f32.mrf.mxu0
      %v3632 = vadd.f32 0.0, %v3631
      %v3633 = vpop.f32.mrf.mxu0
      %3634 = vmatprep.mubr.f32.mxu0 0.0
      %3635 = vmatmul.mubr.f32.gmra.mxu0 %v3438
      %v3636 = vpop.f32.mrf.mxu0
      %v3637 = vadd.f32 0.0, %v3636
      %v3638 = vpop.f32.mrf.mxu0
      %3639 = vmatprep.mubr.f32.mxu0 0.0
      %3640 = vmatmul.mubr.f32.gmra.mxu0 %v3441
      %v3641 = vpop.f32.mrf.mxu0
      %v3642 = vadd.f32 0.0, %v3641
      %v3643 = vpop.f32.mrf.mxu0
      %3644 = vmatprep.mubr.f32.mxu0 0.0
      %3645 = vmatmul.mubr.f32.gmra.mxu0 %v3444
      %v3646 = vpop.f32.mrf.mxu0
      %v3647 = vadd.f32 0.0, %v3646
      %v3648 = vpop.f32.mrf.mxu0
      %3649 = vmatprep.mubr.f32.mxu0 0.0
      %3650 = vmatmul.mubr.f32.gmra.mxu0 %v3447
      %v3651 = vpop.f32.mrf.mxu0
      %v3652 = vadd.f32 0.0, %v3651
      %v3653 = vpop.f32.mrf.mxu0
      %3654 = vmatprep.mubr.f32.mxu0 0.0
      %3655 = vmatmul.mubr.f32.gmra.mxu0 %v3450
      %v3656 = vpop.f32.mrf.mxu0
      %v3657 = vadd.f32 0.0, %v3656
      %v3658 = vpop.f32.mrf.mxu0
      %3659 = vmatprep.mubr.f32.mxu0 0.0
      %3660 = vmatmul.mubr.f32.gmra.mxu0 %v3453
      %v3661 = vpop.f32.mrf.mxu0
      %v3662 = vadd.f32 0.0, %v3661
      %v3663 = vpop.f32.mrf.mxu0
      %3664 = vmatprep.mubr.f32.mxu0 0.0
      %3665 = vmatmul.mubr.f32.gmra.mxu0 %v3456
      %v3666 = vpop.f32.mrf.mxu0
      %v3667 = vadd.f32 0.0, %v3666
      %v3668 = vpop.f32.mrf.mxu0
      %3669 = vmatprep.mubr.f32.mxu0 0.0
      %3670 = vmatmul.mubr.f32.gmra.mxu0 %v3459
      %v3671 = vpop.f32.mrf.mxu0
      %v3672 = vadd.f32 0.0, %v3671
      %v3673 = vpop.f32.mrf.mxu0
      %3674 = vmatprep.mubr.f32.mxu0 0.0
      %3675 = vmatmul.mubr.f32.gmra.mxu0 %v3462
      %v3676 = vpop.f32.mrf.mxu0
      %v3677 = vadd.f32 0.0, %v3676
      %v3678 = vpop.f32.mrf.mxu0
      %3679 = vmatprep.mubr.f32.mxu0 0.0
      %3680 = vmatmul.mubr.f32.gmra.mxu0 %v3465
      %v3681 = vpop.f32.mrf.mxu0
      %v3682 = vadd.f32 0.0, %v3681
      %v3683 = vpop.f32.mrf.mxu0
      %3684 = vmatprep.mubr.f32.mxu0 0.0
      %3685 = vmatmul.mubr.f32.gmra.mxu0 %v3468
      %v3686 = vpop.f32.mrf.mxu0
      %v3687 = vadd.f32 0.0, %v3686
      %v3688 = vpop.f32.mrf.mxu0
      %3689 = vmatprep.mubr.f32.mxu0 0.0
      %3690 = vmatmul.mubr.f32.gmra.mxu0 %v3471
      %v3691 = vpop.f32.mrf.mxu0
      %v3692 = vadd.f32 0.0, %v3691
      %v3693 = vpop.f32.mrf.mxu0
      %3694 = vmatprep.mubr.f32.mxu0 0.0
      %3695 = vmatmul.mubr.f32.gmra.mxu0 %v3474
      %v3696 = vpop.f32.mrf.mxu0
      %v3697 = vadd.f32 0.0, %v3696
      %v3698 = vpop.f32.mrf.mxu0
      %3699 = vmatprep.mubr.f32.mxu0 0.0
      %3700 = vmatmul.mubr.f32.gmra.mxu0 %v3477
      %v3701 = vpop.f32.mrf.mxu0
      %v3702 = vadd.f32 0.0, %v3701
      %v3703 = vpop.f32.mrf.mxu0
      %3704 = vmatprep.mubr.f32.mxu0 0.0
      %3705 = vmatmul.mubr.f32.gmra.mxu0 %v3480
      %v3706 = vpop.f32.mrf.mxu0
      %v3707 = vadd.f32 0.0, %v3706
      %v3708 = vpop.f32.mrf.mxu0
      %3709 = vdwg.mxu0
      %v3710 = vadd.f32 %v3320, %v3552
      %v3711 = vadd.f32 %v3321, %v3557
      %v3712 = vadd.f32 %v3322, %v3562
      %v3713 = vadd.f32 %v3323, %v3567
      %v3714 = vadd.f32 %v3324, %v3572
      %v3715 = vadd.f32 %v3325, %v3577
      %v3716 = vadd.f32 %v3326, %v3582
      %v3717 = vadd.f32 %v3327, %v3587
      %v3718 = vadd.f32 %v3328, %v3592
      %v3719 = vadd.f32 %v3329, %v3597
      %v3720 = vadd.f32 %v3330, %v3602
      %v3721 = vadd.f32 %v3331, %v3607
      %v3722 = vadd.f32 %v3332, %v3612
      %v3723 = vadd.f32 %v3333, %v3617
      %v3724 = vadd.f32 %v3334, %v3622
      %v3725 = vadd.f32 %v3335, %v3627
      %v3726 = vadd.f32 %v3336, %v3632
      %v3727 = vadd.f32 %v3337, %v3637
      %v3728 = vadd.f32 %v3338, %v3642
      %v3729 = vadd.f32 %v3339, %v3647
      %v3730 = vadd.f32 %v3340, %v3652
      %v3731 = vadd.f32 %v3341, %v3657
      %v3732 = vadd.f32 %v3342, %v3662
      %v3733 = vadd.f32 %v3343, %v3667
      %v3734 = vadd.f32 %v3344, %v3672
      %v3735 = vadd.f32 %v3345, %v3677
      %v3736 = vadd.f32 %v3346, %v3682
      %v3737 = vadd.f32 %v3347, %v3687
      %v3738 = vadd.f32 %v3348, %v3692
      %v3739 = vadd.f32 %v3349, %v3697
      %v3740 = vadd.f32 %v3350, %v3702
      %v3741 = vadd.f32 %v3351, %v3707
      %vm3742 = vcmask 64512
      %3743 = vst.msk [vmem:[%s221] sm:$0xff] %vm3742, %v3710
      %3744 = vst.msk [vmem:[%s221 + $0x8] sm:$0xff] %vm3742, %v3711
      %3745 = vst.msk [vmem:[%s221 + $0x10] sm:$0xff] %vm3742, %v3712
      %3746 = vst.msk [vmem:[%s221 + $0x18] sm:$0xff] %vm3742, %v3713
      %3747 = vst.msk [vmem:[%s221 + $0x20] sm:$0xff] %vm3742, %v3714
      %3748 = vst.msk [vmem:[%s221 + $0x28] sm:$0xff] %vm3742, %v3715
      %3749 = vst.msk [vmem:[%s221 + $0x30] sm:$0xff] %vm3742, %v3716
      %3750 = vst.msk [vmem:[%s221 + $0x38] sm:$0xff] %vm3742, %v3717
      %3751 = vst.msk [vmem:[%s221 + $0x40] sm:$0xff] %vm3742, %v3718
      %3752 = vst.msk [vmem:[%s221 + $0x48] sm:$0xff] %vm3742, %v3719
      %3753 = vst.msk [vmem:[%s221 + $0x50] sm:$0xff] %vm3742, %v3720
      %3754 = vst.msk [vmem:[%s221 + $0x58] sm:$0xff] %vm3742, %v3721
      %3755 = vst.msk [vmem:[%s221 + $0x60] sm:$0xff] %vm3742, %v3722
      %3756 = vst.msk [vmem:[%s221 + $0x68] sm:$0xff] %vm3742, %v3723
      %3757 = vst.msk [vmem:[%s221 + $0x70] sm:$0xff] %vm3742, %v3724
      %3758 = vst.msk [vmem:[%s221 + $0x78] sm:$0xff] %vm3742, %v3725
      %3759 = vst.msk [vmem:[%s221 + $0x80] sm:$0xff] %vm3742, %v3726
      %3760 = vst.msk [vmem:[%s221 + $0x88] sm:$0xff] %vm3742, %v3727
      %3761 = vst.msk [vmem:[%s221 + $0x90] sm:$0xff] %vm3742, %v3728
      %3762 = vst.msk [vmem:[%s221 + $0x98] sm:$0xff] %vm3742, %v3729
      %3763 = vst.msk [vmem:[%s221 + $0xa0] sm:$0xff] %vm3742, %v3730
      %3764 = vst.msk [vmem:[%s221 + $0xa8] sm:$0xff] %vm3742, %v3731
      %3765 = vst.msk [vmem:[%s221 + $0xb0] sm:$0xff] %vm3742, %v3732
      %3766 = vst.msk [vmem:[%s221 + $0xb8] sm:$0xff] %vm3742, %v3733
      %3767 = vst.msk [vmem:[%s221 + $0xc0] sm:$0xff] %vm3742, %v3734
      %3768 = vst.msk [vmem:[%s221 + $0xc8] sm:$0xff] %vm3742, %v3735
      %3769 = vst.msk [vmem:[%s221 + $0xd0] sm:$0xff] %vm3742, %v3736
      %3770 = vst.msk [vmem:[%s221 + $0xd8] sm:$0xff] %vm3742, %v3737
      %3771 = vst.msk [vmem:[%s221 + $0xe0] sm:$0xff] %vm3742, %v3738
      %3772 = vst.msk [vmem:[%s221 + $0xe8] sm:$0xff] %vm3742, %v3739
      %3773 = vst.msk [vmem:[%s221 + $0xf0] sm:$0xff] %vm3742, %v3740
      %3774 = vst.msk [vmem:[%s221 + $0xf8] sm:$0xff] %vm3742, %v3741
      %p3775 = scmp.lt.s32.totalorder %s18, 1
      %s3776 = scalar_select %p3775, %s18, 1
      %p3777 = scmp.lt.s32.totalorder %s19, 0
      %s3778 = scalar_select %p3777, %s19, 0
      %s3779 = smul.addr %s3776, 32
      %s3780 = sadd.s32 %s3778, %s3779
      %s3781 = smul.addr %s3780, 8
      %s3782 = scalar_lea.vmem %s3, %s3781
      // Predicated region
      $region33: #{tpu_custom_call.1} parent=31 // pred_check
        %p3783 = pneg %p124
      $region34: #{tpu_custom_call.1} parent=31 // pred_check_branch
        %3785 = sbr.rel (%p3783) target = $region36
      $region35: #{tpu_custom_call.1} parent=31 // pred_region
        _
      $region36: #{tpu_custom_call.1} parent=31 // pred_fallthru
        _
    $region32: #{tpu_custom_call.1} parent=5 // pred_fallthru
      _
    %p3786 = scmp.le.s32.totalorder 2, %s9
    // Predicated region
    $region37: #{tpu_custom_call.1} parent=5 // pred_check
      %p3787 = pneg %p3786
    $region38: #{tpu_custom_call.1} parent=5 // pred_check_branch
      %3789 = sbr.rel (%p3787) target = $region40
    $region39: #{tpu_custom_call.1} parent=5 // pred_region
      %s3790 = ssub.s32 %s9, 2
      // Predicated region
      $region41: #{tpu_custom_call.1} parent=39 // pred_check
        %p3791 = pneg %p130
      $region42: #{tpu_custom_call.1} parent=39 // pred_check_branch
        %3793 = sbr.rel (%p3791) target = $region44
      $region43: #{tpu_custom_call.1} parent=39 // pred_region
        %p3794 = scmp.lt.s32.totalorder %s20, 1
        %s3795 = scalar_select %p3794, %s20, 1
        %p3796 = scmp.lt.s32.totalorder %s21, 0
        %s3797 = scalar_select %p3796, %s21, 0
        %s3798 = smul.addr %s3795, 32
        %s3799 = sadd.s32 %s3797, %s3798
        %s3800 = smul.addr %s3799, 8
        %s3801 = scalar_lea.vmem %s3, %s3800
      $region44: #{tpu_custom_call.1} parent=39 // pred_fallthru
        _
    $region40: #{tpu_custom_call.1} parent=5 // pred_fallthru
      _
  $region6: #{tpu_custom_call.1} parent=0 // loop_footer
    %s13 = sadd.s32 1, %s9
  $region7: #{tpu_custom_call.1} parent=0 // loop_footer_branch
    %8 = sbr.rel target = $region3
  $region8: #{tpu_custom_call.1} parent=0 // loop_exit
    _

</llo_original>
